<compile_context>
chip_gen: v7x
topology: tpu7x:2x2x1
jax: 0.10.0
libtpu: 0.0.40
codegen_flags: <defaults>
</compile_context>

<pallas_src>
import jax
import jax.numpy as jnp
from jax.experimental import pallas as pl
from jax.experimental.pallas import tpu as pltpu

HIDDEN = 1024


def _instance_da_kernel(x_ref, w1_ref, b1_ref, w2_ref, b2_ref, w3t_ref, b3_ref,
                        out_ref):
    # grad_reverse is identity in the forward pass (only negates gradients).
    x = x_ref[...].astype(jnp.bfloat16)                       # in-kernel bf16 cast (VPU filler)

    # dc_ip1 + ReLU  (bf16 MXU inputs, f32 accumulation, f32 elementwise)
    h1 = jnp.dot(x, w1_ref[...], preferred_element_type=jnp.float32) + b1_ref[...]
    h1 = jnp.maximum(h1, 0.0)
    # dc_drop1: Dropout(p=0.5) is identity in eval mode.
    # TODO(synk): training-mode dropout would need pltpu.prng_seed/prng_random_bits.

    # dc_ip2 + ReLU
    h2 = jnp.dot(h1.astype(jnp.bfloat16), w2_ref[...],
                 preferred_element_type=jnp.float32) + b2_ref[...]
    h2 = jnp.maximum(h2, 0.0)
    # dc_drop2: identity in eval mode.

    # clssifer + sigmoid: (1024,1) matmul done as VPU multiply + XLU lane reduce.
    logits = jnp.sum(h2 * w3t_ref[...], axis=-1, keepdims=True) + b3_ref[0, 0]
    out_ref[...] = jax.nn.sigmoid(logits).astype(out_ref.dtype)


def prepare_instance_da_params(params):
    """One-time cast/reshape of f32 params to kernel-ready form (bf16 weights)."""
    w1, b1, w2, b2, w3, b3 = params
    return (w1.astype(jnp.bfloat16),
            b1.astype(jnp.float32).reshape(1, HIDDEN),
            w2.astype(jnp.bfloat16),
            b2.astype(jnp.float32).reshape(1, HIDDEN),
            w3.astype(jnp.float32).reshape(1, HIDDEN),          # (1024,1) -> (1,1024)
            b3.astype(jnp.float32).reshape(1, 1))


def instance_da_forward(x, prepared_params, *, tile_m=512):
    """Fused MLP head. x: (N, D) float32. Returns (N, 1) sigmoid probabilities."""
    w1_bf, b1_f, w2_bf, b2_f, w3t, b3_f = prepared_params
    n, d = x.shape

    # Tiling: single full-dim block for small N, tile_m-row tiles otherwise.
    # No host-side padding: the ragged edge block is masked by Pallas.
    block_m = n if n <= tile_m else tile_m
    num_tiles = pl.cdiv(n, block_m)

    # Megacore split whenever there is more than one tile (only matters on v7x).
    semantics = ("parallel",) if num_tiles >= 2 else ("arbitrary",)

    # VMEM budget: bf16 weights (worst-case double-buffered) + f32 x/out tiles
    # + h1/h2 intermediates, plus headroom. No artificial 32 MiB floor.
    weight_bytes = (d * HIDDEN + HIDDEN * HIDDEN) * 2              # bf16
    tile_bytes = 2 * block_m * d * 4 + 2 * block_m * 128 * 4       # f32 x + lane-padded out
    interm_bytes = 2 * block_m * HIDDEN * 4                        # h1 + h2 (f32)
    vmem_limit = int(min(2 * weight_bytes + tile_bytes + interm_bytes + (4 << 20),
                         48 << 20))

    flops = 2 * n * (d * HIDDEN + HIDDEN * HIDDEN + HIDDEN)
    bytes_accessed = (n * d * 4 + weight_bytes + 2 * HIDDEN * 4 + HIDDEN * 4 + 4
                      + n * 4)

    kernel = pl.pallas_call(
        _instance_da_kernel,
        out_shape=jax.ShapeDtypeStruct((n, 1), jnp.float32),
        grid_spec=pltpu.PrefetchScalarGridSpec(
            num_scalar_prefetch=0,
            grid=(num_tiles,),
            in_specs=[
                pl.BlockSpec((block_m, d), lambda i: (i, 0)),      # x tile (f32)
                pl.BlockSpec((d, HIDDEN), lambda i: (0, 0)),       # w1 (bf16, resident)
                pl.BlockSpec((1, HIDDEN), lambda i: (0, 0)),       # b1 (f32)
                pl.BlockSpec((HIDDEN, HIDDEN), lambda i: (0, 0)),  # w2 (bf16, resident)
                pl.BlockSpec((1, HIDDEN), lambda i: (0, 0)),       # b2 (f32)
                pl.BlockSpec((1, HIDDEN), lambda i: (0, 0)),       # w3^T (f32)
                pl.BlockSpec(memory_space=pltpu.MemorySpace.SMEM), # b3 scalar
            ],
            out_specs=pl.BlockSpec((block_m, 1), lambda i: (i, 0)),
        ),
        compiler_params=pltpu.CompilerParams(
            dimension_semantics=semantics,
            vmem_limit_bytes=vmem_limit),
        cost_estimate=pl.CostEstimate(
            flops=int(flops),
            transcendentals=int(n),
            bytes_accessed=int(bytes_accessed)),
    )
    return kernel(x, w1_bf, b1_f, w2_bf, b2_f, w3t, b3_f)


def instance_label_resize(x, need_backprop, minibatch=256):
    # Glue (not compute-heavy): each block of `minibatch` rois gets the per-image
    # domain label from need_backprop; uncovered rows default to 1.
    # TODO(synk): InstanceLabelResizeLayer source was not provided; follows the
    #             reference DA-Faster-RCNN repo implementation.
    n = x.shape[0]
    idx = jnp.arange(n) // minibatch
    valid = idx < need_backprop.shape[0]
    gathered = need_backprop[jnp.clip(idx, 0, need_backprop.shape[0] - 1)]
    labels = jnp.where(valid, gathered.astype(jnp.float32), 1.0)
    return labels.reshape(n, 1)


def init_instance_da_params(key, size):
    """Deterministic init matching nn.Linear default (uniform +-1/sqrt(fan_in))."""
    ks = jax.random.split(key, 6)

    def linear(kw, kb, fan_in, fan_out):
        bound = 1.0 / jnp.sqrt(jnp.float32(fan_in))
        w = jax.random.uniform(kw, (fan_in, fan_out), jnp.float32, -bound, bound)
        b = jax.random.uniform(kb, (1, fan_out), jnp.float32, -bound, bound)
        return w, b

    w1, b1 = linear(ks[0], ks[1], size, HIDDEN)
    w2, b2 = linear(ks[2], ks[3], HIDDEN, HIDDEN)
    w3, b3 = linear(ks[4], ks[5], HIDDEN, 1)
    return (w1, b1, w2, b2, w3, b3)


def _reference_forward_bf16(x, params):
    """Pure-JAX reference mirroring the kernel's bf16-input / f32-accum math."""
    w1, b1, w2, b2, w3, b3 = params
    xb = x.astype(jnp.bfloat16)
    h1 = jnp.dot(xb, w1.astype(jnp.bfloat16),
                 preferred_element_type=jnp.float32) + b1
    h1 = jnp.maximum(h1, 0.0)
    h2 = jnp.dot(h1.astype(jnp.bfloat16), w2.astype(jnp.bfloat16),
                 preferred_element_type=jnp.float32) + b2
    h2 = jnp.maximum(h2, 0.0)
    logits = jnp.sum(h2 * w3.reshape(1, HIDDEN), axis=-1, keepdims=True) + b3[0, 0]
    return jax.nn.sigmoid(logits)


if __name__ == "__main__":
    key = jax.random.PRNGKey(0)
    k_x1, k_x2, k_p = jax.random.split(key, 3)

    SIZE = 256                      # _InstanceDA(size=256)
    params = init_instance_da_params(k_p, SIZE)
    prepared = prepare_instance_da_params(params)   # bf16 weights cast ONCE
    need_backprop = jnp.array([0.0], dtype=jnp.float32)  # one source-domain image

    # Small roi count: single full-dim block path (no padding, no slicing).
    N1 = 16
    x1 = jax.random.normal(k_x1, (N1, SIZE), dtype=jnp.float32)
    probs1 = jax.block_until_ready(instance_da_forward(x1, prepared))
    label1 = jax.block_until_ready(instance_label_resize(probs1, need_backprop))

    # Larger, non-multiple-of-tile roi count: multi-tile path with a masked
    # ragged edge block (tile_m=512 -> 2 grid steps, last one partial).
    N2 = 700
    x2 = jax.random.normal(k_x2, (N2, SIZE), dtype=jnp.float32)
    probs2 = jax.block_until_ready(instance_da_forward(x2, prepared))

    # Correctness: exact-arithmetic mirror (bf16 inputs, f32 accumulation).
    ref1 = _reference_forward_bf16(x1, params)
    ref2 = _reference_forward_bf16(x2, params)
    assert jnp.allclose(probs1, ref1, atol=1e-3, rtol=1e-3)
    assert jnp.allclose(probs2, ref2, atol=1e-3, rtol=1e-3)

    # Semantic check against the full-f32 PyTorch-equivalent math (loose tol for bf16).
    w1, b1, w2, b2, w3, b3 = params
    h = jnp.maximum(x1 @ w1 + b1, 0.0)
    h = jnp.maximum(h @ w2 + b2, 0.0)
    ref_f32 = jax.nn.sigmoid(h @ w3 + b3)
    assert jnp.allclose(probs1, ref_f32, atol=3e-2)

    assert probs1.shape == (N1, 1) and label1.shape == (N1, 1)
    assert probs2.shape == (N2, 1)

    print("KERNEL_OK")
</pallas_src>

<mosaic_0001>
module attributes {stable_mosaic.version = 11 : i64} {
  func.func @_instance_da_kernel(%arg0: i32, %arg1: memref<16x256xf32, #tpu.memory_space<vmem>>, %arg2: memref<256x1024xbf16, #tpu.memory_space<vmem>>, %arg3: memref<1x1024xf32, #tpu.memory_space<vmem>>, %arg4: memref<1024x1024xbf16, #tpu.memory_space<vmem>>, %arg5: memref<1x1024xf32, #tpu.memory_space<vmem>>, %arg6: memref<1x1024xf32, #tpu.memory_space<vmem>>, %arg7: memref<1x1xf32, #tpu.memory_space<smem>>, %arg8: memref<16x1xf32, #tpu.memory_space<vmem>>) attributes {dimension_semantics = [#tpu.dimension_semantics<arbitrary>], iteration_bounds = array<i64: 1>, scalar_prefetch = 0 : i64, scratch_operands = 0 : i64, tpu.core_type = #tpu.core_type<tc>, window_params = [{transform_indices = @transform_0, window_bounds = array<i64: 16, 256>}, {pipeline_mode = #tpu.pipeline_mode<synchronous>, transform_indices = @transform_1, window_bounds = array<i64: 256, 1024>}, {pipeline_mode = #tpu.pipeline_mode<synchronous>, transform_indices = @transform_2, window_bounds = array<i64: 1, 1024>}, {pipeline_mode = #tpu.pipeline_mode<synchronous>, transform_indices = @transform_3, window_bounds = array<i64: 1024, 1024>}, {pipeline_mode = #tpu.pipeline_mode<synchronous>, transform_indices = @transform_4, window_bounds = array<i64: 1, 1024>}, {pipeline_mode = #tpu.pipeline_mode<synchronous>, transform_indices = @transform_5, window_bounds = array<i64: 1, 1024>}, {transform_indices = @transform_6, window_bounds = array<i64: 1, 1>}, {transform_indices = @transform_7, window_bounds = array<i64: 16, 1>}]} {
    %c0 = arith.constant 0 : index
    %c0_0 = arith.constant 0 : index
    %0 = vector.load %arg1[%c0, %c0_0] : memref<16x256xf32, #tpu.memory_space<vmem>>, vector<16x256xf32>
    %1 = arith.truncf %0 : vector<16x256xf32> to vector<16x256xbf16>
    %c0_1 = arith.constant 0 : index
    %c0_2 = arith.constant 0 : index
    %2 = vector.load %arg2[%c0_1, %c0_2] : memref<256x1024xbf16, #tpu.memory_space<vmem>>, vector<256x1024xbf16>
    %cst = arith.constant dense<0.000000e+00> : vector<16x1024xf32>
    %3 = tpu.matmul %1, %2, %cst {dimension_numbers = #tpu.dot_dimension_numbers<[1], [0], [0], [1], [0, 0, 1, 1], [], []>} : vector<16x256xbf16>, vector<256x1024xbf16>, vector<16x1024xf32> -> vector<16x1024xf32>
    %c0_3 = arith.constant 0 : index
    %c0_4 = arith.constant 0 : index
    %4 = vector.load %arg3[%c0_3, %c0_4] : memref<1x1024xf32, #tpu.memory_space<vmem>>, vector<1x1024xf32>
    %5 = vector.broadcast %4 : vector<1x1024xf32> to vector<16x1024xf32>
    %6 = arith.addf %3, %5 : vector<16x1024xf32>
    %cst_5 = arith.constant 0.000000e+00 : f32
    %7 = vector.broadcast %cst_5 : f32 to vector<16x1024xf32>
    %8 = arith.maximumf %6, %7 : vector<16x1024xf32>
    %9 = arith.truncf %8 : vector<16x1024xf32> to vector<16x1024xbf16>
    %c0_6 = arith.constant 0 : index
    %c0_7 = arith.constant 0 : index
    %10 = vector.load %arg4[%c0_6, %c0_7] : memref<1024x1024xbf16, #tpu.memory_space<vmem>>, vector<1024x1024xbf16>
    %cst_8 = arith.constant dense<0.000000e+00> : vector<16x1024xf32>
    %11 = tpu.matmul %9, %10, %cst_8 {dimension_numbers = #tpu.dot_dimension_numbers<[1], [0], [0], [1], [0, 0, 1, 1], [], []>} : vector<16x1024xbf16>, vector<1024x1024xbf16>, vector<16x1024xf32> -> vector<16x1024xf32>
    %c0_9 = arith.constant 0 : index
    %c0_10 = arith.constant 0 : index
    %12 = vector.load %arg5[%c0_9, %c0_10] : memref<1x1024xf32, #tpu.memory_space<vmem>>, vector<1x1024xf32>
    %13 = vector.broadcast %12 : vector<1x1024xf32> to vector<16x1024xf32>
    %14 = arith.addf %11, %13 : vector<16x1024xf32>
    %cst_11 = arith.constant 0.000000e+00 : f32
    %15 = vector.broadcast %cst_11 : f32 to vector<16x1024xf32>
    %16 = arith.maximumf %14, %15 : vector<16x1024xf32>
    %c0_12 = arith.constant 0 : index
    %c0_13 = arith.constant 0 : index
    %17 = vector.load %arg6[%c0_12, %c0_13] : memref<1x1024xf32, #tpu.memory_space<vmem>>, vector<1x1024xf32>
    %18 = vector.broadcast %17 : vector<1x1024xf32> to vector<16x1024xf32>
    %19 = arith.mulf %16, %18 : vector<16x1024xf32>
    %cst_14 = arith.constant dense<0.000000e+00> : vector<16xf32>
    %20 = vector.multi_reduction <add>, %19, %cst_14 [1] : vector<16x1024xf32> to vector<16xf32>
    %21 = vector.shape_cast %20 : vector<16xf32> to vector<16x1xf32>
    %c0_15 = arith.constant 0 : index
    %c0_16 = arith.constant 0 : index
    %22 = memref.load %arg7[%c0_15, %c0_16] : memref<1x1xf32, #tpu.memory_space<smem>>
    %23 = vector.broadcast %22 : f32 to vector<16x1xf32>
    %24 = arith.addf %21, %23 : vector<16x1xf32>
    %25 = arith.negf %24 : vector<16x1xf32>
    %26 = math.exp %25 : vector<16x1xf32>
    %cst_17 = arith.constant 1.000000e+00 : f32
    %27 = vector.broadcast %cst_17 : f32 to vector<16x1xf32>
    %28 = arith.addf %27, %26 : vector<16x1xf32>
    %29 = arith.divf %27, %28 : vector<16x1xf32>
    %c0_18 = arith.constant 0 : index
    %c0_19 = arith.constant 0 : index
    %30 = vector.load %arg8[%c0_18, %c0_19] : memref<16x1xf32, #tpu.memory_space<vmem>>, vector<16x1xf32>
    tpu.vector_store %arg8[%c0_18, %c0_19], %29 {strides = array<i32>} : memref<16x1xf32, #tpu.memory_space<vmem>>, vector<16x1xf32>,
    return
  }
  func.func @transform_0(%arg0: i32) -> (i32, i32) {
    %c0_i32 = arith.constant 0 : i32
    %c0_i32_0 = arith.constant 0 : i32
    return %arg0, %c0_i32 : i32, i32
  }
  func.func @transform_1(%arg0: i32) -> (i32, i32) {
    %c0_i32 = arith.constant 0 : i32
    %c0_i32_0 = arith.constant 0 : i32
    %c0_i32_1 = arith.constant 0 : i32
    return %c0_i32, %c0_i32_0 : i32, i32
  }
  func.func @transform_2(%arg0: i32) -> (i32, i32) {
    %c0_i32 = arith.constant 0 : i32
    %c0_i32_0 = arith.constant 0 : i32
    %c0_i32_1 = arith.constant 0 : i32
    return %c0_i32, %c0_i32_0 : i32, i32
  }
  func.func @transform_3(%arg0: i32) -> (i32, i32) {
    %c0_i32 = arith.constant 0 : i32
    %c0_i32_0 = arith.constant 0 : i32
    %c0_i32_1 = arith.constant 0 : i32
    return %c0_i32, %c0_i32_0 : i32, i32
  }
  func.func @transform_4(%arg0: i32) -> (i32, i32) {
    %c0_i32 = arith.constant 0 : i32
    %c0_i32_0 = arith.constant 0 : i32
    %c0_i32_1 = arith.constant 0 : i32
    return %c0_i32, %c0_i32_0 : i32, i32
  }
  func.func @transform_5(%arg0: i32) -> (i32, i32) {
    %c0_i32 = arith.constant 0 : i32
    %c0_i32_0 = arith.constant 0 : i32
    %c0_i32_1 = arith.constant 0 : i32
    return %c0_i32, %c0_i32_0 : i32, i32
  }
  func.func @transform_6(%arg0: i32) -> (i32, i32) {
    %c0_i32 = arith.constant 0 : i32
    %c0_i32_0 = arith.constant 0 : i32
    %c0_i32_1 = arith.constant 0 : i32
    return %c0_i32, %c0_i32_0 : i32, i32
  }
  func.func @transform_7(%arg0: i32) -> (i32, i32) {
    %c0_i32 = arith.constant 0 : i32
    %c0_i32_0 = arith.constant 0 : i32
    return %arg0, %c0_i32 : i32, i32
  }
}

</mosaic_0001>

<llo_original>
// kernel: tpu_custom_call.1
$region0: #{tpu_custom_call.1}
  #allocation0 [shape = 'u32[]', space=smem, size = 0x4, offset = 0x4, fixed_abs, tag = 'smem constant byte address 0x4 - core index']
  #allocation1 [shape = 'u32[144,128]{1,0:T(1,128)}', space=vmem, size = 0x12000, scoped, tag = 'internal scratch']
  #allocation2 [shape = 'f32[1,1]{1,0:T(1,128)S(6)}', space=smem, size = 0x200, scoped, tag = 'scoped memory for tpu_custom_call.1']
  %s0 = inlined_call_operand.hbm [shape: f32[16,256], index: 0, kind: input, shape index: {}]
  %s1 = inlined_call_operand.hbm [shape: bf16[256,1024], index: 1, kind: input, shape index: {}]
  %s2 = inlined_call_operand.hbm [shape: f32[1,1024], index: 2, kind: input, shape index: {}]
  %s3 = inlined_call_operand.hbm [shape: bf16[1024,1024], index: 3, kind: input, shape index: {}]
  %s4 = inlined_call_operand.hbm [shape: f32[1,1024], index: 4, kind: input, shape index: {}]
  %s5 = inlined_call_operand.hbm [shape: f32[1,1024], index: 5, kind: input, shape index: {}]
  %s6 = inlined_call_operand.<no memory space> [shape: f32[1,1], index: 6, kind: input, shape index: {}]
  %s7 = inlined_call_operand.vmem [shape: f32[16,1], index: 7, kind: output, shape index: {}]
  %s8 = sld [smem:[#allocation0]]
  $region62: #{tpu_custom_call.1} parent=0
    _
  %s10 = ssub.s32 1, %s8
  %s11 = scalar_select 0, %s10, %s8
  %12 = sst [smem:[#allocation2]] %s6
  $region1: #{tpu_custom_call.1} parent=0
    #allocation3 [shape = 'u8[16384]{0}', space=vmem, size = 0x4000, scoped, tag = 'input window, operand 0, single buffered']
    #allocation4 [shape = 's32[1]{0}', space=sflag, size = 0x4, scoped, tag = 'scoped memory for tpu_custom_call.1']
    #allocation5 [shape = 'u8[524288]{0}', space=vmem, size = 0x80000, scoped, tag = 'input window, operand 1, single buffered']
    #allocation6 [shape = 's32[1]{0}', space=sflag, size = 0x4, scoped, tag = 'scoped memory for tpu_custom_call.1']
    #allocation7 [shape = 'u8[4096]{0}', space=vmem, size = 0x1000, scoped, tag = 'input window, operand 2, single buffered']
    #allocation8 [shape = 'u8[2097152]{0}', space=vmem, size = 0x200000, scoped, tag = 'input window, operand 3, single buffered']
    #allocation9 [shape = 's32[1]{0}', space=sflag, size = 0x4, scoped, tag = 'scoped memory for tpu_custom_call.1']
    #allocation10 [shape = 'u8[4096]{0}', space=vmem, size = 0x1000, scoped, tag = 'input window, operand 4, single buffered']
    #allocation11 [shape = 'u8[4096]{0}', space=vmem, size = 0x1000, scoped, tag = 'input window, operand 5, single buffered']
    #allocation12 [shape = 's32[1]{0}', space=sflag, size = 0x4, scoped, tag = 'scoped memory for tpu_custom_call.1']
    %13 = vsyncpa [#allocation4], 0
    %14 = vsyncpa [#allocation6], 0
    %15 = vsyncpa [#allocation9], 0
    %16 = vsyncpa [#allocation12], 0
    // Predicated region
    $region2: #{tpu_custom_call.1} parent=1 // pred_check
      _
    $region3: #{tpu_custom_call.1} parent=1 // pred_check_branch
      %18 = sbr.rel (0) target = $region5
    $region4: #{tpu_custom_call.1} parent=1 // pred_region
      %s20 = ssub.s32 512, 512
      %21 = vsyncadd [#allocation4], %s20
      %s22 = sshll.u32 [#allocation3], 4
      %s23 = int_to_ptr.vmem [resolvable:$true] %s22
      %28 = dma.hbm_to_vmem [thread:$0]  %s0, 512, %s23, [#allocation4], 256, 256, 16
    $region5: #{tpu_custom_call.1} parent=1 // pred_fallthru
      _
    // Predicated region
    $region6: #{tpu_custom_call.1} parent=1 // pred_check
      _
    $region7: #{tpu_custom_call.1} parent=1 // pred_check_branch
      %30 = sbr.rel (0) target = $region9
    $region8: #{tpu_custom_call.1} parent=1 // pred_region
      %s32 = ssub.s32 16384, 16384
      %33 = vsyncadd [#allocation6], %s32
      %s34 = sshll.u32 [#allocation5], 4
      %s35 = int_to_ptr.vmem [resolvable:$true] %s34
      %40 = dma.hbm_to_vmem [thread:$0]  %s1, 16384, %s35, [#allocation6], 512, 512, 32
    $region9: #{tpu_custom_call.1} parent=1 // pred_fallthru
      _
    // Predicated region
    $region10: #{tpu_custom_call.1} parent=1 // pred_check
      _
    $region11: #{tpu_custom_call.1} parent=1 // pred_check_branch
      %42 = sbr.rel (0) target = $region13
    $region12: #{tpu_custom_call.1} parent=1 // pred_region
      %s44 = ssub.s32 128, 128
      %45 = vsyncadd [#allocation6], %s44
      %s47 = sshll.u32 [#allocation7], 4
      %s48 = int_to_ptr.vmem [resolvable:$true] %s47
      %50 = dma.hbm_to_vmem [thread:$0]  %s2, 128, %s48, [#allocation6]
    $region13: #{tpu_custom_call.1} parent=1 // pred_fallthru
      _
    // Predicated region
    $region14: #{tpu_custom_call.1} parent=1 // pred_check
      _
    $region15: #{tpu_custom_call.1} parent=1 // pred_check_branch
      %52 = sbr.rel (0) target = $region17
    $region16: #{tpu_custom_call.1} parent=1 // pred_region
      %s54 = ssub.s32 65536, 65536
      %55 = vsyncadd [#allocation9], %s54
      %s56 = sshll.u32 [#allocation8], 4
      %s57 = int_to_ptr.vmem [resolvable:$true] %s56
      %62 = dma.hbm_to_vmem [thread:$0]  %s3, 65536, %s57, [#allocation9], 512, 512, 32
    $region17: #{tpu_custom_call.1} parent=1 // pred_fallthru
      _
    // Predicated region
    $region18: #{tpu_custom_call.1} parent=1 // pred_check
      _
    $region19: #{tpu_custom_call.1} parent=1 // pred_check_branch
      %64 = sbr.rel (0) target = $region21
    $region20: #{tpu_custom_call.1} parent=1 // pred_region
      %s66 = ssub.s32 128, 128
      %67 = vsyncadd [#allocation9], %s66
      %s69 = sshll.u32 [#allocation10], 4
      %s70 = int_to_ptr.vmem [resolvable:$true] %s69
      %72 = dma.hbm_to_vmem [thread:$0]  %s4, 128, %s70, [#allocation9]
    $region21: #{tpu_custom_call.1} parent=1 // pred_fallthru
      _
    // Predicated region
    $region22: #{tpu_custom_call.1} parent=1 // pred_check
      _
    $region23: #{tpu_custom_call.1} parent=1 // pred_check_branch
      %74 = sbr.rel (0) target = $region25
    $region24: #{tpu_custom_call.1} parent=1 // pred_region
      %s76 = ssub.s32 128, 128
      %77 = vsyncadd [#allocation12], %s76
      %s79 = sshll.u32 [#allocation11], 4
      %s80 = int_to_ptr.vmem [resolvable:$true] %s79
      %82 = dma.hbm_to_vmem [thread:$0]  %s5, 128, %s80, [#allocation12]
    $region25: #{tpu_custom_call.1} parent=1 // pred_fallthru
      _
    // Predicated region
    $region26: #{tpu_custom_call.1} parent=1 // pred_check
      _
    $region27: #{tpu_custom_call.1} parent=1 // pred_check_branch
      %84 = sbr.rel (0) target = $region29
    $region28: #{tpu_custom_call.1} parent=1 // pred_region
      _
    $region29: #{tpu_custom_call.1} parent=1 // pred_fallthru
      _
    // Predicated region
    $region30: #{tpu_custom_call.1} parent=1 // pred_check
      _
    $region31: #{tpu_custom_call.1} parent=1 // pred_check_branch
      %86 = sbr.rel (0) target = $region33
    $region32: #{tpu_custom_call.1} parent=1 // pred_region
      %87 = dma.done [#allocation4], 512
    $region33: #{tpu_custom_call.1} parent=1 // pred_fallthru
      _
    // Predicated region
    $region34: #{tpu_custom_call.1} parent=1 // pred_check
      _
    $region35: #{tpu_custom_call.1} parent=1 // pred_check_branch
      %89 = sbr.rel (0) target = $region37
    $region36: #{tpu_custom_call.1} parent=1 // pred_region
      %90 = dma.done [#allocation6], 16384
    $region37: #{tpu_custom_call.1} parent=1 // pred_fallthru
      _
    // Predicated region
    $region38: #{tpu_custom_call.1} parent=1 // pred_check
      _
    $region39: #{tpu_custom_call.1} parent=1 // pred_check_branch
      %92 = sbr.rel (0) target = $region41
    $region40: #{tpu_custom_call.1} parent=1 // pred_region
      %93 = dma.done [#allocation6], 128
    $region41: #{tpu_custom_call.1} parent=1 // pred_fallthru
      _
    // Predicated region
    $region42: #{tpu_custom_call.1} parent=1 // pred_check
      _
    $region43: #{tpu_custom_call.1} parent=1 // pred_check_branch
      %95 = sbr.rel (0) target = $region45
    $region44: #{tpu_custom_call.1} parent=1 // pred_region
      %96 = dma.done [#allocation9], 65536
    $region45: #{tpu_custom_call.1} parent=1 // pred_fallthru
      _
    // Predicated region
    $region46: #{tpu_custom_call.1} parent=1 // pred_check
      _
    $region47: #{tpu_custom_call.1} parent=1 // pred_check_branch
      %98 = sbr.rel (0) target = $region49
    $region48: #{tpu_custom_call.1} parent=1 // pred_region
      %99 = dma.done [#allocation9], 128
    $region49: #{tpu_custom_call.1} parent=1 // pred_fallthru
      _
    // Predicated region
    $region50: #{tpu_custom_call.1} parent=1 // pred_check
      _
    $region51: #{tpu_custom_call.1} parent=1 // pred_check_branch
      %101 = sbr.rel (0) target = $region53
    $region52: #{tpu_custom_call.1} parent=1 // pred_region
      %102 = dma.done [#allocation12], 128
    $region53: #{tpu_custom_call.1} parent=1 // pred_fallthru
      _
    %v103 = vld [vmem:[#allocation3] sm:$0xff]
    %v104 = vld [vmem:[#allocation3 + $0x8] sm:$0xff]
    %v105 = vld [vmem:[#allocation3 + $0x10] sm:$0xff]
    %v106 = vld [vmem:[#allocation3 + $0x18] sm:$0xff]
    %v107 = vpack.c.bf16 %v105, %v103
    %v108 = vpack.c.bf16 %v106, %v104
    %v109 = vld [vmem:[#allocation5] sm:$0xff]
    %v110 = vld [vmem:[#allocation5 + $0x8] sm:$0xff]
    %v111 = vld [vmem:[#allocation5 + $0x10] sm:$0xff]
    %v112 = vld [vmem:[#allocation5 + $0x18] sm:$0xff]
    %v113 = vld [vmem:[#allocation5 + $0x20] sm:$0xff]
    %v114 = vld [vmem:[#allocation5 + $0x28] sm:$0xff]
    %v115 = vld [vmem:[#allocation5 + $0x30] sm:$0xff]
    %v116 = vld [vmem:[#allocation5 + $0x38] sm:$0xff]
    %v117 = vld [vmem:[#allocation5 + $0x40] sm:$0xff]
    %v118 = vld [vmem:[#allocation5 + $0x48] sm:$0xff]
    %v119 = vld [vmem:[#allocation5 + $0x50] sm:$0xff]
    %v120 = vld [vmem:[#allocation5 + $0x58] sm:$0xff]
    %v121 = vld [vmem:[#allocation5 + $0x60] sm:$0xff]
    %v122 = vld [vmem:[#allocation5 + $0x68] sm:$0xff]
    %v123 = vld [vmem:[#allocation5 + $0x70] sm:$0xff]
    %v124 = vld [vmem:[#allocation5 + $0x78] sm:$0xff]
    %v125 = vld [vmem:[#allocation5 + $0x80] sm:$0xff]
    %v126 = vld [vmem:[#allocation5 + $0x88] sm:$0xff]
    %v127 = vld [vmem:[#allocation5 + $0x90] sm:$0xff]
    %v128 = vld [vmem:[#allocation5 + $0x98] sm:$0xff]
    %v129 = vld [vmem:[#allocation5 + $0xa0] sm:$0xff]
    %v130 = vld [vmem:[#allocation5 + $0xa8] sm:$0xff]
    %v131 = vld [vmem:[#allocation5 + $0xb0] sm:$0xff]
    %v132 = vld [vmem:[#allocation5 + $0xb8] sm:$0xff]
    %v133 = vld [vmem:[#allocation5 + $0xc0] sm:$0xff]
    %v134 = vld [vmem:[#allocation5 + $0xc8] sm:$0xff]
    %v135 = vld [vmem:[#allocation5 + $0xd0] sm:$0xff]
    %v136 = vld [vmem:[#allocation5 + $0xd8] sm:$0xff]
    %v137 = vld [vmem:[#allocation5 + $0xe0] sm:$0xff]
    %v138 = vld [vmem:[#allocation5 + $0xe8] sm:$0xff]
    %v139 = vld [vmem:[#allocation5 + $0xf0] sm:$0xff]
    %v140 = vld [vmem:[#allocation5 + $0xf8] sm:$0xff]
    %v141 = vld [vmem:[#allocation5 + $0x100] sm:$0xff]
    %v142 = vld [vmem:[#allocation5 + $0x108] sm:$0xff]
    %v143 = vld [vmem:[#allocation5 + $0x110] sm:$0xff]
    %v144 = vld [vmem:[#allocation5 + $0x118] sm:$0xff]
    %v145 = vld [vmem:[#allocation5 + $0x120] sm:$0xff]
    %v146 = vld [vmem:[#allocation5 + $0x128] sm:$0xff]
    %v147 = vld [vmem:[#allocation5 + $0x130] sm:$0xff]
    %v148 = vld [vmem:[#allocation5 + $0x138] sm:$0xff]
    %v149 = vld [vmem:[#allocation5 + $0x140] sm:$0xff]
    %v150 = vld [vmem:[#allocation5 + $0x148] sm:$0xff]
    %v151 = vld [vmem:[#allocation5 + $0x150] sm:$0xff]
    %v152 = vld [vmem:[#allocation5 + $0x158] sm:$0xff]
    %v153 = vld [vmem:[#allocation5 + $0x160] sm:$0xff]
    %v154 = vld [vmem:[#allocation5 + $0x168] sm:$0xff]
    %v155 = vld [vmem:[#allocation5 + $0x170] sm:$0xff]
    %v156 = vld [vmem:[#allocation5 + $0x178] sm:$0xff]
    %v157 = vld [vmem:[#allocation5 + $0x180] sm:$0xff]
    %v158 = vld [vmem:[#allocation5 + $0x188] sm:$0xff]
    %v159 = vld [vmem:[#allocation5 + $0x190] sm:$0xff]
    %v160 = vld [vmem:[#allocation5 + $0x198] sm:$0xff]
    %v161 = vld [vmem:[#allocation5 + $0x1a0] sm:$0xff]
    %v162 = vld [vmem:[#allocation5 + $0x1a8] sm:$0xff]
    %v163 = vld [vmem:[#allocation5 + $0x1b0] sm:$0xff]
    %v164 = vld [vmem:[#allocation5 + $0x1b8] sm:$0xff]
    %v165 = vld [vmem:[#allocation5 + $0x1c0] sm:$0xff]
    %v166 = vld [vmem:[#allocation5 + $0x1c8] sm:$0xff]
    %v167 = vld [vmem:[#allocation5 + $0x1d0] sm:$0xff]
    %v168 = vld [vmem:[#allocation5 + $0x1d8] sm:$0xff]
    %v169 = vld [vmem:[#allocation5 + $0x1e0] sm:$0xff]
    %v170 = vld [vmem:[#allocation5 + $0x1e8] sm:$0xff]
    %v171 = vld [vmem:[#allocation5 + $0x1f0] sm:$0xff]
    %v172 = vld [vmem:[#allocation5 + $0x1f8] sm:$0xff]
    %v173 = vld [vmem:[#allocation5 + $0x200] sm:$0xff]
    %v174 = vld [vmem:[#allocation5 + $0x208] sm:$0xff]
    %v175 = vld [vmem:[#allocation5 + $0x210] sm:$0xff]
    %v176 = vld [vmem:[#allocation5 + $0x218] sm:$0xff]
    %v177 = vld [vmem:[#allocation5 + $0x220] sm:$0xff]
    %v178 = vld [vmem:[#allocation5 + $0x228] sm:$0xff]
    %v179 = vld [vmem:[#allocation5 + $0x230] sm:$0xff]
    %v180 = vld [vmem:[#allocation5 + $0x238] sm:$0xff]
    %v181 = vld [vmem:[#allocation5 + $0x240] sm:$0xff]
    %v182 = vld [vmem:[#allocation5 + $0x248] sm:$0xff]
    %v183 = vld [vmem:[#allocation5 + $0x250] sm:$0xff]
    %v184 = vld [vmem:[#allocation5 + $0x258] sm:$0xff]
    %v185 = vld [vmem:[#allocation5 + $0x260] sm:$0xff]
    %v186 = vld [vmem:[#allocation5 + $0x268] sm:$0xff]
    %v187 = vld [vmem:[#allocation5 + $0x270] sm:$0xff]
    %v188 = vld [vmem:[#allocation5 + $0x278] sm:$0xff]
    %v189 = vld [vmem:[#allocation5 + $0x280] sm:$0xff]
    %v190 = vld [vmem:[#allocation5 + $0x288] sm:$0xff]
    %v191 = vld [vmem:[#allocation5 + $0x290] sm:$0xff]
    %v192 = vld [vmem:[#allocation5 + $0x298] sm:$0xff]
    %v193 = vld [vmem:[#allocation5 + $0x2a0] sm:$0xff]
    %v194 = vld [vmem:[#allocation5 + $0x2a8] sm:$0xff]
    %v195 = vld [vmem:[#allocation5 + $0x2b0] sm:$0xff]
    %v196 = vld [vmem:[#allocation5 + $0x2b8] sm:$0xff]
    %v197 = vld [vmem:[#allocation5 + $0x2c0] sm:$0xff]
    %v198 = vld [vmem:[#allocation5 + $0x2c8] sm:$0xff]
    %v199 = vld [vmem:[#allocation5 + $0x2d0] sm:$0xff]
    %v200 = vld [vmem:[#allocation5 + $0x2d8] sm:$0xff]
    %v201 = vld [vmem:[#allocation5 + $0x2e0] sm:$0xff]
    %v202 = vld [vmem:[#allocation5 + $0x2e8] sm:$0xff]
    %v203 = vld [vmem:[#allocation5 + $0x2f0] sm:$0xff]
    %v204 = vld [vmem:[#allocation5 + $0x2f8] sm:$0xff]
    %v205 = vld [vmem:[#allocation5 + $0x300] sm:$0xff]
    %v206 = vld [vmem:[#allocation5 + $0x308] sm:$0xff]
    %v207 = vld [vmem:[#allocation5 + $0x310] sm:$0xff]
    %v208 = vld [vmem:[#allocation5 + $0x318] sm:$0xff]
    %v209 = vld [vmem:[#allocation5 + $0x320] sm:$0xff]
    %v210 = vld [vmem:[#allocation5 + $0x328] sm:$0xff]
    %v211 = vld [vmem:[#allocation5 + $0x330] sm:$0xff]
    %v212 = vld [vmem:[#allocation5 + $0x338] sm:$0xff]
    %v213 = vld [vmem:[#allocation5 + $0x340] sm:$0xff]
    %v214 = vld [vmem:[#allocation5 + $0x348] sm:$0xff]
    %v215 = vld [vmem:[#allocation5 + $0x350] sm:$0xff]
    %v216 = vld [vmem:[#allocation5 + $0x358] sm:$0xff]
    %v217 = vld [vmem:[#allocation5 + $0x360] sm:$0xff]
    %v218 = vld [vmem:[#allocation5 + $0x368] sm:$0xff]
    %v219 = vld [vmem:[#allocation5 + $0x370] sm:$0xff]
    %v220 = vld [vmem:[#allocation5 + $0x378] sm:$0xff]
    %v221 = vld [vmem:[#allocation5 + $0x380] sm:$0xff]
    %v222 = vld [vmem:[#allocation5 + $0x388] sm:$0xff]
    %v223 = vld [vmem:[#allocation5 + $0x390] sm:$0xff]
    %v224 = vld [vmem:[#allocation5 + $0x398] sm:$0xff]
    %v225 = vld [vmem:[#allocation5 + $0x3a0] sm:$0xff]
    %v226 = vld [vmem:[#allocation5 + $0x3a8] sm:$0xff]
    %v227 = vld [vmem:[#allocation5 + $0x3b0] sm:$0xff]
    %v228 = vld [vmem:[#allocation5 + $0x3b8] sm:$0xff]
    %v229 = vld [vmem:[#allocation5 + $0x3c0] sm:$0xff]
    %v230 = vld [vmem:[#allocation5 + $0x3c8] sm:$0xff]
    %v231 = vld [vmem:[#allocation5 + $0x3d0] sm:$0xff]
    %v232 = vld [vmem:[#allocation5 + $0x3d8] sm:$0xff]
    %v233 = vld [vmem:[#allocation5 + $0x3e0] sm:$0xff]
    %v234 = vld [vmem:[#allocation5 + $0x3e8] sm:$0xff]
    %v235 = vld [vmem:[#allocation5 + $0x3f0] sm:$0xff]
    %v236 = vld [vmem:[#allocation5 + $0x3f8] sm:$0xff]
    %v237 = vld [vmem:[#allocation7] sm:$0xff]
    %v239 = vlaneseq
    %v240 = vshrl.u32 %v239, 7
    %v241 = vsub.s32 0, %v240
    %v242 = vrot.slane %v237, %v241
    %v243 = vlaneseq
    %v244 = vshrl.u32 %v243, 7
    %v245 = vsub.s32 1, %v244
    %v246 = vrot.slane %v237, %v245
    %v247 = vlaneseq
    %v248 = vshrl.u32 %v247, 7
    %v249 = vsub.s32 2, %v248
    %v250 = vrot.slane %v237, %v249
    %v251 = vlaneseq
    %v252 = vshrl.u32 %v251, 7
    %v253 = vsub.s32 3, %v252
    %v254 = vrot.slane %v237, %v253
    %v255 = vlaneseq
    %v256 = vshrl.u32 %v255, 7
    %v257 = vsub.s32 4, %v256
    %v258 = vrot.slane %v237, %v257
    %v259 = vlaneseq
    %v260 = vshrl.u32 %v259, 7
    %v261 = vsub.s32 5, %v260
    %v262 = vrot.slane %v237, %v261
    %v263 = vlaneseq
    %v264 = vshrl.u32 %v263, 7
    %v265 = vsub.s32 6, %v264
    %v266 = vrot.slane %v237, %v265
    %v267 = vlaneseq
    %v268 = vshrl.u32 %v267, 7
    %v269 = vsub.s32 7, %v268
    %v270 = vrot.slane %v237, %v269
    %v407 = vunpack.c.l.b16 %v109
    %v408 = vunpack.c.h.b16 %v109
    %v409 = vunpack.c.l.b16 %v110
    %v410 = vunpack.c.h.b16 %v110
    %v411 = vunpack.c.l.b16 %v111
    %v412 = vunpack.c.h.b16 %v111
    %v413 = vunpack.c.l.b16 %v112
    %v414 = vunpack.c.h.b16 %v112
    %v415 = vunpack.c.l.b16 %v113
    %v416 = vunpack.c.h.b16 %v113
    %v417 = vunpack.c.l.b16 %v114
    %v418 = vunpack.c.h.b16 %v114
    %v419 = vunpack.c.l.b16 %v115
    %v420 = vunpack.c.h.b16 %v115
    %v421 = vunpack.c.l.b16 %v116
    %v422 = vunpack.c.h.b16 %v116
    %v423 = vunpack.c.l.b16 %v117
    %v424 = vunpack.c.h.b16 %v117
    %v425 = vunpack.c.l.b16 %v118
    %v426 = vunpack.c.h.b16 %v118
    %v427 = vunpack.c.l.b16 %v119
    %v428 = vunpack.c.h.b16 %v119
    %v429 = vunpack.c.l.b16 %v120
    %v430 = vunpack.c.h.b16 %v120
    %v431 = vunpack.c.l.b16 %v121
    %v432 = vunpack.c.h.b16 %v121
    %v433 = vunpack.c.l.b16 %v122
    %v434 = vunpack.c.h.b16 %v122
    %v435 = vunpack.c.l.b16 %v123
    %v436 = vunpack.c.h.b16 %v123
    %v437 = vunpack.c.l.b16 %v124
    %v438 = vunpack.c.h.b16 %v124
    %v439 = vunpack.c.l.b16 %v125
    %v440 = vunpack.c.h.b16 %v125
    %v441 = vunpack.c.l.b16 %v126
    %v442 = vunpack.c.h.b16 %v126
    %v443 = vunpack.c.l.b16 %v127
    %v444 = vunpack.c.h.b16 %v127
    %v445 = vunpack.c.l.b16 %v128
    %v446 = vunpack.c.h.b16 %v128
    %v447 = vunpack.c.l.b16 %v129
    %v448 = vunpack.c.h.b16 %v129
    %v449 = vunpack.c.l.b16 %v130
    %v450 = vunpack.c.h.b16 %v130
    %v451 = vunpack.c.l.b16 %v131
    %v452 = vunpack.c.h.b16 %v131
    %v453 = vunpack.c.l.b16 %v132
    %v454 = vunpack.c.h.b16 %v132
    %v455 = vunpack.c.l.b16 %v133
    %v456 = vunpack.c.h.b16 %v133
    %v457 = vunpack.c.l.b16 %v134
    %v458 = vunpack.c.h.b16 %v134
    %v459 = vunpack.c.l.b16 %v135
    %v460 = vunpack.c.h.b16 %v135
    %v461 = vunpack.c.l.b16 %v136
    %v462 = vunpack.c.h.b16 %v136
    %v463 = vunpack.c.l.b16 %v137
    %v464 = vunpack.c.h.b16 %v137
    %v465 = vunpack.c.l.b16 %v138
    %v466 = vunpack.c.h.b16 %v138
    %v467 = vunpack.c.l.b16 %v139
    %v468 = vunpack.c.h.b16 %v139
    %v469 = vunpack.c.l.b16 %v140
    %v470 = vunpack.c.h.b16 %v140
    %v471 = vunpack.c.l.b16 %v141
    %v472 = vunpack.c.h.b16 %v141
    %v473 = vunpack.c.l.b16 %v142
    %v474 = vunpack.c.h.b16 %v142
    %v475 = vunpack.c.l.b16 %v143
    %v476 = vunpack.c.h.b16 %v143
    %v477 = vunpack.c.l.b16 %v144
    %v478 = vunpack.c.h.b16 %v144
    %v479 = vunpack.c.l.b16 %v145
    %v480 = vunpack.c.h.b16 %v145
    %v481 = vunpack.c.l.b16 %v146
    %v482 = vunpack.c.h.b16 %v146
    %v483 = vunpack.c.l.b16 %v147
    %v484 = vunpack.c.h.b16 %v147
    %v485 = vunpack.c.l.b16 %v148
    %v486 = vunpack.c.h.b16 %v148
    %v487 = vunpack.c.l.b16 %v149
    %v488 = vunpack.c.h.b16 %v149
    %v489 = vunpack.c.l.b16 %v150
    %v490 = vunpack.c.h.b16 %v150
    %v491 = vunpack.c.l.b16 %v151
    %v492 = vunpack.c.h.b16 %v151
    %v493 = vunpack.c.l.b16 %v152
    %v494 = vunpack.c.h.b16 %v152
    %v495 = vunpack.c.l.b16 %v153
    %v496 = vunpack.c.h.b16 %v153
    %v497 = vunpack.c.l.b16 %v154
    %v498 = vunpack.c.h.b16 %v154
    %v499 = vunpack.c.l.b16 %v155
    %v500 = vunpack.c.h.b16 %v155
    %v501 = vunpack.c.l.b16 %v156
    %v502 = vunpack.c.h.b16 %v156
    %v503 = vunpack.c.l.b16 %v157
    %v504 = vunpack.c.h.b16 %v157
    %v505 = vunpack.c.l.b16 %v158
    %v506 = vunpack.c.h.b16 %v158
    %v507 = vunpack.c.l.b16 %v159
    %v508 = vunpack.c.h.b16 %v159
    %v509 = vunpack.c.l.b16 %v160
    %v510 = vunpack.c.h.b16 %v160
    %v511 = vunpack.c.l.b16 %v161
    %v512 = vunpack.c.h.b16 %v161
    %v513 = vunpack.c.l.b16 %v162
    %v514 = vunpack.c.h.b16 %v162
    %v515 = vunpack.c.l.b16 %v163
    %v516 = vunpack.c.h.b16 %v163
    %v517 = vunpack.c.l.b16 %v164
    %v518 = vunpack.c.h.b16 %v164
    %v519 = vunpack.c.l.b16 %v165
    %v520 = vunpack.c.h.b16 %v165
    %v521 = vunpack.c.l.b16 %v166
    %v522 = vunpack.c.h.b16 %v166
    %v523 = vunpack.c.l.b16 %v167
    %v524 = vunpack.c.h.b16 %v167
    %v525 = vunpack.c.l.b16 %v168
    %v526 = vunpack.c.h.b16 %v168
    %v527 = vunpack.c.l.b16 %v169
    %v528 = vunpack.c.h.b16 %v169
    %v529 = vunpack.c.l.b16 %v170
    %v530 = vunpack.c.h.b16 %v170
    %v531 = vunpack.c.l.b16 %v171
    %v532 = vunpack.c.h.b16 %v171
    %v533 = vunpack.c.l.b16 %v172
    %v534 = vunpack.c.h.b16 %v172
    %v535 = vunpack.c.l.b16 %v173
    %v536 = vunpack.c.h.b16 %v173
    %v537 = vunpack.c.l.b16 %v174
    %v538 = vunpack.c.h.b16 %v174
    %v539 = vunpack.c.l.b16 %v175
    %v540 = vunpack.c.h.b16 %v175
    %v541 = vunpack.c.l.b16 %v176
    %v542 = vunpack.c.h.b16 %v176
    %v543 = vunpack.c.l.b16 %v177
    %v544 = vunpack.c.h.b16 %v177
    %v545 = vunpack.c.l.b16 %v178
    %v546 = vunpack.c.h.b16 %v178
    %v547 = vunpack.c.l.b16 %v179
    %v548 = vunpack.c.h.b16 %v179
    %v549 = vunpack.c.l.b16 %v180
    %v550 = vunpack.c.h.b16 %v180
    %v551 = vunpack.c.l.b16 %v181
    %v552 = vunpack.c.h.b16 %v181
    %v553 = vunpack.c.l.b16 %v182
    %v554 = vunpack.c.h.b16 %v182
    %v555 = vunpack.c.l.b16 %v183
    %v556 = vunpack.c.h.b16 %v183
    %v557 = vunpack.c.l.b16 %v184
    %v558 = vunpack.c.h.b16 %v184
    %v559 = vunpack.c.l.b16 %v185
    %v560 = vunpack.c.h.b16 %v185
    %v561 = vunpack.c.l.b16 %v186
    %v562 = vunpack.c.h.b16 %v186
    %v563 = vunpack.c.l.b16 %v187
    %v564 = vunpack.c.h.b16 %v187
    %v565 = vunpack.c.l.b16 %v188
    %v566 = vunpack.c.h.b16 %v188
    %v567 = vunpack.c.l.b16 %v189
    %v568 = vunpack.c.h.b16 %v189
    %v569 = vunpack.c.l.b16 %v190
    %v570 = vunpack.c.h.b16 %v190
    %v571 = vunpack.c.l.b16 %v191
    %v572 = vunpack.c.h.b16 %v191
    %v573 = vunpack.c.l.b16 %v192
    %v574 = vunpack.c.h.b16 %v192
    %v575 = vunpack.c.l.b16 %v193
    %v576 = vunpack.c.h.b16 %v193
    %v577 = vunpack.c.l.b16 %v194
    %v578 = vunpack.c.h.b16 %v194
    %v579 = vunpack.c.l.b16 %v195
    %v580 = vunpack.c.h.b16 %v195
    %v581 = vunpack.c.l.b16 %v196
    %v582 = vunpack.c.h.b16 %v196
    %v583 = vunpack.c.l.b16 %v197
    %v584 = vunpack.c.h.b16 %v197
    %v585 = vunpack.c.l.b16 %v198
    %v586 = vunpack.c.h.b16 %v198
    %v587 = vunpack.c.l.b16 %v199
    %v588 = vunpack.c.h.b16 %v199
    %v589 = vunpack.c.l.b16 %v200
    %v590 = vunpack.c.h.b16 %v200
    %v591 = vunpack.c.l.b16 %v201
    %v592 = vunpack.c.h.b16 %v201
    %v593 = vunpack.c.l.b16 %v202
    %v594 = vunpack.c.h.b16 %v202
    %v595 = vunpack.c.l.b16 %v203
    %v596 = vunpack.c.h.b16 %v203
    %v597 = vunpack.c.l.b16 %v204
    %v598 = vunpack.c.h.b16 %v204
    %v599 = vunpack.c.l.b16 %v205
    %v600 = vunpack.c.h.b16 %v205
    %v601 = vunpack.c.l.b16 %v206
    %v602 = vunpack.c.h.b16 %v206
    %v603 = vunpack.c.l.b16 %v207
    %v604 = vunpack.c.h.b16 %v207
    %v605 = vunpack.c.l.b16 %v208
    %v606 = vunpack.c.h.b16 %v208
    %v607 = vunpack.c.l.b16 %v209
    %v608 = vunpack.c.h.b16 %v209
    %v609 = vunpack.c.l.b16 %v210
    %v610 = vunpack.c.h.b16 %v210
    %v611 = vunpack.c.l.b16 %v211
    %v612 = vunpack.c.h.b16 %v211
    %v613 = vunpack.c.l.b16 %v212
    %v614 = vunpack.c.h.b16 %v212
    %v615 = vunpack.c.l.b16 %v213
    %v616 = vunpack.c.h.b16 %v213
    %v617 = vunpack.c.l.b16 %v214
    %v618 = vunpack.c.h.b16 %v214
    %v619 = vunpack.c.l.b16 %v215
    %v620 = vunpack.c.h.b16 %v215
    %v621 = vunpack.c.l.b16 %v216
    %v622 = vunpack.c.h.b16 %v216
    %v623 = vunpack.c.l.b16 %v217
    %v624 = vunpack.c.h.b16 %v217
    %v625 = vunpack.c.l.b16 %v218
    %v626 = vunpack.c.h.b16 %v218
    %v627 = vunpack.c.l.b16 %v219
    %v628 = vunpack.c.h.b16 %v219
    %v629 = vunpack.c.l.b16 %v220
    %v630 = vunpack.c.h.b16 %v220
    %v631 = vunpack.c.l.b16 %v221
    %v632 = vunpack.c.h.b16 %v221
    %v633 = vunpack.c.l.b16 %v222
    %v634 = vunpack.c.h.b16 %v222
    %v635 = vunpack.c.l.b16 %v223
    %v636 = vunpack.c.h.b16 %v223
    %v637 = vunpack.c.l.b16 %v224
    %v638 = vunpack.c.h.b16 %v224
    %v639 = vunpack.c.l.b16 %v225
    %v640 = vunpack.c.h.b16 %v225
    %v641 = vunpack.c.l.b16 %v226
    %v642 = vunpack.c.h.b16 %v226
    %v643 = vunpack.c.l.b16 %v227
    %v644 = vunpack.c.h.b16 %v227
    %v645 = vunpack.c.l.b16 %v228
    %v646 = vunpack.c.h.b16 %v228
    %v647 = vunpack.c.l.b16 %v229
    %v648 = vunpack.c.h.b16 %v229
    %v649 = vunpack.c.l.b16 %v230
    %v650 = vunpack.c.h.b16 %v230
    %v651 = vunpack.c.l.b16 %v231
    %v652 = vunpack.c.h.b16 %v231
    %v653 = vunpack.c.l.b16 %v232
    %v654 = vunpack.c.h.b16 %v232
    %v655 = vunpack.c.l.b16 %v233
    %v656 = vunpack.c.h.b16 %v233
    %v657 = vunpack.c.l.b16 %v234
    %v658 = vunpack.c.h.b16 %v234
    %v659 = vunpack.c.l.b16 %v235
    %v660 = vunpack.c.h.b16 %v235
    %v661 = vunpack.c.l.b16 %v236
    %v662 = vunpack.c.h.b16 %v236
    %v663 = vpack.c.b16 %v415, %v407
    %v664 = vpack.c.b16 %v416, %v408
    %v665 = vpack.c.b16 %v417, %v409
    %v666 = vpack.c.b16 %v418, %v410
    %v667 = vpack.c.b16 %v419, %v411
    %v668 = vpack.c.b16 %v420, %v412
    %v669 = vpack.c.b16 %v421, %v413
    %v670 = vpack.c.b16 %v422, %v414
    %v671 = vpack.c.b16 %v431, %v423
    %v672 = vpack.c.b16 %v432, %v424
    %v673 = vpack.c.b16 %v433, %v425
    %v674 = vpack.c.b16 %v434, %v426
    %v675 = vpack.c.b16 %v435, %v427
    %v676 = vpack.c.b16 %v436, %v428
    %v677 = vpack.c.b16 %v437, %v429
    %v678 = vpack.c.b16 %v438, %v430
    %v679 = vpack.c.b16 %v447, %v439
    %v680 = vpack.c.b16 %v448, %v440
    %v681 = vpack.c.b16 %v449, %v441
    %v682 = vpack.c.b16 %v450, %v442
    %v683 = vpack.c.b16 %v451, %v443
    %v684 = vpack.c.b16 %v452, %v444
    %v685 = vpack.c.b16 %v453, %v445
    %v686 = vpack.c.b16 %v454, %v446
    %v687 = vpack.c.b16 %v463, %v455
    %v688 = vpack.c.b16 %v464, %v456
    %v689 = vpack.c.b16 %v465, %v457
    %v690 = vpack.c.b16 %v466, %v458
    %v691 = vpack.c.b16 %v467, %v459
    %v692 = vpack.c.b16 %v468, %v460
    %v693 = vpack.c.b16 %v469, %v461
    %v694 = vpack.c.b16 %v470, %v462
    %v695 = vpack.c.b16 %v479, %v471
    %v696 = vpack.c.b16 %v480, %v472
    %v697 = vpack.c.b16 %v481, %v473
    %v698 = vpack.c.b16 %v482, %v474
    %v699 = vpack.c.b16 %v483, %v475
    %v700 = vpack.c.b16 %v484, %v476
    %v701 = vpack.c.b16 %v485, %v477
    %v702 = vpack.c.b16 %v486, %v478
    %v703 = vpack.c.b16 %v495, %v487
    %v704 = vpack.c.b16 %v496, %v488
    %v705 = vpack.c.b16 %v497, %v489
    %v706 = vpack.c.b16 %v498, %v490
    %v707 = vpack.c.b16 %v499, %v491
    %v708 = vpack.c.b16 %v500, %v492
    %v709 = vpack.c.b16 %v501, %v493
    %v710 = vpack.c.b16 %v502, %v494
    %v711 = vpack.c.b16 %v511, %v503
    %v712 = vpack.c.b16 %v512, %v504
    %v713 = vpack.c.b16 %v513, %v505
    %v714 = vpack.c.b16 %v514, %v506
    %v715 = vpack.c.b16 %v515, %v507
    %v716 = vpack.c.b16 %v516, %v508
    %v717 = vpack.c.b16 %v517, %v509
    %v718 = vpack.c.b16 %v518, %v510
    %v719 = vpack.c.b16 %v527, %v519
    %v720 = vpack.c.b16 %v528, %v520
    %v721 = vpack.c.b16 %v529, %v521
    %v722 = vpack.c.b16 %v530, %v522
    %v723 = vpack.c.b16 %v531, %v523
    %v724 = vpack.c.b16 %v532, %v524
    %v725 = vpack.c.b16 %v533, %v525
    %v726 = vpack.c.b16 %v534, %v526
    %v727 = vpack.c.b16 %v543, %v535
    %v728 = vpack.c.b16 %v544, %v536
    %v729 = vpack.c.b16 %v545, %v537
    %v730 = vpack.c.b16 %v546, %v538
    %v731 = vpack.c.b16 %v547, %v539
    %v732 = vpack.c.b16 %v548, %v540
    %v733 = vpack.c.b16 %v549, %v541
    %v734 = vpack.c.b16 %v550, %v542
    %v735 = vpack.c.b16 %v559, %v551
    %v736 = vpack.c.b16 %v560, %v552
    %v737 = vpack.c.b16 %v561, %v553
    %v738 = vpack.c.b16 %v562, %v554
    %v739 = vpack.c.b16 %v563, %v555
    %v740 = vpack.c.b16 %v564, %v556
    %v741 = vpack.c.b16 %v565, %v557
    %v742 = vpack.c.b16 %v566, %v558
    %v743 = vpack.c.b16 %v575, %v567
    %v744 = vpack.c.b16 %v576, %v568
    %v745 = vpack.c.b16 %v577, %v569
    %v746 = vpack.c.b16 %v578, %v570
    %v747 = vpack.c.b16 %v579, %v571
    %v748 = vpack.c.b16 %v580, %v572
    %v749 = vpack.c.b16 %v581, %v573
    %v750 = vpack.c.b16 %v582, %v574
    %v751 = vpack.c.b16 %v591, %v583
    %v752 = vpack.c.b16 %v592, %v584
    %v753 = vpack.c.b16 %v593, %v585
    %v754 = vpack.c.b16 %v594, %v586
    %v755 = vpack.c.b16 %v595, %v587
    %v756 = vpack.c.b16 %v596, %v588
    %v757 = vpack.c.b16 %v597, %v589
    %v758 = vpack.c.b16 %v598, %v590
    %v759 = vpack.c.b16 %v607, %v599
    %v760 = vpack.c.b16 %v608, %v600
    %v761 = vpack.c.b16 %v609, %v601
    %v762 = vpack.c.b16 %v610, %v602
    %v763 = vpack.c.b16 %v611, %v603
    %v764 = vpack.c.b16 %v612, %v604
    %v765 = vpack.c.b16 %v613, %v605
    %v766 = vpack.c.b16 %v614, %v606
    %v767 = vpack.c.b16 %v623, %v615
    %v768 = vpack.c.b16 %v624, %v616
    %v769 = vpack.c.b16 %v625, %v617
    %v770 = vpack.c.b16 %v626, %v618
    %v771 = vpack.c.b16 %v627, %v619
    %v772 = vpack.c.b16 %v628, %v620
    %v773 = vpack.c.b16 %v629, %v621
    %v774 = vpack.c.b16 %v630, %v622
    %v775 = vpack.c.b16 %v639, %v631
    %v776 = vpack.c.b16 %v640, %v632
    %v777 = vpack.c.b16 %v641, %v633
    %v778 = vpack.c.b16 %v642, %v634
    %v779 = vpack.c.b16 %v643, %v635
    %v780 = vpack.c.b16 %v644, %v636
    %v781 = vpack.c.b16 %v645, %v637
    %v782 = vpack.c.b16 %v646, %v638
    %v783 = vpack.c.b16 %v655, %v647
    %v784 = vpack.c.b16 %v656, %v648
    %v785 = vpack.c.b16 %v657, %v649
    %v786 = vpack.c.b16 %v658, %v650
    %v787 = vpack.c.b16 %v659, %v651
    %v788 = vpack.c.b16 %v660, %v652
    %v789 = vpack.c.b16 %v661, %v653
    %v790 = vpack.c.b16 %v662, %v654
    %919 = vmatprep.subr.bf16.mxu0 %v664
    %920 = vmatpush1.bf16.msra.mxu0 %v663
    %921 = vmatprep.subr.bf16.mxu0 %v672
    %922 = vmatpush1.bf16.msra.mxu0 %v671
    %923 = vmatprep.subr.bf16.mxu0 %v680
    %924 = vmatpush1.bf16.msra.mxu0 %v679
    %925 = vmatprep.subr.bf16.mxu0 %v688
    %926 = vmatpush1.bf16.msra.mxu0 %v687
    %927 = vmatprep.subr.bf16.mxu0 %v696
    %928 = vmatpush1.bf16.msra.mxu0 %v695
    %929 = vmatprep.subr.bf16.mxu0 %v704
    %930 = vmatpush1.bf16.msra.mxu0 %v703
    %931 = vmatprep.subr.bf16.mxu0 %v712
    %932 = vmatpush1.bf16.msra.mxu0 %v711
    %933 = vmatprep.subr.bf16.mxu0 %v720
    %934 = vmatpush1.bf16.msra.mxu0 %v719
    %935 = vmatprep.subr.bf16.mxu0 %v728
    %936 = vmatpush1.bf16.msra.mxu0 %v727
    %937 = vmatprep.subr.bf16.mxu0 %v736
    %938 = vmatpush1.bf16.msra.mxu0 %v735
    %939 = vmatprep.subr.bf16.mxu0 %v744
    %940 = vmatpush1.bf16.msra.mxu0 %v743
    %941 = vmatprep.subr.bf16.mxu0 %v752
    %942 = vmatpush1.bf16.msra.mxu0 %v751
    %943 = vmatprep.subr.bf16.mxu0 %v760
    %944 = vmatpush1.bf16.msra.mxu0 %v759
    %945 = vmatprep.subr.bf16.mxu0 %v768
    %946 = vmatpush1.bf16.msra.mxu0 %v767
    %947 = vmatprep.subr.bf16.mxu0 %v776
    %948 = vmatpush1.bf16.msra.mxu0 %v775
    %949 = vmatprep.subr.bf16.mxu0 %v784
    %950 = vmatpush1.bf16.msra.mxu0 %v783
    %951 = vmatprep.mubr.bf16.mxu0 %v108
    %952 = vmatmul.mubr.bf16.gmra.mrb[0].mxu0 %v107
    %v953 = vpop.f32.mrb[0].mxu0
    %v954 = vadd.f32 %v242, %v953
    %v955 = vpop.f32.mrb[0].mxu0
    %v956 = vadd.f32 %v246, %v955
    %v957 = vpop.f32.mrb[0].mxu0
    %v958 = vadd.f32 %v242, %v957
    %v959 = vpop.f32.mrb[0].mxu0
    %v960 = vadd.f32 %v246, %v959
    %961 = vdwg.mxu0
    %962 = vmatprep.subr.bf16.mxu0 %v666
    %963 = vmatpush1.bf16.msra.mxu0 %v665
    %964 = vmatprep.subr.bf16.mxu0 %v674
    %965 = vmatpush1.bf16.msra.mxu0 %v673
    %966 = vmatprep.subr.bf16.mxu0 %v682
    %967 = vmatpush1.bf16.msra.mxu0 %v681
    %968 = vmatprep.subr.bf16.mxu0 %v690
    %969 = vmatpush1.bf16.msra.mxu0 %v689
    %970 = vmatprep.subr.bf16.mxu0 %v698
    %971 = vmatpush1.bf16.msra.mxu0 %v697
    %972 = vmatprep.subr.bf16.mxu0 %v706
    %973 = vmatpush1.bf16.msra.mxu0 %v705
    %974 = vmatprep.subr.bf16.mxu0 %v714
    %975 = vmatpush1.bf16.msra.mxu0 %v713
    %976 = vmatprep.subr.bf16.mxu0 %v722
    %977 = vmatpush1.bf16.msra.mxu0 %v721
    %978 = vmatprep.subr.bf16.mxu0 %v730
    %979 = vmatpush1.bf16.msra.mxu0 %v729
    %980 = vmatprep.subr.bf16.mxu0 %v738
    %981 = vmatpush1.bf16.msra.mxu0 %v737
    %982 = vmatprep.subr.bf16.mxu0 %v746
    %983 = vmatpush1.bf16.msra.mxu0 %v745
    %984 = vmatprep.subr.bf16.mxu0 %v754
    %985 = vmatpush1.bf16.msra.mxu0 %v753
    %986 = vmatprep.subr.bf16.mxu0 %v762
    %987 = vmatpush1.bf16.msra.mxu0 %v761
    %988 = vmatprep.subr.bf16.mxu0 %v770
    %989 = vmatpush1.bf16.msra.mxu0 %v769
    %990 = vmatprep.subr.bf16.mxu0 %v778
    %991 = vmatpush1.bf16.msra.mxu0 %v777
    %992 = vmatprep.subr.bf16.mxu0 %v786
    %993 = vmatpush1.bf16.msra.mxu0 %v785
    %994 = vmatprep.mubr.bf16.mxu0 %v108
    %995 = vmatmul.mubr.bf16.gmra.mrb[0].mxu0 %v107
    %v996 = vpop.f32.mrb[0].mxu0
    %v997 = vadd.f32 %v250, %v996
    %v998 = vpop.f32.mrb[0].mxu0
    %v999 = vadd.f32 %v254, %v998
    %v1000 = vpop.f32.mrb[0].mxu0
    %v1001 = vadd.f32 %v250, %v1000
    %v1002 = vpop.f32.mrb[0].mxu0
    %v1003 = vadd.f32 %v254, %v1002
    %1004 = vdwg.mxu0
    %1005 = vmatprep.subr.bf16.mxu0 %v668
    %1006 = vmatpush1.bf16.msra.mxu0 %v667
    %1007 = vmatprep.subr.bf16.mxu0 %v676
    %1008 = vmatpush1.bf16.msra.mxu0 %v675
    %1009 = vmatprep.subr.bf16.mxu0 %v684
    %1010 = vmatpush1.bf16.msra.mxu0 %v683
    %1011 = vmatprep.subr.bf16.mxu0 %v692
    %1012 = vmatpush1.bf16.msra.mxu0 %v691
    %1013 = vmatprep.subr.bf16.mxu0 %v700
    %1014 = vmatpush1.bf16.msra.mxu0 %v699
    %1015 = vmatprep.subr.bf16.mxu0 %v708
    %1016 = vmatpush1.bf16.msra.mxu0 %v707
    %1017 = vmatprep.subr.bf16.mxu0 %v716
    %1018 = vmatpush1.bf16.msra.mxu0 %v715
    %1019 = vmatprep.subr.bf16.mxu0 %v724
    %1020 = vmatpush1.bf16.msra.mxu0 %v723
    %1021 = vmatprep.subr.bf16.mxu0 %v732
    %1022 = vmatpush1.bf16.msra.mxu0 %v731
    %1023 = vmatprep.subr.bf16.mxu0 %v740
    %1024 = vmatpush1.bf16.msra.mxu0 %v739
    %1025 = vmatprep.subr.bf16.mxu0 %v748
    %1026 = vmatpush1.bf16.msra.mxu0 %v747
    %1027 = vmatprep.subr.bf16.mxu0 %v756
    %1028 = vmatpush1.bf16.msra.mxu0 %v755
    %1029 = vmatprep.subr.bf16.mxu0 %v764
    %1030 = vmatpush1.bf16.msra.mxu0 %v763
    %1031 = vmatprep.subr.bf16.mxu0 %v772
    %1032 = vmatpush1.bf16.msra.mxu0 %v771
    %1033 = vmatprep.subr.bf16.mxu0 %v780
    %1034 = vmatpush1.bf16.msra.mxu0 %v779
    %1035 = vmatprep.subr.bf16.mxu0 %v788
    %1036 = vmatpush1.bf16.msra.mxu0 %v787
    %1037 = vmatprep.mubr.bf16.mxu0 %v108
    %1038 = vmatmul.mubr.bf16.gmra.mrb[0].mxu0 %v107
    %v1039 = vpop.f32.mrb[0].mxu0
    %v1040 = vadd.f32 %v258, %v1039
    %v1041 = vpop.f32.mrb[0].mxu0
    %v1042 = vadd.f32 %v262, %v1041
    %v1043 = vpop.f32.mrb[0].mxu0
    %v1044 = vadd.f32 %v258, %v1043
    %v1045 = vpop.f32.mrb[0].mxu0
    %v1046 = vadd.f32 %v262, %v1045
    %1047 = vdwg.mxu0
    %1048 = vmatprep.subr.bf16.mxu0 %v670
    %1049 = vmatpush1.bf16.msra.mxu0 %v669
    %1050 = vmatprep.subr.bf16.mxu0 %v678
    %1051 = vmatpush1.bf16.msra.mxu0 %v677
    %1052 = vmatprep.subr.bf16.mxu0 %v686
    %1053 = vmatpush1.bf16.msra.mxu0 %v685
    %1054 = vmatprep.subr.bf16.mxu0 %v694
    %1055 = vmatpush1.bf16.msra.mxu0 %v693
    %1056 = vmatprep.subr.bf16.mxu0 %v702
    %1057 = vmatpush1.bf16.msra.mxu0 %v701
    %1058 = vmatprep.subr.bf16.mxu0 %v710
    %1059 = vmatpush1.bf16.msra.mxu0 %v709
    %1060 = vmatprep.subr.bf16.mxu0 %v718
    %1061 = vmatpush1.bf16.msra.mxu0 %v717
    %1062 = vmatprep.subr.bf16.mxu0 %v726
    %1063 = vmatpush1.bf16.msra.mxu0 %v725
    %1064 = vmatprep.subr.bf16.mxu0 %v734
    %1065 = vmatpush1.bf16.msra.mxu0 %v733
    %1066 = vmatprep.subr.bf16.mxu0 %v742
    %1067 = vmatpush1.bf16.msra.mxu0 %v741
    %1068 = vmatprep.subr.bf16.mxu0 %v750
    %1069 = vmatpush1.bf16.msra.mxu0 %v749
    %1070 = vmatprep.subr.bf16.mxu0 %v758
    %1071 = vmatpush1.bf16.msra.mxu0 %v757
    %1072 = vmatprep.subr.bf16.mxu0 %v766
    %1073 = vmatpush1.bf16.msra.mxu0 %v765
    %1074 = vmatprep.subr.bf16.mxu0 %v774
    %1075 = vmatpush1.bf16.msra.mxu0 %v773
    %1076 = vmatprep.subr.bf16.mxu0 %v782
    %1077 = vmatpush1.bf16.msra.mxu0 %v781
    %1078 = vmatprep.subr.bf16.mxu0 %v790
    %1079 = vmatpush1.bf16.msra.mxu0 %v789
    %1080 = vmatprep.mubr.bf16.mxu0 %v108
    %1081 = vmatmul.mubr.bf16.gmra.mrb[0].mxu0 %v107
    %v1082 = vpop.f32.mrb[0].mxu0
    %v1083 = vadd.f32 %v266, %v1082
    %v1084 = vpop.f32.mrb[0].mxu0
    %v1085 = vadd.f32 %v270, %v1084
    %v1086 = vpop.f32.mrb[0].mxu0
    %v1087 = vadd.f32 %v266, %v1086
    %v1088 = vpop.f32.mrb[0].mxu0
    %v1089 = vadd.f32 %v270, %v1088
    %1090 = vdwg.mxu0
    %v1091 = vmax.f32 %v954, 0.0
    %v1092 = vmax.f32 %v956, 0.0
    %v1093 = vmax.f32 %v997, 0.0
    %v1094 = vmax.f32 %v999, 0.0
    %v1095 = vmax.f32 %v1040, 0.0
    %v1096 = vmax.f32 %v1042, 0.0
    %v1097 = vmax.f32 %v1083, 0.0
    %v1098 = vmax.f32 %v1085, 0.0
    %v1099 = vmax.f32 %v958, 0.0
    %v1100 = vmax.f32 %v960, 0.0
    %v1101 = vmax.f32 %v1001, 0.0
    %v1102 = vmax.f32 %v1003, 0.0
    %v1103 = vmax.f32 %v1044, 0.0
    %v1104 = vmax.f32 %v1046, 0.0
    %v1105 = vmax.f32 %v1087, 0.0
    %v1106 = vmax.f32 %v1089, 0.0
    %v1107 = vpack.c.bf16 %v1099, %v1091
    %v1108 = vpack.c.bf16 %v1100, %v1092
    %v1109 = vpack.c.bf16 %v1101, %v1093
    %v1110 = vpack.c.bf16 %v1102, %v1094
    %v1111 = vpack.c.bf16 %v1103, %v1095
    %v1112 = vpack.c.bf16 %v1104, %v1096
    %v1113 = vpack.c.bf16 %v1105, %v1097
    %v1114 = vpack.c.bf16 %v1106, %v1098
    %v1115 = vld [vmem:[#allocation8] sm:$0xff]
    %v1116 = vld [vmem:[#allocation8 + $0x8] sm:$0xff]
    %v1117 = vld [vmem:[#allocation8 + $0x10] sm:$0xff]
    %v1118 = vld [vmem:[#allocation8 + $0x18] sm:$0xff]
    %v1119 = vld [vmem:[#allocation8 + $0x20] sm:$0xff]
    %v1120 = vld [vmem:[#allocation8 + $0x28] sm:$0xff]
    %v1121 = vld [vmem:[#allocation8 + $0x30] sm:$0xff]
    %v1122 = vld [vmem:[#allocation8 + $0x38] sm:$0xff]
    %v1123 = vld [vmem:[#allocation8 + $0x40] sm:$0xff]
    %v1124 = vld [vmem:[#allocation8 + $0x48] sm:$0xff]
    %v1125 = vld [vmem:[#allocation8 + $0x50] sm:$0xff]
    %v1126 = vld [vmem:[#allocation8 + $0x58] sm:$0xff]
    %v1127 = vld [vmem:[#allocation8 + $0x60] sm:$0xff]
    %v1128 = vld [vmem:[#allocation8 + $0x68] sm:$0xff]
    %v1129 = vld [vmem:[#allocation8 + $0x70] sm:$0xff]
    %v1130 = vld [vmem:[#allocation8 + $0x78] sm:$0xff]
    %v1131 = vld [vmem:[#allocation8 + $0x80] sm:$0xff]
    %v1132 = vld [vmem:[#allocation8 + $0x88] sm:$0xff]
    %v1133 = vld [vmem:[#allocation8 + $0x90] sm:$0xff]
    %v1134 = vld [vmem:[#allocation8 + $0x98] sm:$0xff]
    %v1135 = vld [vmem:[#allocation8 + $0xa0] sm:$0xff]
    %v1136 = vld [vmem:[#allocation8 + $0xa8] sm:$0xff]
    %v1137 = vld [vmem:[#allocation8 + $0xb0] sm:$0xff]
    %v1138 = vld [vmem:[#allocation8 + $0xb8] sm:$0xff]
    %v1139 = vld [vmem:[#allocation8 + $0xc0] sm:$0xff]
    %v1140 = vld [vmem:[#allocation8 + $0xc8] sm:$0xff]
    %v1141 = vld [vmem:[#allocation8 + $0xd0] sm:$0xff]
    %v1142 = vld [vmem:[#allocation8 + $0xd8] sm:$0xff]
    %v1143 = vld [vmem:[#allocation8 + $0xe0] sm:$0xff]
    %v1144 = vld [vmem:[#allocation8 + $0xe8] sm:$0xff]
    %v1145 = vld [vmem:[#allocation8 + $0xf0] sm:$0xff]
    %v1146 = vld [vmem:[#allocation8 + $0xf8] sm:$0xff]
    %v1147 = vld [vmem:[#allocation8 + $0x100] sm:$0xff]
    %v1148 = vld [vmem:[#allocation8 + $0x108] sm:$0xff]
    %v1149 = vld [vmem:[#allocation8 + $0x110] sm:$0xff]
    %v1150 = vld [vmem:[#allocation8 + $0x118] sm:$0xff]
    %v1151 = vld [vmem:[#allocation8 + $0x120] sm:$0xff]
    %v1152 = vld [vmem:[#allocation8 + $0x128] sm:$0xff]
    %v1153 = vld [vmem:[#allocation8 + $0x130] sm:$0xff]
    %v1154 = vld [vmem:[#allocation8 + $0x138] sm:$0xff]
    %v1155 = vld [vmem:[#allocation8 + $0x140] sm:$0xff]
    %v1156 = vld [vmem:[#allocation8 + $0x148] sm:$0xff]
    %v1157 = vld [vmem:[#allocation8 + $0x150] sm:$0xff]
    %v1158 = vld [vmem:[#allocation8 + $0x158] sm:$0xff]
    %v1159 = vld [vmem:[#allocation8 + $0x160] sm:$0xff]
    %v1160 = vld [vmem:[#allocation8 + $0x168] sm:$0xff]
    %v1161 = vld [vmem:[#allocation8 + $0x170] sm:$0xff]
    %v1162 = vld [vmem:[#allocation8 + $0x178] sm:$0xff]
    %v1163 = vld [vmem:[#allocation8 + $0x180] sm:$0xff]
    %v1164 = vld [vmem:[#allocation8 + $0x188] sm:$0xff]
    %v1165 = vld [vmem:[#allocation8 + $0x190] sm:$0xff]
    %v1166 = vld [vmem:[#allocation8 + $0x198] sm:$0xff]
    %v1167 = vld [vmem:[#allocation8 + $0x1a0] sm:$0xff]
    %v1168 = vld [vmem:[#allocation8 + $0x1a8] sm:$0xff]
    %v1169 = vld [vmem:[#allocation8 + $0x1b0] sm:$0xff]
    %v1170 = vld [vmem:[#allocation8 + $0x1b8] sm:$0xff]
    %v1171 = vld [vmem:[#allocation8 + $0x1c0] sm:$0xff]
    %v1172 = vld [vmem:[#allocation8 + $0x1c8] sm:$0xff]
    %v1173 = vld [vmem:[#allocation8 + $0x1d0] sm:$0xff]
    %v1174 = vld [vmem:[#allocation8 + $0x1d8] sm:$0xff]
    %v1175 = vld [vmem:[#allocation8 + $0x1e0] sm:$0xff]
    %v1176 = vld [vmem:[#allocation8 + $0x1e8] sm:$0xff]
    %v1177 = vld [vmem:[#allocation8 + $0x1f0] sm:$0xff]
    %v1178 = vld [vmem:[#allocation8 + $0x1f8] sm:$0xff]
    %v1179 = vld [vmem:[#allocation8 + $0x200] sm:$0xff]
    %v1180 = vld [vmem:[#allocation8 + $0x208] sm:$0xff]
    %v1181 = vld [vmem:[#allocation8 + $0x210] sm:$0xff]
    %v1182 = vld [vmem:[#allocation8 + $0x218] sm:$0xff]
    %v1183 = vld [vmem:[#allocation8 + $0x220] sm:$0xff]
    %v1184 = vld [vmem:[#allocation8 + $0x228] sm:$0xff]
    %v1185 = vld [vmem:[#allocation8 + $0x230] sm:$0xff]
    %v1186 = vld [vmem:[#allocation8 + $0x238] sm:$0xff]
    %v1187 = vld [vmem:[#allocation8 + $0x240] sm:$0xff]
    %v1188 = vld [vmem:[#allocation8 + $0x248] sm:$0xff]
    %v1189 = vld [vmem:[#allocation8 + $0x250] sm:$0xff]
    %v1190 = vld [vmem:[#allocation8 + $0x258] sm:$0xff]
    %v1191 = vld [vmem:[#allocation8 + $0x260] sm:$0xff]
    %v1192 = vld [vmem:[#allocation8 + $0x268] sm:$0xff]
    %v1193 = vld [vmem:[#allocation8 + $0x270] sm:$0xff]
    %v1194 = vld [vmem:[#allocation8 + $0x278] sm:$0xff]
    %v1195 = vld [vmem:[#allocation8 + $0x280] sm:$0xff]
    %v1196 = vld [vmem:[#allocation8 + $0x288] sm:$0xff]
    %v1197 = vld [vmem:[#allocation8 + $0x290] sm:$0xff]
    %v1198 = vld [vmem:[#allocation8 + $0x298] sm:$0xff]
    %v1199 = vld [vmem:[#allocation8 + $0x2a0] sm:$0xff]
    %v1200 = vld [vmem:[#allocation8 + $0x2a8] sm:$0xff]
    %v1201 = vld [vmem:[#allocation8 + $0x2b0] sm:$0xff]
    %v1202 = vld [vmem:[#allocation8 + $0x2b8] sm:$0xff]
    %v1203 = vld [vmem:[#allocation8 + $0x2c0] sm:$0xff]
    %v1204 = vld [vmem:[#allocation8 + $0x2c8] sm:$0xff]
    %v1205 = vld [vmem:[#allocation8 + $0x2d0] sm:$0xff]
    %v1206 = vld [vmem:[#allocation8 + $0x2d8] sm:$0xff]
    %v1207 = vld [vmem:[#allocation8 + $0x2e0] sm:$0xff]
    %v1208 = vld [vmem:[#allocation8 + $0x2e8] sm:$0xff]
    %v1209 = vld [vmem:[#allocation8 + $0x2f0] sm:$0xff]
    %v1210 = vld [vmem:[#allocation8 + $0x2f8] sm:$0xff]
    %v1211 = vld [vmem:[#allocation8 + $0x300] sm:$0xff]
    %v1212 = vld [vmem:[#allocation8 + $0x308] sm:$0xff]
    %v1213 = vld [vmem:[#allocation8 + $0x310] sm:$0xff]
    %v1214 = vld [vmem:[#allocation8 + $0x318] sm:$0xff]
    %v1215 = vld [vmem:[#allocation8 + $0x320] sm:$0xff]
    %v1216 = vld [vmem:[#allocation8 + $0x328] sm:$0xff]
    %v1217 = vld [vmem:[#allocation8 + $0x330] sm:$0xff]
    %v1218 = vld [vmem:[#allocation8 + $0x338] sm:$0xff]
    %v1219 = vld [vmem:[#allocation8 + $0x340] sm:$0xff]
    %v1220 = vld [vmem:[#allocation8 + $0x348] sm:$0xff]
    %v1221 = vld [vmem:[#allocation8 + $0x350] sm:$0xff]
    %v1222 = vld [vmem:[#allocation8 + $0x358] sm:$0xff]
    %v1223 = vld [vmem:[#allocation8 + $0x360] sm:$0xff]
    %v1224 = vld [vmem:[#allocation8 + $0x368] sm:$0xff]
    %v1225 = vld [vmem:[#allocation8 + $0x370] sm:$0xff]
    %v1226 = vld [vmem:[#allocation8 + $0x378] sm:$0xff]
    %v1227 = vld [vmem:[#allocation8 + $0x380] sm:$0xff]
    %v1228 = vld [vmem:[#allocation8 + $0x388] sm:$0xff]
    %v1229 = vld [vmem:[#allocation8 + $0x390] sm:$0xff]
    %v1230 = vld [vmem:[#allocation8 + $0x398] sm:$0xff]
    %v1231 = vld [vmem:[#allocation8 + $0x3a0] sm:$0xff]
    %v1232 = vld [vmem:[#allocation8 + $0x3a8] sm:$0xff]
    %v1233 = vld [vmem:[#allocation8 + $0x3b0] sm:$0xff]
    %v1234 = vld [vmem:[#allocation8 + $0x3b8] sm:$0xff]
    %v1235 = vld [vmem:[#allocation8 + $0x3c0] sm:$0xff]
    %v1236 = vld [vmem:[#allocation8 + $0x3c8] sm:$0xff]
    %v1237 = vld [vmem:[#allocation8 + $0x3d0] sm:$0xff]
    %v1238 = vld [vmem:[#allocation8 + $0x3d8] sm:$0xff]
    %v1239 = vld [vmem:[#allocation8 + $0x3e0] sm:$0xff]
    %v1240 = vld [vmem:[#allocation8 + $0x3e8] sm:$0xff]
    %v1241 = vld [vmem:[#allocation8 + $0x3f0] sm:$0xff]
    %v1242 = vld [vmem:[#allocation8 + $0x3f8] sm:$0xff]
    %v1243 = vld [vmem:[#allocation8 + $0x400] sm:$0xff]
    %v1244 = vld [vmem:[#allocation8 + $0x408] sm:$0xff]
    %v1245 = vld [vmem:[#allocation8 + $0x410] sm:$0xff]
    %v1246 = vld [vmem:[#allocation8 + $0x418] sm:$0xff]
    %v1247 = vld [vmem:[#allocation8 + $0x420] sm:$0xff]
    %v1248 = vld [vmem:[#allocation8 + $0x428] sm:$0xff]
    %v1249 = vld [vmem:[#allocation8 + $0x430] sm:$0xff]
    %v1250 = vld [vmem:[#allocation8 + $0x438] sm:$0xff]
    %v1251 = vld [vmem:[#allocation8 + $0x440] sm:$0xff]
    %v1252 = vld [vmem:[#allocation8 + $0x448] sm:$0xff]
    %v1253 = vld [vmem:[#allocation8 + $0x450] sm:$0xff]
    %v1254 = vld [vmem:[#allocation8 + $0x458] sm:$0xff]
    %v1255 = vld [vmem:[#allocation8 + $0x460] sm:$0xff]
    %v1256 = vld [vmem:[#allocation8 + $0x468] sm:$0xff]
    %v1257 = vld [vmem:[#allocation8 + $0x470] sm:$0xff]
    %v1258 = vld [vmem:[#allocation8 + $0x478] sm:$0xff]
    %v1259 = vld [vmem:[#allocation8 + $0x480] sm:$0xff]
    %v1260 = vld [vmem:[#allocation8 + $0x488] sm:$0xff]
    %v1261 = vld [vmem:[#allocation8 + $0x490] sm:$0xff]
    %v1262 = vld [vmem:[#allocation8 + $0x498] sm:$0xff]
    %v1263 = vld [vmem:[#allocation8 + $0x4a0] sm:$0xff]
    %v1264 = vld [vmem:[#allocation8 + $0x4a8] sm:$0xff]
    %v1265 = vld [vmem:[#allocation8 + $0x4b0] sm:$0xff]
    %v1266 = vld [vmem:[#allocation8 + $0x4b8] sm:$0xff]
    %v1267 = vld [vmem:[#allocation8 + $0x4c0] sm:$0xff]
    %v1268 = vld [vmem:[#allocation8 + $0x4c8] sm:$0xff]
    %v1269 = vld [vmem:[#allocation8 + $0x4d0] sm:$0xff]
    %v1270 = vld [vmem:[#allocation8 + $0x4d8] sm:$0xff]
    %v1271 = vld [vmem:[#allocation8 + $0x4e0] sm:$0xff]
    %v1272 = vld [vmem:[#allocation8 + $0x4e8] sm:$0xff]
    %v1273 = vld [vmem:[#allocation8 + $0x4f0] sm:$0xff]
    %v1274 = vld [vmem:[#allocation8 + $0x4f8] sm:$0xff]
    %v1275 = vld [vmem:[#allocation8 + $0x500] sm:$0xff]
    %v1276 = vld [vmem:[#allocation8 + $0x508] sm:$0xff]
    %v1277 = vld [vmem:[#allocation8 + $0x510] sm:$0xff]
    %v1278 = vld [vmem:[#allocation8 + $0x518] sm:$0xff]
    %v1279 = vld [vmem:[#allocation8 + $0x520] sm:$0xff]
    %v1280 = vld [vmem:[#allocation8 + $0x528] sm:$0xff]
    %v1281 = vld [vmem:[#allocation8 + $0x530] sm:$0xff]
    %v1282 = vld [vmem:[#allocation8 + $0x538] sm:$0xff]
    %v1283 = vld [vmem:[#allocation8 + $0x540] sm:$0xff]
    %v1284 = vld [vmem:[#allocation8 + $0x548] sm:$0xff]
    %v1285 = vld [vmem:[#allocation8 + $0x550] sm:$0xff]
    %v1286 = vld [vmem:[#allocation8 + $0x558] sm:$0xff]
    %v1287 = vld [vmem:[#allocation8 + $0x560] sm:$0xff]
    %v1288 = vld [vmem:[#allocation8 + $0x568] sm:$0xff]
    %v1289 = vld [vmem:[#allocation8 + $0x570] sm:$0xff]
    %v1290 = vld [vmem:[#allocation8 + $0x578] sm:$0xff]
    %v1291 = vld [vmem:[#allocation8 + $0x580] sm:$0xff]
    %v1292 = vld [vmem:[#allocation8 + $0x588] sm:$0xff]
    %v1293 = vld [vmem:[#allocation8 + $0x590] sm:$0xff]
    %v1294 = vld [vmem:[#allocation8 + $0x598] sm:$0xff]
    %v1295 = vld [vmem:[#allocation8 + $0x5a0] sm:$0xff]
    %v1296 = vld [vmem:[#allocation8 + $0x5a8] sm:$0xff]
    %v1297 = vld [vmem:[#allocation8 + $0x5b0] sm:$0xff]
    %v1298 = vld [vmem:[#allocation8 + $0x5b8] sm:$0xff]
    %v1299 = vld [vmem:[#allocation8 + $0x5c0] sm:$0xff]
    %v1300 = vld [vmem:[#allocation8 + $0x5c8] sm:$0xff]
    %v1301 = vld [vmem:[#allocation8 + $0x5d0] sm:$0xff]
    %v1302 = vld [vmem:[#allocation8 + $0x5d8] sm:$0xff]
    %v1303 = vld [vmem:[#allocation8 + $0x5e0] sm:$0xff]
    %v1304 = vld [vmem:[#allocation8 + $0x5e8] sm:$0xff]
    %v1305 = vld [vmem:[#allocation8 + $0x5f0] sm:$0xff]
    %v1306 = vld [vmem:[#allocation8 + $0x5f8] sm:$0xff]
    %v1307 = vld [vmem:[#allocation8 + $0x600] sm:$0xff]
    %v1308 = vld [vmem:[#allocation8 + $0x608] sm:$0xff]
    %v1309 = vld [vmem:[#allocation8 + $0x610] sm:$0xff]
    %v1310 = vld [vmem:[#allocation8 + $0x618] sm:$0xff]
    %v1311 = vld [vmem:[#allocation8 + $0x620] sm:$0xff]
    %v1312 = vld [vmem:[#allocation8 + $0x628] sm:$0xff]
    %v1313 = vld [vmem:[#allocation8 + $0x630] sm:$0xff]
    %v1314 = vld [vmem:[#allocation8 + $0x638] sm:$0xff]
    %v1315 = vld [vmem:[#allocation8 + $0x640] sm:$0xff]
    %v1316 = vld [vmem:[#allocation8 + $0x648] sm:$0xff]
    %v1317 = vld [vmem:[#allocation8 + $0x650] sm:$0xff]
    %v1318 = vld [vmem:[#allocation8 + $0x658] sm:$0xff]
    %v1319 = vld [vmem:[#allocation8 + $0x660] sm:$0xff]
    %v1320 = vld [vmem:[#allocation8 + $0x668] sm:$0xff]
    %v1321 = vld [vmem:[#allocation8 + $0x670] sm:$0xff]
    %v1322 = vld [vmem:[#allocation8 + $0x678] sm:$0xff]
    %v1323 = vld [vmem:[#allocation8 + $0x680] sm:$0xff]
    %v1324 = vld [vmem:[#allocation8 + $0x688] sm:$0xff]
    %v1325 = vld [vmem:[#allocation8 + $0x690] sm:$0xff]
    %v1326 = vld [vmem:[#allocation8 + $0x698] sm:$0xff]
    %v1327 = vld [vmem:[#allocation8 + $0x6a0] sm:$0xff]
    %v1328 = vld [vmem:[#allocation8 + $0x6a8] sm:$0xff]
    %v1329 = vld [vmem:[#allocation8 + $0x6b0] sm:$0xff]
    %v1330 = vld [vmem:[#allocation8 + $0x6b8] sm:$0xff]
    %v1331 = vld [vmem:[#allocation8 + $0x6c0] sm:$0xff]
    %v1332 = vld [vmem:[#allocation8 + $0x6c8] sm:$0xff]
    %v1333 = vld [vmem:[#allocation8 + $0x6d0] sm:$0xff]
    %v1334 = vld [vmem:[#allocation8 + $0x6d8] sm:$0xff]
    %v1335 = vld [vmem:[#allocation8 + $0x6e0] sm:$0xff]
    %v1336 = vld [vmem:[#allocation8 + $0x6e8] sm:$0xff]
    %v1337 = vld [vmem:[#allocation8 + $0x6f0] sm:$0xff]
    %v1338 = vld [vmem:[#allocation8 + $0x6f8] sm:$0xff]
    %v1339 = vld [vmem:[#allocation8 + $0x700] sm:$0xff]
    %v1340 = vld [vmem:[#allocation8 + $0x708] sm:$0xff]
    %v1341 = vld [vmem:[#allocation8 + $0x710] sm:$0xff]
    %v1342 = vld [vmem:[#allocation8 + $0x718] sm:$0xff]
    %v1343 = vld [vmem:[#allocation8 + $0x720] sm:$0xff]
    %v1344 = vld [vmem:[#allocation8 + $0x728] sm:$0xff]
    %v1345 = vld [vmem:[#allocation8 + $0x730] sm:$0xff]
    %v1346 = vld [vmem:[#allocation8 + $0x738] sm:$0xff]
    %v1347 = vld [vmem:[#allocation8 + $0x740] sm:$0xff]
    %v1348 = vld [vmem:[#allocation8 + $0x748] sm:$0xff]
    %v1349 = vld [vmem:[#allocation8 + $0x750] sm:$0xff]
    %v1350 = vld [vmem:[#allocation8 + $0x758] sm:$0xff]
    %v1351 = vld [vmem:[#allocation8 + $0x760] sm:$0xff]
    %v1352 = vld [vmem:[#allocation8 + $0x768] sm:$0xff]
    %v1353 = vld [vmem:[#allocation8 + $0x770] sm:$0xff]
    %v1354 = vld [vmem:[#allocation8 + $0x778] sm:$0xff]
    %v1355 = vld [vmem:[#allocation8 + $0x780] sm:$0xff]
    %v1356 = vld [vmem:[#allocation8 + $0x788] sm:$0xff]
    %v1357 = vld [vmem:[#allocation8 + $0x790] sm:$0xff]
    %v1358 = vld [vmem:[#allocation8 + $0x798] sm:$0xff]
    %v1359 = vld [vmem:[#allocation8 + $0x7a0] sm:$0xff]
    %v1360 = vld [vmem:[#allocation8 + $0x7a8] sm:$0xff]
    %v1361 = vld [vmem:[#allocation8 + $0x7b0] sm:$0xff]
    %v1362 = vld [vmem:[#allocation8 + $0x7b8] sm:$0xff]
    %v1363 = vld [vmem:[#allocation8 + $0x7c0] sm:$0xff]
    %v1364 = vld [vmem:[#allocation8 + $0x7c8] sm:$0xff]
    %v1365 = vld [vmem:[#allocation8 + $0x7d0] sm:$0xff]
    %v1366 = vld [vmem:[#allocation8 + $0x7d8] sm:$0xff]
    %v1367 = vld [vmem:[#allocation8 + $0x7e0] sm:$0xff]
    %v1368 = vld [vmem:[#allocation8 + $0x7e8] sm:$0xff]
    %v1369 = vld [vmem:[#allocation8 + $0x7f0] sm:$0xff]
    %v1370 = vld [vmem:[#allocation8 + $0x7f8] sm:$0xff]
    %v1371 = vld [vmem:[#allocation8 + $0x800] sm:$0xff]
    %v1372 = vld [vmem:[#allocation8 + $0x808] sm:$0xff]
    %v1373 = vld [vmem:[#allocation8 + $0x810] sm:$0xff]
    %v1374 = vld [vmem:[#allocation8 + $0x818] sm:$0xff]
    %v1375 = vld [vmem:[#allocation8 + $0x820] sm:$0xff]
    %v1376 = vld [vmem:[#allocation8 + $0x828] sm:$0xff]
    %v1377 = vld [vmem:[#allocation8 + $0x830] sm:$0xff]
    %v1378 = vld [vmem:[#allocation8 + $0x838] sm:$0xff]
    %v1379 = vld [vmem:[#allocation8 + $0x840] sm:$0xff]
    %v1380 = vld [vmem:[#allocation8 + $0x848] sm:$0xff]
    %v1381 = vld [vmem:[#allocation8 + $0x850] sm:$0xff]
    %v1382 = vld [vmem:[#allocation8 + $0x858] sm:$0xff]
    %v1383 = vld [vmem:[#allocation8 + $0x860] sm:$0xff]
    %v1384 = vld [vmem:[#allocation8 + $0x868] sm:$0xff]
    %v1385 = vld [vmem:[#allocation8 + $0x870] sm:$0xff]
    %v1386 = vld [vmem:[#allocation8 + $0x878] sm:$0xff]
    %v1387 = vld [vmem:[#allocation8 + $0x880] sm:$0xff]
    %v1388 = vld [vmem:[#allocation8 + $0x888] sm:$0xff]
    %v1389 = vld [vmem:[#allocation8 + $0x890] sm:$0xff]
    %v1390 = vld [vmem:[#allocation8 + $0x898] sm:$0xff]
    %v1391 = vld [vmem:[#allocation8 + $0x8a0] sm:$0xff]
    %v1392 = vld [vmem:[#allocation8 + $0x8a8] sm:$0xff]
    %v1393 = vld [vmem:[#allocation8 + $0x8b0] sm:$0xff]
    %v1394 = vld [vmem:[#allocation8 + $0x8b8] sm:$0xff]
    %v1395 = vld [vmem:[#allocation8 + $0x8c0] sm:$0xff]
    %v1396 = vld [vmem:[#allocation8 + $0x8c8] sm:$0xff]
    %v1397 = vld [vmem:[#allocation8 + $0x8d0] sm:$0xff]
    %v1398 = vld [vmem:[#allocation8 + $0x8d8] sm:$0xff]
    %v1399 = vld [vmem:[#allocation8 + $0x8e0] sm:$0xff]
    %v1400 = vld [vmem:[#allocation8 + $0x8e8] sm:$0xff]
    %v1401 = vld [vmem:[#allocation8 + $0x8f0] sm:$0xff]
    %v1402 = vld [vmem:[#allocation8 + $0x8f8] sm:$0xff]
    %v1403 = vld [vmem:[#allocation8 + $0x900] sm:$0xff]
    %v1404 = vld [vmem:[#allocation8 + $0x908] sm:$0xff]
    %v1405 = vld [vmem:[#allocation8 + $0x910] sm:$0xff]
    %v1406 = vld [vmem:[#allocation8 + $0x918] sm:$0xff]
    %v1407 = vld [vmem:[#allocation8 + $0x920] sm:$0xff]
    %v1408 = vld [vmem:[#allocation8 + $0x928] sm:$0xff]
    %v1409 = vld [vmem:[#allocation8 + $0x930] sm:$0xff]
    %v1410 = vld [vmem:[#allocation8 + $0x938] sm:$0xff]
    %v1411 = vld [vmem:[#allocation8 + $0x940] sm:$0xff]
    %v1412 = vld [vmem:[#allocation8 + $0x948] sm:$0xff]
    %v1413 = vld [vmem:[#allocation8 + $0x950] sm:$0xff]
    %v1414 = vld [vmem:[#allocation8 + $0x958] sm:$0xff]
    %v1415 = vld [vmem:[#allocation8 + $0x960] sm:$0xff]
    %v1416 = vld [vmem:[#allocation8 + $0x968] sm:$0xff]
    %v1417 = vld [vmem:[#allocation8 + $0x970] sm:$0xff]
    %v1418 = vld [vmem:[#allocation8 + $0x978] sm:$0xff]
    %v1419 = vld [vmem:[#allocation8 + $0x980] sm:$0xff]
    %v1420 = vld [vmem:[#allocation8 + $0x988] sm:$0xff]
    %v1421 = vld [vmem:[#allocation8 + $0x990] sm:$0xff]
    %v1422 = vld [vmem:[#allocation8 + $0x998] sm:$0xff]
    %v1423 = vld [vmem:[#allocation8 + $0x9a0] sm:$0xff]
    %v1424 = vld [vmem:[#allocation8 + $0x9a8] sm:$0xff]
    %v1425 = vld [vmem:[#allocation8 + $0x9b0] sm:$0xff]
    %v1426 = vld [vmem:[#allocation8 + $0x9b8] sm:$0xff]
    %v1427 = vld [vmem:[#allocation8 + $0x9c0] sm:$0xff]
    %v1428 = vld [vmem:[#allocation8 + $0x9c8] sm:$0xff]
    %v1429 = vld [vmem:[#allocation8 + $0x9d0] sm:$0xff]
    %v1430 = vld [vmem:[#allocation8 + $0x9d8] sm:$0xff]
    %v1431 = vld [vmem:[#allocation8 + $0x9e0] sm:$0xff]
    %v1432 = vld [vmem:[#allocation8 + $0x9e8] sm:$0xff]
    %v1433 = vld [vmem:[#allocation8 + $0x9f0] sm:$0xff]
    %v1434 = vld [vmem:[#allocation8 + $0x9f8] sm:$0xff]
    %v1435 = vld [vmem:[#allocation8 + $0xa00] sm:$0xff]
    %v1436 = vld [vmem:[#allocation8 + $0xa08] sm:$0xff]
    %v1437 = vld [vmem:[#allocation8 + $0xa10] sm:$0xff]
    %v1438 = vld [vmem:[#allocation8 + $0xa18] sm:$0xff]
    %v1439 = vld [vmem:[#allocation8 + $0xa20] sm:$0xff]
    %v1440 = vld [vmem:[#allocation8 + $0xa28] sm:$0xff]
    %v1441 = vld [vmem:[#allocation8 + $0xa30] sm:$0xff]
    %v1442 = vld [vmem:[#allocation8 + $0xa38] sm:$0xff]
    %v1443 = vld [vmem:[#allocation8 + $0xa40] sm:$0xff]
    %v1444 = vld [vmem:[#allocation8 + $0xa48] sm:$0xff]
    %v1445 = vld [vmem:[#allocation8 + $0xa50] sm:$0xff]
    %v1446 = vld [vmem:[#allocation8 + $0xa58] sm:$0xff]
    %v1447 = vld [vmem:[#allocation8 + $0xa60] sm:$0xff]
    %v1448 = vld [vmem:[#allocation8 + $0xa68] sm:$0xff]
    %v1449 = vld [vmem:[#allocation8 + $0xa70] sm:$0xff]
    %v1450 = vld [vmem:[#allocation8 + $0xa78] sm:$0xff]
    %v1451 = vld [vmem:[#allocation8 + $0xa80] sm:$0xff]
    %v1452 = vld [vmem:[#allocation8 + $0xa88] sm:$0xff]
    %v1453 = vld [vmem:[#allocation8 + $0xa90] sm:$0xff]
    %v1454 = vld [vmem:[#allocation8 + $0xa98] sm:$0xff]
    %v1455 = vld [vmem:[#allocation8 + $0xaa0] sm:$0xff]
    %v1456 = vld [vmem:[#allocation8 + $0xaa8] sm:$0xff]
    %v1457 = vld [vmem:[#allocation8 + $0xab0] sm:$0xff]
    %v1458 = vld [vmem:[#allocation8 + $0xab8] sm:$0xff]
    %v1459 = vld [vmem:[#allocation8 + $0xac0] sm:$0xff]
    %v1460 = vld [vmem:[#allocation8 + $0xac8] sm:$0xff]
    %v1461 = vld [vmem:[#allocation8 + $0xad0] sm:$0xff]
    %v1462 = vld [vmem:[#allocation8 + $0xad8] sm:$0xff]
    %v1463 = vld [vmem:[#allocation8 + $0xae0] sm:$0xff]
    %v1464 = vld [vmem:[#allocation8 + $0xae8] sm:$0xff]
    %v1465 = vld [vmem:[#allocation8 + $0xaf0] sm:$0xff]
    %v1466 = vld [vmem:[#allocation8 + $0xaf8] sm:$0xff]
    %v1467 = vld [vmem:[#allocation8 + $0xb00] sm:$0xff]
    %v1468 = vld [vmem:[#allocation8 + $0xb08] sm:$0xff]
    %v1469 = vld [vmem:[#allocation8 + $0xb10] sm:$0xff]
    %v1470 = vld [vmem:[#allocation8 + $0xb18] sm:$0xff]
    %v1471 = vld [vmem:[#allocation8 + $0xb20] sm:$0xff]
    %v1472 = vld [vmem:[#allocation8 + $0xb28] sm:$0xff]
    %v1473 = vld [vmem:[#allocation8 + $0xb30] sm:$0xff]
    %v1474 = vld [vmem:[#allocation8 + $0xb38] sm:$0xff]
    %v1475 = vld [vmem:[#allocation8 + $0xb40] sm:$0xff]
    %v1476 = vld [vmem:[#allocation8 + $0xb48] sm:$0xff]
    %v1477 = vld [vmem:[#allocation8 + $0xb50] sm:$0xff]
    %v1478 = vld [vmem:[#allocation8 + $0xb58] sm:$0xff]
    %v1479 = vld [vmem:[#allocation8 + $0xb60] sm:$0xff]
    %v1480 = vld [vmem:[#allocation8 + $0xb68] sm:$0xff]
    %v1481 = vld [vmem:[#allocation8 + $0xb70] sm:$0xff]
    %v1482 = vld [vmem:[#allocation8 + $0xb78] sm:$0xff]
    %v1483 = vld [vmem:[#allocation8 + $0xb80] sm:$0xff]
    %v1484 = vld [vmem:[#allocation8 + $0xb88] sm:$0xff]
    %v1485 = vld [vmem:[#allocation8 + $0xb90] sm:$0xff]
    %v1486 = vld [vmem:[#allocation8 + $0xb98] sm:$0xff]
    %v1487 = vld [vmem:[#allocation8 + $0xba0] sm:$0xff]
    %v1488 = vld [vmem:[#allocation8 + $0xba8] sm:$0xff]
    %v1489 = vld [vmem:[#allocation8 + $0xbb0] sm:$0xff]
    %v1490 = vld [vmem:[#allocation8 + $0xbb8] sm:$0xff]
    %v1491 = vld [vmem:[#allocation8 + $0xbc0] sm:$0xff]
    %v1492 = vld [vmem:[#allocation8 + $0xbc8] sm:$0xff]
    %v1493 = vld [vmem:[#allocation8 + $0xbd0] sm:$0xff]
    %v1494 = vld [vmem:[#allocation8 + $0xbd8] sm:$0xff]
    %v1495 = vld [vmem:[#allocation8 + $0xbe0] sm:$0xff]
    %v1496 = vld [vmem:[#allocation8 + $0xbe8] sm:$0xff]
    %v1497 = vld [vmem:[#allocation8 + $0xbf0] sm:$0xff]
    %v1498 = vld [vmem:[#allocation8 + $0xbf8] sm:$0xff]
    %v1499 = vld [vmem:[#allocation8 + $0xc00] sm:$0xff]
    %v1500 = vld [vmem:[#allocation8 + $0xc08] sm:$0xff]
    %v1501 = vld [vmem:[#allocation8 + $0xc10] sm:$0xff]
    %v1502 = vld [vmem:[#allocation8 + $0xc18] sm:$0xff]
    %v1503 = vld [vmem:[#allocation8 + $0xc20] sm:$0xff]
    %v1504 = vld [vmem:[#allocation8 + $0xc28] sm:$0xff]
    %v1505 = vld [vmem:[#allocation8 + $0xc30] sm:$0xff]
    %v1506 = vld [vmem:[#allocation8 + $0xc38] sm:$0xff]
    %v1507 = vld [vmem:[#allocation8 + $0xc40] sm:$0xff]
    %v1508 = vld [vmem:[#allocation8 + $0xc48] sm:$0xff]
    %v1509 = vld [vmem:[#allocation8 + $0xc50] sm:$0xff]
    %v1510 = vld [vmem:[#allocation8 + $0xc58] sm:$0xff]
    %v1511 = vld [vmem:[#allocation8 + $0xc60] sm:$0xff]
    %v1512 = vld [vmem:[#allocation8 + $0xc68] sm:$0xff]
    %v1513 = vld [vmem:[#allocation8 + $0xc70] sm:$0xff]
    %v1514 = vld [vmem:[#allocation8 + $0xc78] sm:$0xff]
    %v1515 = vld [vmem:[#allocation8 + $0xc80] sm:$0xff]
    %v1516 = vld [vmem:[#allocation8 + $0xc88] sm:$0xff]
    %v1517 = vld [vmem:[#allocation8 + $0xc90] sm:$0xff]
    %v1518 = vld [vmem:[#allocation8 + $0xc98] sm:$0xff]
    %v1519 = vld [vmem:[#allocation8 + $0xca0] sm:$0xff]
    %v1520 = vld [vmem:[#allocation8 + $0xca8] sm:$0xff]
    %v1521 = vld [vmem:[#allocation8 + $0xcb0] sm:$0xff]
    %v1522 = vld [vmem:[#allocation8 + $0xcb8] sm:$0xff]
    %v1523 = vld [vmem:[#allocation8 + $0xcc0] sm:$0xff]
    %v1524 = vld [vmem:[#allocation8 + $0xcc8] sm:$0xff]
    %v1525 = vld [vmem:[#allocation8 + $0xcd0] sm:$0xff]
    %v1526 = vld [vmem:[#allocation8 + $0xcd8] sm:$0xff]
    %v1527 = vld [vmem:[#allocation8 + $0xce0] sm:$0xff]
    %v1528 = vld [vmem:[#allocation8 + $0xce8] sm:$0xff]
    %v1529 = vld [vmem:[#allocation8 + $0xcf0] sm:$0xff]
    %v1530 = vld [vmem:[#allocation8 + $0xcf8] sm:$0xff]
    %v1531 = vld [vmem:[#allocation8 + $0xd00] sm:$0xff]
    %v1532 = vld [vmem:[#allocation8 + $0xd08] sm:$0xff]
    %v1533 = vld [vmem:[#allocation8 + $0xd10] sm:$0xff]
    %v1534 = vld [vmem:[#allocation8 + $0xd18] sm:$0xff]
    %v1535 = vld [vmem:[#allocation8 + $0xd20] sm:$0xff]
    %v1536 = vld [vmem:[#allocation8 + $0xd28] sm:$0xff]
    %v1537 = vld [vmem:[#allocation8 + $0xd30] sm:$0xff]
    %v1538 = vld [vmem:[#allocation8 + $0xd38] sm:$0xff]
    %v1539 = vld [vmem:[#allocation8 + $0xd40] sm:$0xff]
    %v1540 = vld [vmem:[#allocation8 + $0xd48] sm:$0xff]
    %v1541 = vld [vmem:[#allocation8 + $0xd50] sm:$0xff]
    %v1542 = vld [vmem:[#allocation8 + $0xd58] sm:$0xff]
    %v1543 = vld [vmem:[#allocation8 + $0xd60] sm:$0xff]
    %v1544 = vld [vmem:[#allocation8 + $0xd68] sm:$0xff]
    %v1545 = vld [vmem:[#allocation8 + $0xd70] sm:$0xff]
    %v1546 = vld [vmem:[#allocation8 + $0xd78] sm:$0xff]
    %v1547 = vld [vmem:[#allocation8 + $0xd80] sm:$0xff]
    %v1548 = vld [vmem:[#allocation8 + $0xd88] sm:$0xff]
    %v1549 = vld [vmem:[#allocation8 + $0xd90] sm:$0xff]
    %v1550 = vld [vmem:[#allocation8 + $0xd98] sm:$0xff]
    %v1551 = vld [vmem:[#allocation8 + $0xda0] sm:$0xff]
    %v1552 = vld [vmem:[#allocation8 + $0xda8] sm:$0xff]
    %v1553 = vld [vmem:[#allocation8 + $0xdb0] sm:$0xff]
    %v1554 = vld [vmem:[#allocation8 + $0xdb8] sm:$0xff]
    %v1555 = vld [vmem:[#allocation8 + $0xdc0] sm:$0xff]
    %v1556 = vld [vmem:[#allocation8 + $0xdc8] sm:$0xff]
    %v1557 = vld [vmem:[#allocation8 + $0xdd0] sm:$0xff]
    %v1558 = vld [vmem:[#allocation8 + $0xdd8] sm:$0xff]
    %v1559 = vld [vmem:[#allocation8 + $0xde0] sm:$0xff]
    %v1560 = vld [vmem:[#allocation8 + $0xde8] sm:$0xff]
    %v1561 = vld [vmem:[#allocation8 + $0xdf0] sm:$0xff]
    %v1562 = vld [vmem:[#allocation8 + $0xdf8] sm:$0xff]
    %v1563 = vld [vmem:[#allocation8 + $0xe00] sm:$0xff]
    %v1564 = vld [vmem:[#allocation8 + $0xe08] sm:$0xff]
    %v1565 = vld [vmem:[#allocation8 + $0xe10] sm:$0xff]
    %v1566 = vld [vmem:[#allocation8 + $0xe18] sm:$0xff]
    %v1567 = vld [vmem:[#allocation8 + $0xe20] sm:$0xff]
    %v1568 = vld [vmem:[#allocation8 + $0xe28] sm:$0xff]
    %v1569 = vld [vmem:[#allocation8 + $0xe30] sm:$0xff]
    %v1570 = vld [vmem:[#allocation8 + $0xe38] sm:$0xff]
    %v1571 = vld [vmem:[#allocation8 + $0xe40] sm:$0xff]
    %v1572 = vld [vmem:[#allocation8 + $0xe48] sm:$0xff]
    %v1573 = vld [vmem:[#allocation8 + $0xe50] sm:$0xff]
    %v1574 = vld [vmem:[#allocation8 + $0xe58] sm:$0xff]
    %v1575 = vld [vmem:[#allocation8 + $0xe60] sm:$0xff]
    %v1576 = vld [vmem:[#allocation8 + $0xe68] sm:$0xff]
    %v1577 = vld [vmem:[#allocation8 + $0xe70] sm:$0xff]
    %v1578 = vld [vmem:[#allocation8 + $0xe78] sm:$0xff]
    %v1579 = vld [vmem:[#allocation8 + $0xe80] sm:$0xff]
    %v1580 = vld [vmem:[#allocation8 + $0xe88] sm:$0xff]
    %v1581 = vld [vmem:[#allocation8 + $0xe90] sm:$0xff]
    %v1582 = vld [vmem:[#allocation8 + $0xe98] sm:$0xff]
    %v1583 = vld [vmem:[#allocation8 + $0xea0] sm:$0xff]
    %v1584 = vld [vmem:[#allocation8 + $0xea8] sm:$0xff]
    %v1585 = vld [vmem:[#allocation8 + $0xeb0] sm:$0xff]
    %v1586 = vld [vmem:[#allocation8 + $0xeb8] sm:$0xff]
    %v1587 = vld [vmem:[#allocation8 + $0xec0] sm:$0xff]
    %v1588 = vld [vmem:[#allocation8 + $0xec8] sm:$0xff]
    %v1589 = vld [vmem:[#allocation8 + $0xed0] sm:$0xff]
    %v1590 = vld [vmem:[#allocation8 + $0xed8] sm:$0xff]
    %v1591 = vld [vmem:[#allocation8 + $0xee0] sm:$0xff]
    %v1592 = vld [vmem:[#allocation8 + $0xee8] sm:$0xff]
    %v1593 = vld [vmem:[#allocation8 + $0xef0] sm:$0xff]
    %v1594 = vld [vmem:[#allocation8 + $0xef8] sm:$0xff]
    %v1595 = vld [vmem:[#allocation8 + $0xf00] sm:$0xff]
    %v1596 = vld [vmem:[#allocation8 + $0xf08] sm:$0xff]
    %v1597 = vld [vmem:[#allocation8 + $0xf10] sm:$0xff]
    %v1598 = vld [vmem:[#allocation8 + $0xf18] sm:$0xff]
    %v1599 = vld [vmem:[#allocation8 + $0xf20] sm:$0xff]
    %v1600 = vld [vmem:[#allocation8 + $0xf28] sm:$0xff]
    %v1601 = vld [vmem:[#allocation8 + $0xf30] sm:$0xff]
    %v1602 = vld [vmem:[#allocation8 + $0xf38] sm:$0xff]
    %v1603 = vld [vmem:[#allocation8 + $0xf40] sm:$0xff]
    %v1604 = vld [vmem:[#allocation8 + $0xf48] sm:$0xff]
    %v1605 = vld [vmem:[#allocation8 + $0xf50] sm:$0xff]
    %v1606 = vld [vmem:[#allocation8 + $0xf58] sm:$0xff]
    %v1607 = vld [vmem:[#allocation8 + $0xf60] sm:$0xff]
    %v1608 = vld [vmem:[#allocation8 + $0xf68] sm:$0xff]
    %v1609 = vld [vmem:[#allocation8 + $0xf70] sm:$0xff]
    %v1610 = vld [vmem:[#allocation8 + $0xf78] sm:$0xff]
    %v1611 = vld [vmem:[#allocation8 + $0xf80] sm:$0xff]
    %v1612 = vld [vmem:[#allocation8 + $0xf88] sm:$0xff]
    %v1613 = vld [vmem:[#allocation8 + $0xf90] sm:$0xff]
    %v1614 = vld [vmem:[#allocation8 + $0xf98] sm:$0xff]
    %v1615 = vld [vmem:[#allocation8 + $0xfa0] sm:$0xff]
    %v1616 = vld [vmem:[#allocation8 + $0xfa8] sm:$0xff]
    %v1617 = vld [vmem:[#allocation8 + $0xfb0] sm:$0xff]
    %v1618 = vld [vmem:[#allocation8 + $0xfb8] sm:$0xff]
    %v1619 = vld [vmem:[#allocation8 + $0xfc0] sm:$0xff]
    %v1620 = vld [vmem:[#allocation8 + $0xfc8] sm:$0xff]
    %v1621 = vld [vmem:[#allocation8 + $0xfd0] sm:$0xff]
    %v1622 = vld [vmem:[#allocation8 + $0xfd8] sm:$0xff]
    %v1623 = vld [vmem:[#allocation8 + $0xfe0] sm:$0xff]
    %v1624 = vld [vmem:[#allocation8 + $0xfe8] sm:$0xff]
    %v1625 = vld [vmem:[#allocation8 + $0xff0] sm:$0xff]
    %v1626 = vld [vmem:[#allocation8 + $0xff8] sm:$0xff]
    %v1627 = vld [vmem:[#allocation10] sm:$0xff]
    %v1629 = vlaneseq
    %v1630 = vshrl.u32 %v1629, 7
    %v1631 = vsub.s32 0, %v1630
    %v1632 = vrot.slane %v1627, %v1631
    %v1633 = vlaneseq
    %v1634 = vshrl.u32 %v1633, 7
    %v1635 = vsub.s32 1, %v1634
    %v1636 = vrot.slane %v1627, %v1635
    %v1637 = vlaneseq
    %v1638 = vshrl.u32 %v1637, 7
    %v1639 = vsub.s32 2, %v1638
    %v1640 = vrot.slane %v1627, %v1639
    %v1641 = vlaneseq
    %v1642 = vshrl.u32 %v1641, 7
    %v1643 = vsub.s32 3, %v1642
    %v1644 = vrot.slane %v1627, %v1643
    %v1645 = vlaneseq
    %v1646 = vshrl.u32 %v1645, 7
    %v1647 = vsub.s32 4, %v1646
    %v1648 = vrot.slane %v1627, %v1647
    %v1649 = vlaneseq
    %v1650 = vshrl.u32 %v1649, 7
    %v1651 = vsub.s32 5, %v1650
    %v1652 = vrot.slane %v1627, %v1651
    %v1653 = vlaneseq
    %v1654 = vshrl.u32 %v1653, 7
    %v1655 = vsub.s32 6, %v1654
    %v1656 = vrot.slane %v1627, %v1655
    %v1657 = vlaneseq
    %v1658 = vshrl.u32 %v1657, 7
    %v1659 = vsub.s32 7, %v1658
    %v1660 = vrot.slane %v1627, %v1659
    %v2181 = vunpack.c.l.b16 %v1115
    %v2182 = vunpack.c.h.b16 %v1115
    %v2183 = vunpack.c.l.b16 %v1116
    %v2184 = vunpack.c.h.b16 %v1116
    %v2185 = vunpack.c.l.b16 %v1117
    %v2186 = vunpack.c.h.b16 %v1117
    %v2187 = vunpack.c.l.b16 %v1118
    %v2188 = vunpack.c.h.b16 %v1118
    %v2189 = vunpack.c.l.b16 %v1119
    %v2190 = vunpack.c.h.b16 %v1119
    %v2191 = vunpack.c.l.b16 %v1120
    %v2192 = vunpack.c.h.b16 %v1120
    %v2193 = vunpack.c.l.b16 %v1121
    %v2194 = vunpack.c.h.b16 %v1121
    %v2195 = vunpack.c.l.b16 %v1122
    %v2196 = vunpack.c.h.b16 %v1122
    %v2197 = vunpack.c.l.b16 %v1123
    %v2198 = vunpack.c.h.b16 %v1123
    %v2199 = vunpack.c.l.b16 %v1124
    %v2200 = vunpack.c.h.b16 %v1124
    %v2201 = vunpack.c.l.b16 %v1125
    %v2202 = vunpack.c.h.b16 %v1125
    %v2203 = vunpack.c.l.b16 %v1126
    %v2204 = vunpack.c.h.b16 %v1126
    %v2205 = vunpack.c.l.b16 %v1127
    %v2206 = vunpack.c.h.b16 %v1127
    %v2207 = vunpack.c.l.b16 %v1128
    %v2208 = vunpack.c.h.b16 %v1128
    %v2209 = vunpack.c.l.b16 %v1129
    %v2210 = vunpack.c.h.b16 %v1129
    %v2211 = vunpack.c.l.b16 %v1130
    %v2212 = vunpack.c.h.b16 %v1130
    %v2213 = vunpack.c.l.b16 %v1131
    %v2214 = vunpack.c.h.b16 %v1131
    %v2215 = vunpack.c.l.b16 %v1132
    %v2216 = vunpack.c.h.b16 %v1132
    %v2217 = vunpack.c.l.b16 %v1133
    %v2218 = vunpack.c.h.b16 %v1133
    %v2219 = vunpack.c.l.b16 %v1134
    %v2220 = vunpack.c.h.b16 %v1134
    %v2221 = vunpack.c.l.b16 %v1135
    %v2222 = vunpack.c.h.b16 %v1135
    %v2223 = vunpack.c.l.b16 %v1136
    %v2224 = vunpack.c.h.b16 %v1136
    %v2225 = vunpack.c.l.b16 %v1137
    %v2226 = vunpack.c.h.b16 %v1137
    %v2227 = vunpack.c.l.b16 %v1138
    %v2228 = vunpack.c.h.b16 %v1138
    %v2229 = vunpack.c.l.b16 %v1139
    %v2230 = vunpack.c.h.b16 %v1139
    %v2231 = vunpack.c.l.b16 %v1140
    %v2232 = vunpack.c.h.b16 %v1140
    %v2233 = vunpack.c.l.b16 %v1141
    %v2234 = vunpack.c.h.b16 %v1141
    %v2235 = vunpack.c.l.b16 %v1142
    %v2236 = vunpack.c.h.b16 %v1142
    %v2237 = vunpack.c.l.b16 %v1143
    %v2238 = vunpack.c.h.b16 %v1143
    %v2239 = vunpack.c.l.b16 %v1144
    %v2240 = vunpack.c.h.b16 %v1144
    %v2241 = vunpack.c.l.b16 %v1145
    %v2242 = vunpack.c.h.b16 %v1145
    %v2243 = vunpack.c.l.b16 %v1146
    %v2244 = vunpack.c.h.b16 %v1146
    %v2245 = vunpack.c.l.b16 %v1147
    %v2246 = vunpack.c.h.b16 %v1147
    %v2247 = vunpack.c.l.b16 %v1148
    %v2248 = vunpack.c.h.b16 %v1148
    %v2249 = vunpack.c.l.b16 %v1149
    %v2250 = vunpack.c.h.b16 %v1149
    %v2251 = vunpack.c.l.b16 %v1150
    %v2252 = vunpack.c.h.b16 %v1150
    %v2253 = vunpack.c.l.b16 %v1151
    %v2254 = vunpack.c.h.b16 %v1151
    %v2255 = vunpack.c.l.b16 %v1152
    %v2256 = vunpack.c.h.b16 %v1152
    %v2257 = vunpack.c.l.b16 %v1153
    %v2258 = vunpack.c.h.b16 %v1153
    %v2259 = vunpack.c.l.b16 %v1154
    %v2260 = vunpack.c.h.b16 %v1154
    %v2261 = vunpack.c.l.b16 %v1155
    %v2262 = vunpack.c.h.b16 %v1155
    %v2263 = vunpack.c.l.b16 %v1156
    %v2264 = vunpack.c.h.b16 %v1156
    %v2265 = vunpack.c.l.b16 %v1157
    %v2266 = vunpack.c.h.b16 %v1157
    %v2267 = vunpack.c.l.b16 %v1158
    %v2268 = vunpack.c.h.b16 %v1158
    %v2269 = vunpack.c.l.b16 %v1159
    %v2270 = vunpack.c.h.b16 %v1159
    %v2271 = vunpack.c.l.b16 %v1160
    %v2272 = vunpack.c.h.b16 %v1160
    %v2273 = vunpack.c.l.b16 %v1161
    %v2274 = vunpack.c.h.b16 %v1161
    %v2275 = vunpack.c.l.b16 %v1162
    %v2276 = vunpack.c.h.b16 %v1162
    %v2277 = vunpack.c.l.b16 %v1163
    %v2278 = vunpack.c.h.b16 %v1163
    %v2279 = vunpack.c.l.b16 %v1164
    %v2280 = vunpack.c.h.b16 %v1164
    %v2281 = vunpack.c.l.b16 %v1165
    %v2282 = vunpack.c.h.b16 %v1165
    %v2283 = vunpack.c.l.b16 %v1166
    %v2284 = vunpack.c.h.b16 %v1166
    %v2285 = vunpack.c.l.b16 %v1167
    %v2286 = vunpack.c.h.b16 %v1167
    %v2287 = vunpack.c.l.b16 %v1168
    %v2288 = vunpack.c.h.b16 %v1168
    %v2289 = vunpack.c.l.b16 %v1169
    %v2290 = vunpack.c.h.b16 %v1169
    %v2291 = vunpack.c.l.b16 %v1170
    %v2292 = vunpack.c.h.b16 %v1170
    %v2293 = vunpack.c.l.b16 %v1171
    %v2294 = vunpack.c.h.b16 %v1171
    %v2295 = vunpack.c.l.b16 %v1172
    %v2296 = vunpack.c.h.b16 %v1172
    %v2297 = vunpack.c.l.b16 %v1173
    %v2298 = vunpack.c.h.b16 %v1173
    %v2299 = vunpack.c.l.b16 %v1174
    %v2300 = vunpack.c.h.b16 %v1174
    %v2301 = vunpack.c.l.b16 %v1175
    %v2302 = vunpack.c.h.b16 %v1175
    %v2303 = vunpack.c.l.b16 %v1176
    %v2304 = vunpack.c.h.b16 %v1176
    %v2305 = vunpack.c.l.b16 %v1177
    %v2306 = vunpack.c.h.b16 %v1177
    %v2307 = vunpack.c.l.b16 %v1178
    %v2308 = vunpack.c.h.b16 %v1178
    %v2309 = vunpack.c.l.b16 %v1179
    %v2310 = vunpack.c.h.b16 %v1179
    %v2311 = vunpack.c.l.b16 %v1180
    %v2312 = vunpack.c.h.b16 %v1180
    %v2313 = vunpack.c.l.b16 %v1181
    %v2314 = vunpack.c.h.b16 %v1181
    %v2315 = vunpack.c.l.b16 %v1182
    %v2316 = vunpack.c.h.b16 %v1182
    %v2317 = vunpack.c.l.b16 %v1183
    %v2318 = vunpack.c.h.b16 %v1183
    %v2319 = vunpack.c.l.b16 %v1184
    %v2320 = vunpack.c.h.b16 %v1184
    %v2321 = vunpack.c.l.b16 %v1185
    %v2322 = vunpack.c.h.b16 %v1185
    %v2323 = vunpack.c.l.b16 %v1186
    %v2324 = vunpack.c.h.b16 %v1186
    %v2325 = vunpack.c.l.b16 %v1187
    %v2326 = vunpack.c.h.b16 %v1187
    %v2327 = vunpack.c.l.b16 %v1188
    %v2328 = vunpack.c.h.b16 %v1188
    %v2329 = vunpack.c.l.b16 %v1189
    %v2330 = vunpack.c.h.b16 %v1189
    %v2331 = vunpack.c.l.b16 %v1190
    %v2332 = vunpack.c.h.b16 %v1190
    %v2333 = vunpack.c.l.b16 %v1191
    %v2334 = vunpack.c.h.b16 %v1191
    %v2335 = vunpack.c.l.b16 %v1192
    %v2336 = vunpack.c.h.b16 %v1192
    %v2337 = vunpack.c.l.b16 %v1193
    %v2338 = vunpack.c.h.b16 %v1193
    %v2339 = vunpack.c.l.b16 %v1194
    %v2340 = vunpack.c.h.b16 %v1194
    %v2341 = vunpack.c.l.b16 %v1195
    %v2342 = vunpack.c.h.b16 %v1195
    %v2343 = vunpack.c.l.b16 %v1196
    %v2344 = vunpack.c.h.b16 %v1196
    %v2345 = vunpack.c.l.b16 %v1197
    %v2346 = vunpack.c.h.b16 %v1197
    %v2347 = vunpack.c.l.b16 %v1198
    %v2348 = vunpack.c.h.b16 %v1198
    %v2349 = vunpack.c.l.b16 %v1199
    %v2350 = vunpack.c.h.b16 %v1199
    %v2351 = vunpack.c.l.b16 %v1200
    %v2352 = vunpack.c.h.b16 %v1200
    %v2353 = vunpack.c.l.b16 %v1201
    %v2354 = vunpack.c.h.b16 %v1201
    %v2355 = vunpack.c.l.b16 %v1202
    %v2356 = vunpack.c.h.b16 %v1202
    %v2357 = vunpack.c.l.b16 %v1203
    %v2358 = vunpack.c.h.b16 %v1203
    %v2359 = vunpack.c.l.b16 %v1204
    %v2360 = vunpack.c.h.b16 %v1204
    %v2361 = vunpack.c.l.b16 %v1205
    %v2362 = vunpack.c.h.b16 %v1205
    %v2363 = vunpack.c.l.b16 %v1206
    %v2364 = vunpack.c.h.b16 %v1206
    %v2365 = vunpack.c.l.b16 %v1207
    %v2366 = vunpack.c.h.b16 %v1207
    %v2367 = vunpack.c.l.b16 %v1208
    %v2368 = vunpack.c.h.b16 %v1208
    %v2369 = vunpack.c.l.b16 %v1209
    %v2370 = vunpack.c.h.b16 %v1209
    %v2371 = vunpack.c.l.b16 %v1210
    %v2372 = vunpack.c.h.b16 %v1210
    %v2373 = vunpack.c.l.b16 %v1211
    %v2374 = vunpack.c.h.b16 %v1211
    %v2375 = vunpack.c.l.b16 %v1212
    %v2376 = vunpack.c.h.b16 %v1212
    %v2377 = vunpack.c.l.b16 %v1213
    %v2378 = vunpack.c.h.b16 %v1213
    %v2379 = vunpack.c.l.b16 %v1214
    %v2380 = vunpack.c.h.b16 %v1214
    %v2381 = vunpack.c.l.b16 %v1215
    %v2382 = vunpack.c.h.b16 %v1215
    %v2383 = vunpack.c.l.b16 %v1216
    %v2384 = vunpack.c.h.b16 %v1216
    %v2385 = vunpack.c.l.b16 %v1217
    %v2386 = vunpack.c.h.b16 %v1217
    %v2387 = vunpack.c.l.b16 %v1218
    %v2388 = vunpack.c.h.b16 %v1218
    %v2389 = vunpack.c.l.b16 %v1219
    %v2390 = vunpack.c.h.b16 %v1219
    %v2391 = vunpack.c.l.b16 %v1220
    %v2392 = vunpack.c.h.b16 %v1220
    %v2393 = vunpack.c.l.b16 %v1221
    %v2394 = vunpack.c.h.b16 %v1221
    %v2395 = vunpack.c.l.b16 %v1222
    %v2396 = vunpack.c.h.b16 %v1222
    %v2397 = vunpack.c.l.b16 %v1223
    %v2398 = vunpack.c.h.b16 %v1223
    %v2399 = vunpack.c.l.b16 %v1224
    %v2400 = vunpack.c.h.b16 %v1224
    %v2401 = vunpack.c.l.b16 %v1225
    %v2402 = vunpack.c.h.b16 %v1225
    %v2403 = vunpack.c.l.b16 %v1226
    %v2404 = vunpack.c.h.b16 %v1226
    %v2405 = vunpack.c.l.b16 %v1227
    %v2406 = vunpack.c.h.b16 %v1227
    %v2407 = vunpack.c.l.b16 %v1228
    %v2408 = vunpack.c.h.b16 %v1228
    %v2409 = vunpack.c.l.b16 %v1229
    %v2410 = vunpack.c.h.b16 %v1229
    %v2411 = vunpack.c.l.b16 %v1230
    %v2412 = vunpack.c.h.b16 %v1230
    %v2413 = vunpack.c.l.b16 %v1231
    %v2414 = vunpack.c.h.b16 %v1231
    %v2415 = vunpack.c.l.b16 %v1232
    %v2416 = vunpack.c.h.b16 %v1232
    %v2417 = vunpack.c.l.b16 %v1233
    %v2418 = vunpack.c.h.b16 %v1233
    %v2419 = vunpack.c.l.b16 %v1234
    %v2420 = vunpack.c.h.b16 %v1234
    %v2421 = vunpack.c.l.b16 %v1235
    %v2422 = vunpack.c.h.b16 %v1235
    %v2423 = vunpack.c.l.b16 %v1236
    %v2424 = vunpack.c.h.b16 %v1236
    %v2425 = vunpack.c.l.b16 %v1237
    %v2426 = vunpack.c.h.b16 %v1237
    %v2427 = vunpack.c.l.b16 %v1238
    %v2428 = vunpack.c.h.b16 %v1238
    %v2429 = vunpack.c.l.b16 %v1239
    %v2430 = vunpack.c.h.b16 %v1239
    %v2431 = vunpack.c.l.b16 %v1240
    %v2432 = vunpack.c.h.b16 %v1240
    %v2433 = vunpack.c.l.b16 %v1241
    %v2434 = vunpack.c.h.b16 %v1241
    %v2435 = vunpack.c.l.b16 %v1242
    %v2436 = vunpack.c.h.b16 %v1242
    %v2437 = vunpack.c.l.b16 %v1243
    %v2438 = vunpack.c.h.b16 %v1243
    %v2439 = vunpack.c.l.b16 %v1244
    %v2440 = vunpack.c.h.b16 %v1244
    %v2441 = vunpack.c.l.b16 %v1245
    %v2442 = vunpack.c.h.b16 %v1245
    %v2443 = vunpack.c.l.b16 %v1246
    %v2444 = vunpack.c.h.b16 %v1246
    %v2445 = vunpack.c.l.b16 %v1247
    %v2446 = vunpack.c.h.b16 %v1247
    %v2447 = vunpack.c.l.b16 %v1248
    %v2448 = vunpack.c.h.b16 %v1248
    %v2449 = vunpack.c.l.b16 %v1249
    %v2450 = vunpack.c.h.b16 %v1249
    %v2451 = vunpack.c.l.b16 %v1250
    %v2452 = vunpack.c.h.b16 %v1250
    %v2453 = vunpack.c.l.b16 %v1251
    %v2454 = vunpack.c.h.b16 %v1251
    %v2455 = vunpack.c.l.b16 %v1252
    %v2456 = vunpack.c.h.b16 %v1252
    %v2457 = vunpack.c.l.b16 %v1253
    %v2458 = vunpack.c.h.b16 %v1253
    %v2459 = vunpack.c.l.b16 %v1254
    %v2460 = vunpack.c.h.b16 %v1254
    %v2461 = vunpack.c.l.b16 %v1255
    %v2462 = vunpack.c.h.b16 %v1255
    %v2463 = vunpack.c.l.b16 %v1256
    %v2464 = vunpack.c.h.b16 %v1256
    %v2465 = vunpack.c.l.b16 %v1257
    %v2466 = vunpack.c.h.b16 %v1257
    %v2467 = vunpack.c.l.b16 %v1258
    %v2468 = vunpack.c.h.b16 %v1258
    %v2469 = vunpack.c.l.b16 %v1259
    %v2470 = vunpack.c.h.b16 %v1259
    %v2471 = vunpack.c.l.b16 %v1260
    %v2472 = vunpack.c.h.b16 %v1260
    %v2473 = vunpack.c.l.b16 %v1261
    %v2474 = vunpack.c.h.b16 %v1261
    %v2475 = vunpack.c.l.b16 %v1262
    %v2476 = vunpack.c.h.b16 %v1262
    %v2477 = vunpack.c.l.b16 %v1263
    %v2478 = vunpack.c.h.b16 %v1263
    %v2479 = vunpack.c.l.b16 %v1264
    %v2480 = vunpack.c.h.b16 %v1264
    %v2481 = vunpack.c.l.b16 %v1265
    %v2482 = vunpack.c.h.b16 %v1265
    %v2483 = vunpack.c.l.b16 %v1266
    %v2484 = vunpack.c.h.b16 %v1266
    %v2485 = vunpack.c.l.b16 %v1267
    %v2486 = vunpack.c.h.b16 %v1267
    %v2487 = vunpack.c.l.b16 %v1268
    %v2488 = vunpack.c.h.b16 %v1268
    %v2489 = vunpack.c.l.b16 %v1269
    %v2490 = vunpack.c.h.b16 %v1269
    %v2491 = vunpack.c.l.b16 %v1270
    %v2492 = vunpack.c.h.b16 %v1270
    %v2493 = vunpack.c.l.b16 %v1271
    %v2494 = vunpack.c.h.b16 %v1271
    %v2495 = vunpack.c.l.b16 %v1272
    %v2496 = vunpack.c.h.b16 %v1272
    %v2497 = vunpack.c.l.b16 %v1273
    %v2498 = vunpack.c.h.b16 %v1273
    %v2499 = vunpack.c.l.b16 %v1274
    %v2500 = vunpack.c.h.b16 %v1274
    %v2501 = vunpack.c.l.b16 %v1275
    %v2502 = vunpack.c.h.b16 %v1275
    %v2503 = vunpack.c.l.b16 %v1276
    %v2504 = vunpack.c.h.b16 %v1276
    %v2505 = vunpack.c.l.b16 %v1277
    %v2506 = vunpack.c.h.b16 %v1277
    %v2507 = vunpack.c.l.b16 %v1278
    %v2508 = vunpack.c.h.b16 %v1278
    %v2509 = vunpack.c.l.b16 %v1279
    %v2510 = vunpack.c.h.b16 %v1279
    %v2511 = vunpack.c.l.b16 %v1280
    %v2512 = vunpack.c.h.b16 %v1280
    %v2513 = vunpack.c.l.b16 %v1281
    %v2514 = vunpack.c.h.b16 %v1281
    %v2515 = vunpack.c.l.b16 %v1282
    %v2516 = vunpack.c.h.b16 %v1282
    %v2517 = vunpack.c.l.b16 %v1283
    %v2518 = vunpack.c.h.b16 %v1283
    %v2519 = vunpack.c.l.b16 %v1284
    %v2520 = vunpack.c.h.b16 %v1284
    %v2521 = vunpack.c.l.b16 %v1285
    %v2522 = vunpack.c.h.b16 %v1285
    %v2523 = vunpack.c.l.b16 %v1286
    %v2524 = vunpack.c.h.b16 %v1286
    %v2525 = vunpack.c.l.b16 %v1287
    %v2526 = vunpack.c.h.b16 %v1287
    %v2527 = vunpack.c.l.b16 %v1288
    %v2528 = vunpack.c.h.b16 %v1288
    %v2529 = vunpack.c.l.b16 %v1289
    %v2530 = vunpack.c.h.b16 %v1289
    %v2531 = vunpack.c.l.b16 %v1290
    %v2532 = vunpack.c.h.b16 %v1290
    %v2533 = vunpack.c.l.b16 %v1291
    %v2534 = vunpack.c.h.b16 %v1291
    %v2535 = vunpack.c.l.b16 %v1292
    %v2536 = vunpack.c.h.b16 %v1292
    %v2537 = vunpack.c.l.b16 %v1293
    %v2538 = vunpack.c.h.b16 %v1293
    %v2539 = vunpack.c.l.b16 %v1294
    %v2540 = vunpack.c.h.b16 %v1294
    %v2541 = vunpack.c.l.b16 %v1295
    %v2542 = vunpack.c.h.b16 %v1295
    %v2543 = vunpack.c.l.b16 %v1296
    %v2544 = vunpack.c.h.b16 %v1296
    %v2545 = vunpack.c.l.b16 %v1297
    %v2546 = vunpack.c.h.b16 %v1297
    %v2547 = vunpack.c.l.b16 %v1298
    %v2548 = vunpack.c.h.b16 %v1298
    %v2549 = vunpack.c.l.b16 %v1299
    %v2550 = vunpack.c.h.b16 %v1299
    %v2551 = vunpack.c.l.b16 %v1300
    %v2552 = vunpack.c.h.b16 %v1300
    %v2553 = vunpack.c.l.b16 %v1301
    %v2554 = vunpack.c.h.b16 %v1301
    %v2555 = vunpack.c.l.b16 %v1302
    %v2556 = vunpack.c.h.b16 %v1302
    %v2557 = vunpack.c.l.b16 %v1303
    %v2558 = vunpack.c.h.b16 %v1303
    %v2559 = vunpack.c.l.b16 %v1304
    %v2560 = vunpack.c.h.b16 %v1304
    %v2561 = vunpack.c.l.b16 %v1305
    %v2562 = vunpack.c.h.b16 %v1305
    %v2563 = vunpack.c.l.b16 %v1306
    %v2564 = vunpack.c.h.b16 %v1306
    %v2565 = vunpack.c.l.b16 %v1307
    %v2566 = vunpack.c.h.b16 %v1307
    %v2567 = vunpack.c.l.b16 %v1308
    %v2568 = vunpack.c.h.b16 %v1308
    %v2569 = vunpack.c.l.b16 %v1309
    %v2570 = vunpack.c.h.b16 %v1309
    %v2571 = vunpack.c.l.b16 %v1310
    %v2572 = vunpack.c.h.b16 %v1310
    %v2573 = vunpack.c.l.b16 %v1311
    %v2574 = vunpack.c.h.b16 %v1311
    %v2575 = vunpack.c.l.b16 %v1312
    %v2576 = vunpack.c.h.b16 %v1312
    %v2577 = vunpack.c.l.b16 %v1313
    %v2578 = vunpack.c.h.b16 %v1313
    %v2579 = vunpack.c.l.b16 %v1314
    %v2580 = vunpack.c.h.b16 %v1314
    %v2581 = vunpack.c.l.b16 %v1315
    %v2582 = vunpack.c.h.b16 %v1315
    %v2583 = vunpack.c.l.b16 %v1316
    %v2584 = vunpack.c.h.b16 %v1316
    %v2585 = vunpack.c.l.b16 %v1317
    %v2586 = vunpack.c.h.b16 %v1317
    %v2587 = vunpack.c.l.b16 %v1318
    %v2588 = vunpack.c.h.b16 %v1318
    %v2589 = vunpack.c.l.b16 %v1319
    %v2590 = vunpack.c.h.b16 %v1319
    %v2591 = vunpack.c.l.b16 %v1320
    %v2592 = vunpack.c.h.b16 %v1320
    %v2593 = vunpack.c.l.b16 %v1321
    %v2594 = vunpack.c.h.b16 %v1321
    %v2595 = vunpack.c.l.b16 %v1322
    %v2596 = vunpack.c.h.b16 %v1322
    %v2597 = vunpack.c.l.b16 %v1323
    %v2598 = vunpack.c.h.b16 %v1323
    %v2599 = vunpack.c.l.b16 %v1324
    %v2600 = vunpack.c.h.b16 %v1324
    %v2601 = vunpack.c.l.b16 %v1325
    %v2602 = vunpack.c.h.b16 %v1325
    %v2603 = vunpack.c.l.b16 %v1326
    %v2604 = vunpack.c.h.b16 %v1326
    %v2605 = vunpack.c.l.b16 %v1327
    %v2606 = vunpack.c.h.b16 %v1327
    %v2607 = vunpack.c.l.b16 %v1328
    %v2608 = vunpack.c.h.b16 %v1328
    %v2609 = vunpack.c.l.b16 %v1329
    %v2610 = vunpack.c.h.b16 %v1329
    %v2611 = vunpack.c.l.b16 %v1330
    %v2612 = vunpack.c.h.b16 %v1330
    %v2613 = vunpack.c.l.b16 %v1331
    %v2614 = vunpack.c.h.b16 %v1331
    %v2615 = vunpack.c.l.b16 %v1332
    %v2616 = vunpack.c.h.b16 %v1332
    %v2617 = vunpack.c.l.b16 %v1333
    %v2618 = vunpack.c.h.b16 %v1333
    %v2619 = vunpack.c.l.b16 %v1334
    %v2620 = vunpack.c.h.b16 %v1334
    %v2621 = vunpack.c.l.b16 %v1335
    %v2622 = vunpack.c.h.b16 %v1335
    %v2623 = vunpack.c.l.b16 %v1336
    %v2624 = vunpack.c.h.b16 %v1336
    %v2625 = vunpack.c.l.b16 %v1337
    %v2626 = vunpack.c.h.b16 %v1337
    %v2627 = vunpack.c.l.b16 %v1338
    %v2628 = vunpack.c.h.b16 %v1338
    %v2629 = vunpack.c.l.b16 %v1339
    %v2630 = vunpack.c.h.b16 %v1339
    %v2631 = vunpack.c.l.b16 %v1340
    %v2632 = vunpack.c.h.b16 %v1340
    %v2633 = vunpack.c.l.b16 %v1341
    %v2634 = vunpack.c.h.b16 %v1341
    %v2635 = vunpack.c.l.b16 %v1342
    %v2636 = vunpack.c.h.b16 %v1342
    %v2637 = vunpack.c.l.b16 %v1343
    %v2638 = vunpack.c.h.b16 %v1343
    %v2639 = vunpack.c.l.b16 %v1344
    %v2640 = vunpack.c.h.b16 %v1344
    %v2641 = vunpack.c.l.b16 %v1345
    %v2642 = vunpack.c.h.b16 %v1345
    %v2643 = vunpack.c.l.b16 %v1346
    %v2644 = vunpack.c.h.b16 %v1346
    %v2645 = vunpack.c.l.b16 %v1347
    %v2646 = vunpack.c.h.b16 %v1347
    %v2647 = vunpack.c.l.b16 %v1348
    %v2648 = vunpack.c.h.b16 %v1348
    %v2649 = vunpack.c.l.b16 %v1349
    %v2650 = vunpack.c.h.b16 %v1349
    %v2651 = vunpack.c.l.b16 %v1350
    %v2652 = vunpack.c.h.b16 %v1350
    %v2653 = vunpack.c.l.b16 %v1351
    %v2654 = vunpack.c.h.b16 %v1351
    %v2655 = vunpack.c.l.b16 %v1352
    %v2656 = vunpack.c.h.b16 %v1352
    %v2657 = vunpack.c.l.b16 %v1353
    %v2658 = vunpack.c.h.b16 %v1353
    %v2659 = vunpack.c.l.b16 %v1354
    %v2660 = vunpack.c.h.b16 %v1354
    %v2661 = vunpack.c.l.b16 %v1355
    %v2662 = vunpack.c.h.b16 %v1355
    %v2663 = vunpack.c.l.b16 %v1356
    %v2664 = vunpack.c.h.b16 %v1356
    %v2665 = vunpack.c.l.b16 %v1357
    %v2666 = vunpack.c.h.b16 %v1357
    %v2667 = vunpack.c.l.b16 %v1358
    %v2668 = vunpack.c.h.b16 %v1358
    %v2669 = vunpack.c.l.b16 %v1359
    %v2670 = vunpack.c.h.b16 %v1359
    %v2671 = vunpack.c.l.b16 %v1360
    %v2672 = vunpack.c.h.b16 %v1360
    %v2673 = vunpack.c.l.b16 %v1361
    %v2674 = vunpack.c.h.b16 %v1361
    %v2675 = vunpack.c.l.b16 %v1362
    %v2676 = vunpack.c.h.b16 %v1362
    %v2677 = vunpack.c.l.b16 %v1363
    %v2678 = vunpack.c.h.b16 %v1363
    %v2679 = vunpack.c.l.b16 %v1364
    %v2680 = vunpack.c.h.b16 %v1364
    %v2681 = vunpack.c.l.b16 %v1365
    %v2682 = vunpack.c.h.b16 %v1365
    %v2683 = vunpack.c.l.b16 %v1366
    %v2684 = vunpack.c.h.b16 %v1366
    %v2685 = vunpack.c.l.b16 %v1367
    %v2686 = vunpack.c.h.b16 %v1367
    %v2687 = vunpack.c.l.b16 %v1368
    %v2688 = vunpack.c.h.b16 %v1368
    %v2689 = vunpack.c.l.b16 %v1369
    %v2690 = vunpack.c.h.b16 %v1369
    %v2691 = vunpack.c.l.b16 %v1370
    %v2692 = vunpack.c.h.b16 %v1370
    %v2693 = vunpack.c.l.b16 %v1371
    %v2694 = vunpack.c.h.b16 %v1371
    %v2695 = vunpack.c.l.b16 %v1372
    %v2696 = vunpack.c.h.b16 %v1372
    %v2697 = vunpack.c.l.b16 %v1373
    %v2698 = vunpack.c.h.b16 %v1373
    %v2699 = vunpack.c.l.b16 %v1374
    %v2700 = vunpack.c.h.b16 %v1374
    %v2701 = vunpack.c.l.b16 %v1375
    %v2702 = vunpack.c.h.b16 %v1375
    %v2703 = vunpack.c.l.b16 %v1376
    %v2704 = vunpack.c.h.b16 %v1376
    %v2705 = vunpack.c.l.b16 %v1377
    %v2706 = vunpack.c.h.b16 %v1377
    %v2707 = vunpack.c.l.b16 %v1378
    %v2708 = vunpack.c.h.b16 %v1378
    %v2709 = vunpack.c.l.b16 %v1379
    %v2710 = vunpack.c.h.b16 %v1379
    %v2711 = vunpack.c.l.b16 %v1380
    %v2712 = vunpack.c.h.b16 %v1380
    %v2713 = vunpack.c.l.b16 %v1381
    %v2714 = vunpack.c.h.b16 %v1381
    %v2715 = vunpack.c.l.b16 %v1382
    %v2716 = vunpack.c.h.b16 %v1382
    %v2717 = vunpack.c.l.b16 %v1383
    %v2718 = vunpack.c.h.b16 %v1383
    %v2719 = vunpack.c.l.b16 %v1384
    %v2720 = vunpack.c.h.b16 %v1384
    %v2721 = vunpack.c.l.b16 %v1385
    %v2722 = vunpack.c.h.b16 %v1385
    %v2723 = vunpack.c.l.b16 %v1386
    %v2724 = vunpack.c.h.b16 %v1386
    %v2725 = vunpack.c.l.b16 %v1387
    %v2726 = vunpack.c.h.b16 %v1387
    %v2727 = vunpack.c.l.b16 %v1388
    %v2728 = vunpack.c.h.b16 %v1388
    %v2729 = vunpack.c.l.b16 %v1389
    %v2730 = vunpack.c.h.b16 %v1389
    %v2731 = vunpack.c.l.b16 %v1390
    %v2732 = vunpack.c.h.b16 %v1390
    %v2733 = vunpack.c.l.b16 %v1391
    %v2734 = vunpack.c.h.b16 %v1391
    %v2735 = vunpack.c.l.b16 %v1392
    %v2736 = vunpack.c.h.b16 %v1392
    %v2737 = vunpack.c.l.b16 %v1393
    %v2738 = vunpack.c.h.b16 %v1393
    %v2739 = vunpack.c.l.b16 %v1394
    %v2740 = vunpack.c.h.b16 %v1394
    %v2741 = vunpack.c.l.b16 %v1395
    %v2742 = vunpack.c.h.b16 %v1395
    %v2743 = vunpack.c.l.b16 %v1396
    %v2744 = vunpack.c.h.b16 %v1396
    %v2745 = vunpack.c.l.b16 %v1397
    %v2746 = vunpack.c.h.b16 %v1397
    %v2747 = vunpack.c.l.b16 %v1398
    %v2748 = vunpack.c.h.b16 %v1398
    %v2749 = vunpack.c.l.b16 %v1399
    %v2750 = vunpack.c.h.b16 %v1399
    %v2751 = vunpack.c.l.b16 %v1400
    %v2752 = vunpack.c.h.b16 %v1400
    %v2753 = vunpack.c.l.b16 %v1401
    %v2754 = vunpack.c.h.b16 %v1401
    %v2755 = vunpack.c.l.b16 %v1402
    %v2756 = vunpack.c.h.b16 %v1402
    %v2757 = vunpack.c.l.b16 %v1403
    %v2758 = vunpack.c.h.b16 %v1403
    %v2759 = vunpack.c.l.b16 %v1404
    %v2760 = vunpack.c.h.b16 %v1404
    %v2761 = vunpack.c.l.b16 %v1405
    %v2762 = vunpack.c.h.b16 %v1405
    %v2763 = vunpack.c.l.b16 %v1406
    %v2764 = vunpack.c.h.b16 %v1406
    %v2765 = vunpack.c.l.b16 %v1407
    %v2766 = vunpack.c.h.b16 %v1407
    %v2767 = vunpack.c.l.b16 %v1408
    %v2768 = vunpack.c.h.b16 %v1408
    %v2769 = vunpack.c.l.b16 %v1409
    %v2770 = vunpack.c.h.b16 %v1409
    %v2771 = vunpack.c.l.b16 %v1410
    %v2772 = vunpack.c.h.b16 %v1410
    %v2773 = vunpack.c.l.b16 %v1411
    %v2774 = vunpack.c.h.b16 %v1411
    %v2775 = vunpack.c.l.b16 %v1412
    %v2776 = vunpack.c.h.b16 %v1412
    %v2777 = vunpack.c.l.b16 %v1413
    %v2778 = vunpack.c.h.b16 %v1413
    %v2779 = vunpack.c.l.b16 %v1414
    %v2780 = vunpack.c.h.b16 %v1414
    %v2781 = vunpack.c.l.b16 %v1415
    %v2782 = vunpack.c.h.b16 %v1415
    %v2783 = vunpack.c.l.b16 %v1416
    %v2784 = vunpack.c.h.b16 %v1416
    %v2785 = vunpack.c.l.b16 %v1417
    %v2786 = vunpack.c.h.b16 %v1417
    %v2787 = vunpack.c.l.b16 %v1418
    %v2788 = vunpack.c.h.b16 %v1418
    %v2789 = vunpack.c.l.b16 %v1419
    %v2790 = vunpack.c.h.b16 %v1419
    %v2791 = vunpack.c.l.b16 %v1420
    %v2792 = vunpack.c.h.b16 %v1420
    %v2793 = vunpack.c.l.b16 %v1421
    %v2794 = vunpack.c.h.b16 %v1421
    %v2795 = vunpack.c.l.b16 %v1422
    %v2796 = vunpack.c.h.b16 %v1422
    %v2797 = vunpack.c.l.b16 %v1423
    %v2798 = vunpack.c.h.b16 %v1423
    %v2799 = vunpack.c.l.b16 %v1424
    %v2800 = vunpack.c.h.b16 %v1424
    %v2801 = vunpack.c.l.b16 %v1425
    %v2802 = vunpack.c.h.b16 %v1425
    %v2803 = vunpack.c.l.b16 %v1426
    %v2804 = vunpack.c.h.b16 %v1426
    %v2805 = vunpack.c.l.b16 %v1427
    %v2806 = vunpack.c.h.b16 %v1427
    %v2807 = vunpack.c.l.b16 %v1428
    %v2808 = vunpack.c.h.b16 %v1428
    %v2809 = vunpack.c.l.b16 %v1429
    %v2810 = vunpack.c.h.b16 %v1429
    %v2811 = vunpack.c.l.b16 %v1430
    %v2812 = vunpack.c.h.b16 %v1430
    %v2813 = vunpack.c.l.b16 %v1431
    %v2814 = vunpack.c.h.b16 %v1431
    %v2815 = vunpack.c.l.b16 %v1432
    %v2816 = vunpack.c.h.b16 %v1432
    %v2817 = vunpack.c.l.b16 %v1433
    %v2818 = vunpack.c.h.b16 %v1433
    %v2819 = vunpack.c.l.b16 %v1434
    %v2820 = vunpack.c.h.b16 %v1434
    %v2821 = vunpack.c.l.b16 %v1435
    %v2822 = vunpack.c.h.b16 %v1435
    %v2823 = vunpack.c.l.b16 %v1436
    %v2824 = vunpack.c.h.b16 %v1436
    %v2825 = vunpack.c.l.b16 %v1437
    %v2826 = vunpack.c.h.b16 %v1437
    %v2827 = vunpack.c.l.b16 %v1438
    %v2828 = vunpack.c.h.b16 %v1438
    %v2829 = vunpack.c.l.b16 %v1439
    %v2830 = vunpack.c.h.b16 %v1439
    %v2831 = vunpack.c.l.b16 %v1440
    %v2832 = vunpack.c.h.b16 %v1440
    %v2833 = vunpack.c.l.b16 %v1441
    %v2834 = vunpack.c.h.b16 %v1441
    %v2835 = vunpack.c.l.b16 %v1442
    %v2836 = vunpack.c.h.b16 %v1442
    %v2837 = vunpack.c.l.b16 %v1443
    %v2838 = vunpack.c.h.b16 %v1443
    %v2839 = vunpack.c.l.b16 %v1444
    %v2840 = vunpack.c.h.b16 %v1444
    %v2841 = vunpack.c.l.b16 %v1445
    %v2842 = vunpack.c.h.b16 %v1445
    %v2843 = vunpack.c.l.b16 %v1446
    %v2844 = vunpack.c.h.b16 %v1446
    %v2845 = vunpack.c.l.b16 %v1447
    %v2846 = vunpack.c.h.b16 %v1447
    %v2847 = vunpack.c.l.b16 %v1448
    %v2848 = vunpack.c.h.b16 %v1448
    %v2849 = vunpack.c.l.b16 %v1449
    %v2850 = vunpack.c.h.b16 %v1449
    %v2851 = vunpack.c.l.b16 %v1450
    %v2852 = vunpack.c.h.b16 %v1450
    %v2853 = vunpack.c.l.b16 %v1451
    %v2854 = vunpack.c.h.b16 %v1451
    %v2855 = vunpack.c.l.b16 %v1452
    %v2856 = vunpack.c.h.b16 %v1452
    %v2857 = vunpack.c.l.b16 %v1453
    %v2858 = vunpack.c.h.b16 %v1453
    %v2859 = vunpack.c.l.b16 %v1454
    %v2860 = vunpack.c.h.b16 %v1454
    %v2861 = vunpack.c.l.b16 %v1455
    %v2862 = vunpack.c.h.b16 %v1455
    %v2863 = vunpack.c.l.b16 %v1456
    %v2864 = vunpack.c.h.b16 %v1456
    %v2865 = vunpack.c.l.b16 %v1457
    %v2866 = vunpack.c.h.b16 %v1457
    %v2867 = vunpack.c.l.b16 %v1458
    %v2868 = vunpack.c.h.b16 %v1458
    %v2869 = vunpack.c.l.b16 %v1459
    %v2870 = vunpack.c.h.b16 %v1459
    %v2871 = vunpack.c.l.b16 %v1460
    %v2872 = vunpack.c.h.b16 %v1460
    %v2873 = vunpack.c.l.b16 %v1461
    %v2874 = vunpack.c.h.b16 %v1461
    %v2875 = vunpack.c.l.b16 %v1462
    %v2876 = vunpack.c.h.b16 %v1462
    %v2877 = vunpack.c.l.b16 %v1463
    %v2878 = vunpack.c.h.b16 %v1463
    %v2879 = vunpack.c.l.b16 %v1464
    %v2880 = vunpack.c.h.b16 %v1464
    %v2881 = vunpack.c.l.b16 %v1465
    %v2882 = vunpack.c.h.b16 %v1465
    %v2883 = vunpack.c.l.b16 %v1466
    %v2884 = vunpack.c.h.b16 %v1466
    %v2885 = vunpack.c.l.b16 %v1467
    %v2886 = vunpack.c.h.b16 %v1467
    %v2887 = vunpack.c.l.b16 %v1468
    %v2888 = vunpack.c.h.b16 %v1468
    %v2889 = vunpack.c.l.b16 %v1469
    %v2890 = vunpack.c.h.b16 %v1469
    %v2891 = vunpack.c.l.b16 %v1470
    %v2892 = vunpack.c.h.b16 %v1470
    %v2893 = vunpack.c.l.b16 %v1471
    %v2894 = vunpack.c.h.b16 %v1471
    %v2895 = vunpack.c.l.b16 %v1472
    %v2896 = vunpack.c.h.b16 %v1472
    %v2897 = vunpack.c.l.b16 %v1473
    %v2898 = vunpack.c.h.b16 %v1473
    %v2899 = vunpack.c.l.b16 %v1474
    %v2900 = vunpack.c.h.b16 %v1474
    %v2901 = vunpack.c.l.b16 %v1475
    %v2902 = vunpack.c.h.b16 %v1475
    %v2903 = vunpack.c.l.b16 %v1476
    %v2904 = vunpack.c.h.b16 %v1476
    %v2905 = vunpack.c.l.b16 %v1477
    %v2906 = vunpack.c.h.b16 %v1477
    %v2907 = vunpack.c.l.b16 %v1478
    %v2908 = vunpack.c.h.b16 %v1478
    %v2909 = vunpack.c.l.b16 %v1479
    %v2910 = vunpack.c.h.b16 %v1479
    %v2911 = vunpack.c.l.b16 %v1480
    %v2912 = vunpack.c.h.b16 %v1480
    %v2913 = vunpack.c.l.b16 %v1481
    %v2914 = vunpack.c.h.b16 %v1481
    %v2915 = vunpack.c.l.b16 %v1482
    %v2916 = vunpack.c.h.b16 %v1482
    %v2917 = vunpack.c.l.b16 %v1483
    %v2918 = vunpack.c.h.b16 %v1483
    %v2919 = vunpack.c.l.b16 %v1484
    %v2920 = vunpack.c.h.b16 %v1484
    %v2921 = vunpack.c.l.b16 %v1485
    %v2922 = vunpack.c.h.b16 %v1485
    %v2923 = vunpack.c.l.b16 %v1486
    %v2924 = vunpack.c.h.b16 %v1486
    %v2925 = vunpack.c.l.b16 %v1487
    %v2926 = vunpack.c.h.b16 %v1487
    %v2927 = vunpack.c.l.b16 %v1488
    %v2928 = vunpack.c.h.b16 %v1488
    %v2929 = vunpack.c.l.b16 %v1489
    %v2930 = vunpack.c.h.b16 %v1489
    %v2931 = vunpack.c.l.b16 %v1490
    %v2932 = vunpack.c.h.b16 %v1490
    %v2933 = vunpack.c.l.b16 %v1491
    %v2934 = vunpack.c.h.b16 %v1491
    %v2935 = vunpack.c.l.b16 %v1492
    %v2936 = vunpack.c.h.b16 %v1492
    %v2937 = vunpack.c.l.b16 %v1493
    %v2938 = vunpack.c.h.b16 %v1493
    %v2939 = vunpack.c.l.b16 %v1494
    %v2940 = vunpack.c.h.b16 %v1494
    %v2941 = vunpack.c.l.b16 %v1495
    %v2942 = vunpack.c.h.b16 %v1495
    %v2943 = vunpack.c.l.b16 %v1496
    %v2944 = vunpack.c.h.b16 %v1496
    %v2945 = vunpack.c.l.b16 %v1497
    %v2946 = vunpack.c.h.b16 %v1497
    %v2947 = vunpack.c.l.b16 %v1498
    %v2948 = vunpack.c.h.b16 %v1498
    %v2949 = vunpack.c.l.b16 %v1499
    %v2950 = vunpack.c.h.b16 %v1499
    %v2951 = vunpack.c.l.b16 %v1500
    %v2952 = vunpack.c.h.b16 %v1500
    %v2953 = vunpack.c.l.b16 %v1501
    %v2954 = vunpack.c.h.b16 %v1501
    %v2955 = vunpack.c.l.b16 %v1502
    %v2956 = vunpack.c.h.b16 %v1502
    %v2957 = vunpack.c.l.b16 %v1503
    %v2958 = vunpack.c.h.b16 %v1503
    %v2959 = vunpack.c.l.b16 %v1504
    %v2960 = vunpack.c.h.b16 %v1504
    %v2961 = vunpack.c.l.b16 %v1505
    %v2962 = vunpack.c.h.b16 %v1505
    %v2963 = vunpack.c.l.b16 %v1506
    %v2964 = vunpack.c.h.b16 %v1506
    %v2965 = vunpack.c.l.b16 %v1507
    %v2966 = vunpack.c.h.b16 %v1507
    %v2967 = vunpack.c.l.b16 %v1508
    %v2968 = vunpack.c.h.b16 %v1508
    %v2969 = vunpack.c.l.b16 %v1509
    %v2970 = vunpack.c.h.b16 %v1509
    %v2971 = vunpack.c.l.b16 %v1510
    %v2972 = vunpack.c.h.b16 %v1510
    %v2973 = vunpack.c.l.b16 %v1511
    %v2974 = vunpack.c.h.b16 %v1511
    %v2975 = vunpack.c.l.b16 %v1512
    %v2976 = vunpack.c.h.b16 %v1512
    %v2977 = vunpack.c.l.b16 %v1513
    %v2978 = vunpack.c.h.b16 %v1513
    %v2979 = vunpack.c.l.b16 %v1514
    %v2980 = vunpack.c.h.b16 %v1514
    %v2981 = vunpack.c.l.b16 %v1515
    %v2982 = vunpack.c.h.b16 %v1515
    %v2983 = vunpack.c.l.b16 %v1516
    %v2984 = vunpack.c.h.b16 %v1516
    %v2985 = vunpack.c.l.b16 %v1517
    %v2986 = vunpack.c.h.b16 %v1517
    %v2987 = vunpack.c.l.b16 %v1518
    %v2988 = vunpack.c.h.b16 %v1518
    %v2989 = vunpack.c.l.b16 %v1519
    %v2990 = vunpack.c.h.b16 %v1519
    %v2991 = vunpack.c.l.b16 %v1520
    %v2992 = vunpack.c.h.b16 %v1520
    %v2993 = vunpack.c.l.b16 %v1521
    %v2994 = vunpack.c.h.b16 %v1521
    %v2995 = vunpack.c.l.b16 %v1522
    %v2996 = vunpack.c.h.b16 %v1522
    %v2997 = vunpack.c.l.b16 %v1523
    %v2998 = vunpack.c.h.b16 %v1523
    %v2999 = vunpack.c.l.b16 %v1524
    %v3000 = vunpack.c.h.b16 %v1524
    %v3001 = vunpack.c.l.b16 %v1525
    %v3002 = vunpack.c.h.b16 %v1525
    %v3003 = vunpack.c.l.b16 %v1526
    %v3004 = vunpack.c.h.b16 %v1526
    %v3005 = vunpack.c.l.b16 %v1527
    %v3006 = vunpack.c.h.b16 %v1527
    %v3007 = vunpack.c.l.b16 %v1528
    %v3008 = vunpack.c.h.b16 %v1528
    %v3009 = vunpack.c.l.b16 %v1529
    %v3010 = vunpack.c.h.b16 %v1529
    %v3011 = vunpack.c.l.b16 %v1530
    %v3012 = vunpack.c.h.b16 %v1530
    %v3013 = vunpack.c.l.b16 %v1531
    %v3014 = vunpack.c.h.b16 %v1531
    %v3015 = vunpack.c.l.b16 %v1532
    %v3016 = vunpack.c.h.b16 %v1532
    %v3017 = vunpack.c.l.b16 %v1533
    %v3018 = vunpack.c.h.b16 %v1533
    %v3019 = vunpack.c.l.b16 %v1534
    %v3020 = vunpack.c.h.b16 %v1534
    %v3021 = vunpack.c.l.b16 %v1535
    %v3022 = vunpack.c.h.b16 %v1535
    %v3023 = vunpack.c.l.b16 %v1536
    %v3024 = vunpack.c.h.b16 %v1536
    %v3025 = vunpack.c.l.b16 %v1537
    %v3026 = vunpack.c.h.b16 %v1537
    %v3027 = vunpack.c.l.b16 %v1538
    %v3028 = vunpack.c.h.b16 %v1538
    %v3029 = vunpack.c.l.b16 %v1539
    %v3030 = vunpack.c.h.b16 %v1539
    %v3031 = vunpack.c.l.b16 %v1540
    %v3032 = vunpack.c.h.b16 %v1540
    %v3033 = vunpack.c.l.b16 %v1541
    %v3034 = vunpack.c.h.b16 %v1541
    %v3035 = vunpack.c.l.b16 %v1542
    %v3036 = vunpack.c.h.b16 %v1542
    %v3037 = vunpack.c.l.b16 %v1543
    %v3038 = vunpack.c.h.b16 %v1543
    %v3039 = vunpack.c.l.b16 %v1544
    %v3040 = vunpack.c.h.b16 %v1544
    %v3041 = vunpack.c.l.b16 %v1545
    %v3042 = vunpack.c.h.b16 %v1545
    %v3043 = vunpack.c.l.b16 %v1546
    %v3044 = vunpack.c.h.b16 %v1546
    %v3045 = vunpack.c.l.b16 %v1547
    %v3046 = vunpack.c.h.b16 %v1547
    %v3047 = vunpack.c.l.b16 %v1548
    %v3048 = vunpack.c.h.b16 %v1548
    %v3049 = vunpack.c.l.b16 %v1549
    %v3050 = vunpack.c.h.b16 %v1549
    %v3051 = vunpack.c.l.b16 %v1550
    %v3052 = vunpack.c.h.b16 %v1550
    %v3053 = vunpack.c.l.b16 %v1551
    %v3054 = vunpack.c.h.b16 %v1551
    %v3055 = vunpack.c.l.b16 %v1552
    %v3056 = vunpack.c.h.b16 %v1552
    %v3057 = vunpack.c.l.b16 %v1553
    %v3058 = vunpack.c.h.b16 %v1553
    %v3059 = vunpack.c.l.b16 %v1554
    %v3060 = vunpack.c.h.b16 %v1554
    %v3061 = vunpack.c.l.b16 %v1555
    %v3062 = vunpack.c.h.b16 %v1555
    %v3063 = vunpack.c.l.b16 %v1556
    %v3064 = vunpack.c.h.b16 %v1556
    %v3065 = vunpack.c.l.b16 %v1557
    %v3066 = vunpack.c.h.b16 %v1557
    %v3067 = vunpack.c.l.b16 %v1558
    %v3068 = vunpack.c.h.b16 %v1558
    %v3069 = vunpack.c.l.b16 %v1559
    %v3070 = vunpack.c.h.b16 %v1559
    %v3071 = vunpack.c.l.b16 %v1560
    %v3072 = vunpack.c.h.b16 %v1560
    %v3073 = vunpack.c.l.b16 %v1561
    %v3074 = vunpack.c.h.b16 %v1561
    %v3075 = vunpack.c.l.b16 %v1562
    %v3076 = vunpack.c.h.b16 %v1562
    %v3077 = vunpack.c.l.b16 %v1563
    %v3078 = vunpack.c.h.b16 %v1563
    %v3079 = vunpack.c.l.b16 %v1564
    %v3080 = vunpack.c.h.b16 %v1564
    %v3081 = vunpack.c.l.b16 %v1565
    %v3082 = vunpack.c.h.b16 %v1565
    %v3083 = vunpack.c.l.b16 %v1566
    %v3084 = vunpack.c.h.b16 %v1566
    %v3085 = vunpack.c.l.b16 %v1567
    %v3086 = vunpack.c.h.b16 %v1567
    %v3087 = vunpack.c.l.b16 %v1568
    %v3088 = vunpack.c.h.b16 %v1568
    %v3089 = vunpack.c.l.b16 %v1569
    %v3090 = vunpack.c.h.b16 %v1569
    %v3091 = vunpack.c.l.b16 %v1570
    %v3092 = vunpack.c.h.b16 %v1570
    %v3093 = vunpack.c.l.b16 %v1571
    %v3094 = vunpack.c.h.b16 %v1571
    %v3095 = vunpack.c.l.b16 %v1572
    %v3096 = vunpack.c.h.b16 %v1572
    %v3097 = vunpack.c.l.b16 %v1573
    %v3098 = vunpack.c.h.b16 %v1573
    %v3099 = vunpack.c.l.b16 %v1574
    %v3100 = vunpack.c.h.b16 %v1574
    %v3101 = vunpack.c.l.b16 %v1575
    %v3102 = vunpack.c.h.b16 %v1575
    %v3103 = vunpack.c.l.b16 %v1576
    %v3104 = vunpack.c.h.b16 %v1576
    %v3105 = vunpack.c.l.b16 %v1577
    %v3106 = vunpack.c.h.b16 %v1577
    %v3107 = vunpack.c.l.b16 %v1578
    %v3108 = vunpack.c.h.b16 %v1578
    %v3109 = vunpack.c.l.b16 %v1579
    %v3110 = vunpack.c.h.b16 %v1579
    %v3111 = vunpack.c.l.b16 %v1580
    %v3112 = vunpack.c.h.b16 %v1580
    %v3113 = vunpack.c.l.b16 %v1581
    %v3114 = vunpack.c.h.b16 %v1581
    %v3115 = vunpack.c.l.b16 %v1582
    %v3116 = vunpack.c.h.b16 %v1582
    %v3117 = vunpack.c.l.b16 %v1583
    %v3118 = vunpack.c.h.b16 %v1583
    %v3119 = vunpack.c.l.b16 %v1584
    %v3120 = vunpack.c.h.b16 %v1584
    %v3121 = vunpack.c.l.b16 %v1585
    %v3122 = vunpack.c.h.b16 %v1585
    %v3123 = vunpack.c.l.b16 %v1586
    %v3124 = vunpack.c.h.b16 %v1586
    %v3125 = vunpack.c.l.b16 %v1587
    %v3126 = vunpack.c.h.b16 %v1587
    %v3127 = vunpack.c.l.b16 %v1588
    %v3128 = vunpack.c.h.b16 %v1588
    %v3129 = vunpack.c.l.b16 %v1589
    %v3130 = vunpack.c.h.b16 %v1589
    %v3131 = vunpack.c.l.b16 %v1590
    %v3132 = vunpack.c.h.b16 %v1590
    %v3133 = vunpack.c.l.b16 %v1591
    %v3134 = vunpack.c.h.b16 %v1591
    %v3135 = vunpack.c.l.b16 %v1592
    %v3136 = vunpack.c.h.b16 %v1592
    %v3137 = vunpack.c.l.b16 %v1593
    %v3138 = vunpack.c.h.b16 %v1593
    %v3139 = vunpack.c.l.b16 %v1594
    %v3140 = vunpack.c.h.b16 %v1594
    %v3141 = vunpack.c.l.b16 %v1595
    %v3142 = vunpack.c.h.b16 %v1595
    %v3143 = vunpack.c.l.b16 %v1596
    %v3144 = vunpack.c.h.b16 %v1596
    %v3145 = vunpack.c.l.b16 %v1597
    %v3146 = vunpack.c.h.b16 %v1597
    %v3147 = vunpack.c.l.b16 %v1598
    %v3148 = vunpack.c.h.b16 %v1598
    %v3149 = vunpack.c.l.b16 %v1599
    %v3150 = vunpack.c.h.b16 %v1599
    %v3151 = vunpack.c.l.b16 %v1600
    %v3152 = vunpack.c.h.b16 %v1600
    %v3153 = vunpack.c.l.b16 %v1601
    %v3154 = vunpack.c.h.b16 %v1601
    %v3155 = vunpack.c.l.b16 %v1602
    %v3156 = vunpack.c.h.b16 %v1602
    %v3157 = vunpack.c.l.b16 %v1603
    %v3158 = vunpack.c.h.b16 %v1603
    %v3159 = vunpack.c.l.b16 %v1604
    %v3160 = vunpack.c.h.b16 %v1604
    %v3161 = vunpack.c.l.b16 %v1605
    %v3162 = vunpack.c.h.b16 %v1605
    %v3163 = vunpack.c.l.b16 %v1606
    %v3164 = vunpack.c.h.b16 %v1606
    %v3165 = vunpack.c.l.b16 %v1607
    %v3166 = vunpack.c.h.b16 %v1607
    %v3167 = vunpack.c.l.b16 %v1608
    %v3168 = vunpack.c.h.b16 %v1608
    %v3169 = vunpack.c.l.b16 %v1609
    %v3170 = vunpack.c.h.b16 %v1609
    %v3171 = vunpack.c.l.b16 %v1610
    %v3172 = vunpack.c.h.b16 %v1610
    %v3173 = vunpack.c.l.b16 %v1611
    %v3174 = vunpack.c.h.b16 %v1611
    %v3175 = vunpack.c.l.b16 %v1612
    %v3176 = vunpack.c.h.b16 %v1612
    %v3177 = vunpack.c.l.b16 %v1613
    %v3178 = vunpack.c.h.b16 %v1613
    %v3179 = vunpack.c.l.b16 %v1614
    %v3180 = vunpack.c.h.b16 %v1614
    %v3181 = vunpack.c.l.b16 %v1615
    %v3182 = vunpack.c.h.b16 %v1615
    %v3183 = vunpack.c.l.b16 %v1616
    %v3184 = vunpack.c.h.b16 %v1616
    %v3185 = vunpack.c.l.b16 %v1617
    %v3186 = vunpack.c.h.b16 %v1617
    %v3187 = vunpack.c.l.b16 %v1618
    %v3188 = vunpack.c.h.b16 %v1618
    %v3189 = vunpack.c.l.b16 %v1619
    %v3190 = vunpack.c.h.b16 %v1619
    %v3191 = vunpack.c.l.b16 %v1620
    %v3192 = vunpack.c.h.b16 %v1620
    %v3193 = vunpack.c.l.b16 %v1621
    %v3194 = vunpack.c.h.b16 %v1621
    %v3195 = vunpack.c.l.b16 %v1622
    %v3196 = vunpack.c.h.b16 %v1622
    %v3197 = vunpack.c.l.b16 %v1623
    %v3198 = vunpack.c.h.b16 %v1623
    %v3199 = vunpack.c.l.b16 %v1624
    %v3200 = vunpack.c.h.b16 %v1624
    %v3201 = vunpack.c.l.b16 %v1625
    %v3202 = vunpack.c.h.b16 %v1625
    %v3203 = vunpack.c.l.b16 %v1626
    %v3204 = vunpack.c.h.b16 %v1626
    %v3205 = vpack.c.b16 %v2189, %v2181
    %v3206 = vpack.c.b16 %v2190, %v2182
    %v3207 = vpack.c.b16 %v2191, %v2183
    %v3208 = vpack.c.b16 %v2192, %v2184
    %v3209 = vpack.c.b16 %v2193, %v2185
    %v3210 = vpack.c.b16 %v2194, %v2186
    %v3211 = vpack.c.b16 %v2195, %v2187
    %v3212 = vpack.c.b16 %v2196, %v2188
    %v3213 = vpack.c.b16 %v2205, %v2197
    %v3214 = vpack.c.b16 %v2206, %v2198
    %v3215 = vpack.c.b16 %v2207, %v2199
    %v3216 = vpack.c.b16 %v2208, %v2200
    %v3217 = vpack.c.b16 %v2209, %v2201
    %v3218 = vpack.c.b16 %v2210, %v2202
    %v3219 = vpack.c.b16 %v2211, %v2203
    %v3220 = vpack.c.b16 %v2212, %v2204
    %v3221 = vpack.c.b16 %v2221, %v2213
    %v3222 = vpack.c.b16 %v2222, %v2214
    %v3223 = vpack.c.b16 %v2223, %v2215
    %v3224 = vpack.c.b16 %v2224, %v2216
    %v3225 = vpack.c.b16 %v2225, %v2217
    %v3226 = vpack.c.b16 %v2226, %v2218
    %v3227 = vpack.c.b16 %v2227, %v2219
    %v3228 = vpack.c.b16 %v2228, %v2220
    %v3229 = vpack.c.b16 %v2237, %v2229
    %v3230 = vpack.c.b16 %v2238, %v2230
    %v3231 = vpack.c.b16 %v2239, %v2231
    %v3232 = vpack.c.b16 %v2240, %v2232
    %v3233 = vpack.c.b16 %v2241, %v2233
    %v3234 = vpack.c.b16 %v2242, %v2234
    %v3235 = vpack.c.b16 %v2243, %v2235
    %v3236 = vpack.c.b16 %v2244, %v2236
    %v3237 = vpack.c.b16 %v2253, %v2245
    %v3238 = vpack.c.b16 %v2254, %v2246
    %v3239 = vpack.c.b16 %v2255, %v2247
    %v3240 = vpack.c.b16 %v2256, %v2248
    %v3241 = vpack.c.b16 %v2257, %v2249
    %v3242 = vpack.c.b16 %v2258, %v2250
    %v3243 = vpack.c.b16 %v2259, %v2251
    %v3244 = vpack.c.b16 %v2260, %v2252
    %v3245 = vpack.c.b16 %v2269, %v2261
    %v3246 = vpack.c.b16 %v2270, %v2262
    %v3247 = vpack.c.b16 %v2271, %v2263
    %v3248 = vpack.c.b16 %v2272, %v2264
    %v3249 = vpack.c.b16 %v2273, %v2265
    %v3250 = vpack.c.b16 %v2274, %v2266
    %v3251 = vpack.c.b16 %v2275, %v2267
    %v3252 = vpack.c.b16 %v2276, %v2268
    %v3253 = vpack.c.b16 %v2285, %v2277
    %v3254 = vpack.c.b16 %v2286, %v2278
    %v3255 = vpack.c.b16 %v2287, %v2279
    %v3256 = vpack.c.b16 %v2288, %v2280
    %v3257 = vpack.c.b16 %v2289, %v2281
    %v3258 = vpack.c.b16 %v2290, %v2282
    %v3259 = vpack.c.b16 %v2291, %v2283
    %v3260 = vpack.c.b16 %v2292, %v2284
    %v3261 = vpack.c.b16 %v2301, %v2293
    %v3262 = vpack.c.b16 %v2302, %v2294
    %v3263 = vpack.c.b16 %v2303, %v2295
    %v3264 = vpack.c.b16 %v2304, %v2296
    %v3265 = vpack.c.b16 %v2305, %v2297
    %v3266 = vpack.c.b16 %v2306, %v2298
    %v3267 = vpack.c.b16 %v2307, %v2299
    %v3268 = vpack.c.b16 %v2308, %v2300
    %v3269 = vpack.c.b16 %v2317, %v2309
    %v3270 = vpack.c.b16 %v2318, %v2310
    %v3271 = vpack.c.b16 %v2319, %v2311
    %v3272 = vpack.c.b16 %v2320, %v2312
    %v3273 = vpack.c.b16 %v2321, %v2313
    %v3274 = vpack.c.b16 %v2322, %v2314
    %v3275 = vpack.c.b16 %v2323, %v2315
    %v3276 = vpack.c.b16 %v2324, %v2316
    %v3277 = vpack.c.b16 %v2333, %v2325
    %v3278 = vpack.c.b16 %v2334, %v2326
    %v3279 = vpack.c.b16 %v2335, %v2327
    %v3280 = vpack.c.b16 %v2336, %v2328
    %v3281 = vpack.c.b16 %v2337, %v2329
    %v3282 = vpack.c.b16 %v2338, %v2330
    %v3283 = vpack.c.b16 %v2339, %v2331
    %v3284 = vpack.c.b16 %v2340, %v2332
    %v3285 = vpack.c.b16 %v2349, %v2341
    %v3286 = vpack.c.b16 %v2350, %v2342
    %v3287 = vpack.c.b16 %v2351, %v2343
    %v3288 = vpack.c.b16 %v2352, %v2344
    %v3289 = vpack.c.b16 %v2353, %v2345
    %v3290 = vpack.c.b16 %v2354, %v2346
    %v3291 = vpack.c.b16 %v2355, %v2347
    %v3292 = vpack.c.b16 %v2356, %v2348
    %v3293 = vpack.c.b16 %v2365, %v2357
    %v3294 = vpack.c.b16 %v2366, %v2358
    %v3295 = vpack.c.b16 %v2367, %v2359
    %v3296 = vpack.c.b16 %v2368, %v2360
    %v3297 = vpack.c.b16 %v2369, %v2361
    %v3298 = vpack.c.b16 %v2370, %v2362
    %v3299 = vpack.c.b16 %v2371, %v2363
    %v3300 = vpack.c.b16 %v2372, %v2364
    %v3301 = vpack.c.b16 %v2381, %v2373
    %v3302 = vpack.c.b16 %v2382, %v2374
    %v3303 = vpack.c.b16 %v2383, %v2375
    %v3304 = vpack.c.b16 %v2384, %v2376
    %v3305 = vpack.c.b16 %v2385, %v2377
    %v3306 = vpack.c.b16 %v2386, %v2378
    %v3307 = vpack.c.b16 %v2387, %v2379
    %v3308 = vpack.c.b16 %v2388, %v2380
    %v3309 = vpack.c.b16 %v2397, %v2389
    %v3310 = vpack.c.b16 %v2398, %v2390
    %v3311 = vpack.c.b16 %v2399, %v2391
    %v3312 = vpack.c.b16 %v2400, %v2392
    %v3313 = vpack.c.b16 %v2401, %v2393
    %v3314 = vpack.c.b16 %v2402, %v2394
    %v3315 = vpack.c.b16 %v2403, %v2395
    %v3316 = vpack.c.b16 %v2404, %v2396
    %v3317 = vpack.c.b16 %v2413, %v2405
    %v3318 = vpack.c.b16 %v2414, %v2406
    %v3319 = vpack.c.b16 %v2415, %v2407
    %v3320 = vpack.c.b16 %v2416, %v2408
    %v3321 = vpack.c.b16 %v2417, %v2409
    %v3322 = vpack.c.b16 %v2418, %v2410
    %v3323 = vpack.c.b16 %v2419, %v2411
    %v3324 = vpack.c.b16 %v2420, %v2412
    %v3325 = vpack.c.b16 %v2429, %v2421
    %v3326 = vpack.c.b16 %v2430, %v2422
    %v3327 = vpack.c.b16 %v2431, %v2423
    %v3328 = vpack.c.b16 %v2432, %v2424
    %v3329 = vpack.c.b16 %v2433, %v2425
    %v3330 = vpack.c.b16 %v2434, %v2426
    %v3331 = vpack.c.b16 %v2435, %v2427
    %v3332 = vpack.c.b16 %v2436, %v2428
    %v3333 = vpack.c.b16 %v2445, %v2437
    %v3334 = vpack.c.b16 %v2446, %v2438
    %v3335 = vpack.c.b16 %v2447, %v2439
    %v3336 = vpack.c.b16 %v2448, %v2440
    %v3337 = vpack.c.b16 %v2449, %v2441
    %v3338 = vpack.c.b16 %v2450, %v2442
    %v3339 = vpack.c.b16 %v2451, %v2443
    %v3340 = vpack.c.b16 %v2452, %v2444
    %v3341 = vpack.c.b16 %v2461, %v2453
    %v3342 = vpack.c.b16 %v2462, %v2454
    %v3343 = vpack.c.b16 %v2463, %v2455
    %v3344 = vpack.c.b16 %v2464, %v2456
    %v3345 = vpack.c.b16 %v2465, %v2457
    %v3346 = vpack.c.b16 %v2466, %v2458
    %v3347 = vpack.c.b16 %v2467, %v2459
    %v3348 = vpack.c.b16 %v2468, %v2460
    %v3349 = vpack.c.b16 %v2477, %v2469
    %v3350 = vpack.c.b16 %v2478, %v2470
    %v3351 = vpack.c.b16 %v2479, %v2471
    %v3352 = vpack.c.b16 %v2480, %v2472
    %v3353 = vpack.c.b16 %v2481, %v2473
    %v3354 = vpack.c.b16 %v2482, %v2474
    %v3355 = vpack.c.b16 %v2483, %v2475
    %v3356 = vpack.c.b16 %v2484, %v2476
    %v3357 = vpack.c.b16 %v2493, %v2485
    %v3358 = vpack.c.b16 %v2494, %v2486
    %v3359 = vpack.c.b16 %v2495, %v2487
    %v3360 = vpack.c.b16 %v2496, %v2488
    %v3361 = vpack.c.b16 %v2497, %v2489
    %v3362 = vpack.c.b16 %v2498, %v2490
    %v3363 = vpack.c.b16 %v2499, %v2491
    %v3364 = vpack.c.b16 %v2500, %v2492
    %v3365 = vpack.c.b16 %v2509, %v2501
    %v3366 = vpack.c.b16 %v2510, %v2502
    %v3367 = vpack.c.b16 %v2511, %v2503
    %v3368 = vpack.c.b16 %v2512, %v2504
    %v3369 = vpack.c.b16 %v2513, %v2505
    %v3370 = vpack.c.b16 %v2514, %v2506
    %v3371 = vpack.c.b16 %v2515, %v2507
    %v3372 = vpack.c.b16 %v2516, %v2508
    %v3373 = vpack.c.b16 %v2525, %v2517
    %v3374 = vpack.c.b16 %v2526, %v2518
    %v3375 = vpack.c.b16 %v2527, %v2519
    %v3376 = vpack.c.b16 %v2528, %v2520
    %v3377 = vpack.c.b16 %v2529, %v2521
    %v3378 = vpack.c.b16 %v2530, %v2522
    %v3379 = vpack.c.b16 %v2531, %v2523
    %v3380 = vpack.c.b16 %v2532, %v2524
    %v3381 = vpack.c.b16 %v2541, %v2533
    %v3382 = vpack.c.b16 %v2542, %v2534
    %v3383 = vpack.c.b16 %v2543, %v2535
    %v3384 = vpack.c.b16 %v2544, %v2536
    %v3385 = vpack.c.b16 %v2545, %v2537
    %v3386 = vpack.c.b16 %v2546, %v2538
    %v3387 = vpack.c.b16 %v2547, %v2539
    %v3388 = vpack.c.b16 %v2548, %v2540
    %v3389 = vpack.c.b16 %v2557, %v2549
    %v3390 = vpack.c.b16 %v2558, %v2550
    %v3391 = vpack.c.b16 %v2559, %v2551
    %v3392 = vpack.c.b16 %v2560, %v2552
    %v3393 = vpack.c.b16 %v2561, %v2553
    %v3394 = vpack.c.b16 %v2562, %v2554
    %v3395 = vpack.c.b16 %v2563, %v2555
    %v3396 = vpack.c.b16 %v2564, %v2556
    %v3397 = vpack.c.b16 %v2573, %v2565
    %v3398 = vpack.c.b16 %v2574, %v2566
    %v3399 = vpack.c.b16 %v2575, %v2567
    %v3400 = vpack.c.b16 %v2576, %v2568
    %v3401 = vpack.c.b16 %v2577, %v2569
    %v3402 = vpack.c.b16 %v2578, %v2570
    %v3403 = vpack.c.b16 %v2579, %v2571
    %v3404 = vpack.c.b16 %v2580, %v2572
    %v3405 = vpack.c.b16 %v2589, %v2581
    %v3406 = vpack.c.b16 %v2590, %v2582
    %v3407 = vpack.c.b16 %v2591, %v2583
    %v3408 = vpack.c.b16 %v2592, %v2584
    %v3409 = vpack.c.b16 %v2593, %v2585
    %v3410 = vpack.c.b16 %v2594, %v2586
    %v3411 = vpack.c.b16 %v2595, %v2587
    %v3412 = vpack.c.b16 %v2596, %v2588
    %v3413 = vpack.c.b16 %v2605, %v2597
    %v3414 = vpack.c.b16 %v2606, %v2598
    %v3415 = vpack.c.b16 %v2607, %v2599
    %v3416 = vpack.c.b16 %v2608, %v2600
    %v3417 = vpack.c.b16 %v2609, %v2601
    %v3418 = vpack.c.b16 %v2610, %v2602
    %v3419 = vpack.c.b16 %v2611, %v2603
    %v3420 = vpack.c.b16 %v2612, %v2604
    %v3421 = vpack.c.b16 %v2621, %v2613
    %v3422 = vpack.c.b16 %v2622, %v2614
    %v3423 = vpack.c.b16 %v2623, %v2615
    %v3424 = vpack.c.b16 %v2624, %v2616
    %v3425 = vpack.c.b16 %v2625, %v2617
    %v3426 = vpack.c.b16 %v2626, %v2618
    %v3427 = vpack.c.b16 %v2627, %v2619
    %v3428 = vpack.c.b16 %v2628, %v2620
    %v3429 = vpack.c.b16 %v2637, %v2629
    %v3430 = vpack.c.b16 %v2638, %v2630
    %v3431 = vpack.c.b16 %v2639, %v2631
    %v3432 = vpack.c.b16 %v2640, %v2632
    %v3433 = vpack.c.b16 %v2641, %v2633
    %v3434 = vpack.c.b16 %v2642, %v2634
    %v3435 = vpack.c.b16 %v2643, %v2635
    %v3436 = vpack.c.b16 %v2644, %v2636
    %v3437 = vpack.c.b16 %v2653, %v2645
    %v3438 = vpack.c.b16 %v2654, %v2646
    %v3439 = vpack.c.b16 %v2655, %v2647
    %v3440 = vpack.c.b16 %v2656, %v2648
    %v3441 = vpack.c.b16 %v2657, %v2649
    %v3442 = vpack.c.b16 %v2658, %v2650
    %v3443 = vpack.c.b16 %v2659, %v2651
    %v3444 = vpack.c.b16 %v2660, %v2652
    %v3445 = vpack.c.b16 %v2669, %v2661
    %v3446 = vpack.c.b16 %v2670, %v2662
    %v3447 = vpack.c.b16 %v2671, %v2663
    %v3448 = vpack.c.b16 %v2672, %v2664
    %v3449 = vpack.c.b16 %v2673, %v2665
    %v3450 = vpack.c.b16 %v2674, %v2666
    %v3451 = vpack.c.b16 %v2675, %v2667
    %v3452 = vpack.c.b16 %v2676, %v2668
    %v3453 = vpack.c.b16 %v2685, %v2677
    %v3454 = vpack.c.b16 %v2686, %v2678
    %v3455 = vpack.c.b16 %v2687, %v2679
    %v3456 = vpack.c.b16 %v2688, %v2680
    %v3457 = vpack.c.b16 %v2689, %v2681
    %v3458 = vpack.c.b16 %v2690, %v2682
    %v3459 = vpack.c.b16 %v2691, %v2683
    %v3460 = vpack.c.b16 %v2692, %v2684
    %v3461 = vpack.c.b16 %v2701, %v2693
    %v3462 = vpack.c.b16 %v2702, %v2694
    %v3463 = vpack.c.b16 %v2703, %v2695
    %v3464 = vpack.c.b16 %v2704, %v2696
    %v3465 = vpack.c.b16 %v2705, %v2697
    %v3466 = vpack.c.b16 %v2706, %v2698
    %v3467 = vpack.c.b16 %v2707, %v2699
    %v3468 = vpack.c.b16 %v2708, %v2700
    %v3469 = vpack.c.b16 %v2717, %v2709
    %v3470 = vpack.c.b16 %v2718, %v2710
    %v3471 = vpack.c.b16 %v2719, %v2711
    %v3472 = vpack.c.b16 %v2720, %v2712
    %v3473 = vpack.c.b16 %v2721, %v2713
    %v3474 = vpack.c.b16 %v2722, %v2714
    %v3475 = vpack.c.b16 %v2723, %v2715
    %v3476 = vpack.c.b16 %v2724, %v2716
    %v3477 = vpack.c.b16 %v2733, %v2725
    %v3478 = vpack.c.b16 %v2734, %v2726
    %v3479 = vpack.c.b16 %v2735, %v2727
    %v3480 = vpack.c.b16 %v2736, %v2728
    %v3481 = vpack.c.b16 %v2737, %v2729
    %v3482 = vpack.c.b16 %v2738, %v2730
    %v3483 = vpack.c.b16 %v2739, %v2731
    %v3484 = vpack.c.b16 %v2740, %v2732
    %v3485 = vpack.c.b16 %v2749, %v2741
    %v3486 = vpack.c.b16 %v2750, %v2742
    %v3487 = vpack.c.b16 %v2751, %v2743
    %v3488 = vpack.c.b16 %v2752, %v2744
    %v3489 = vpack.c.b16 %v2753, %v2745
    %v3490 = vpack.c.b16 %v2754, %v2746
    %v3491 = vpack.c.b16 %v2755, %v2747
    %v3492 = vpack.c.b16 %v2756, %v2748
    %v3493 = vpack.c.b16 %v2765, %v2757
    %v3494 = vpack.c.b16 %v2766, %v2758
    %v3495 = vpack.c.b16 %v2767, %v2759
    %v3496 = vpack.c.b16 %v2768, %v2760
    %v3497 = vpack.c.b16 %v2769, %v2761
    %v3498 = vpack.c.b16 %v2770, %v2762
    %v3499 = vpack.c.b16 %v2771, %v2763
    %v3500 = vpack.c.b16 %v2772, %v2764
    %v3501 = vpack.c.b16 %v2781, %v2773
    %v3502 = vpack.c.b16 %v2782, %v2774
    %v3503 = vpack.c.b16 %v2783, %v2775
    %v3504 = vpack.c.b16 %v2784, %v2776
    %v3505 = vpack.c.b16 %v2785, %v2777
    %v3506 = vpack.c.b16 %v2786, %v2778
    %v3507 = vpack.c.b16 %v2787, %v2779
    %v3508 = vpack.c.b16 %v2788, %v2780
    %v3509 = vpack.c.b16 %v2797, %v2789
    %v3510 = vpack.c.b16 %v2798, %v2790
    %v3511 = vpack.c.b16 %v2799, %v2791
    %v3512 = vpack.c.b16 %v2800, %v2792
    %v3513 = vpack.c.b16 %v2801, %v2793
    %v3514 = vpack.c.b16 %v2802, %v2794
    %v3515 = vpack.c.b16 %v2803, %v2795
    %v3516 = vpack.c.b16 %v2804, %v2796
    %v3517 = vpack.c.b16 %v2813, %v2805
    %v3518 = vpack.c.b16 %v2814, %v2806
    %v3519 = vpack.c.b16 %v2815, %v2807
    %v3520 = vpack.c.b16 %v2816, %v2808
    %v3521 = vpack.c.b16 %v2817, %v2809
    %v3522 = vpack.c.b16 %v2818, %v2810
    %v3523 = vpack.c.b16 %v2819, %v2811
    %v3524 = vpack.c.b16 %v2820, %v2812
    %v3525 = vpack.c.b16 %v2829, %v2821
    %v3526 = vpack.c.b16 %v2830, %v2822
    %v3527 = vpack.c.b16 %v2831, %v2823
    %v3528 = vpack.c.b16 %v2832, %v2824
    %v3529 = vpack.c.b16 %v2833, %v2825
    %v3530 = vpack.c.b16 %v2834, %v2826
    %v3531 = vpack.c.b16 %v2835, %v2827
    %v3532 = vpack.c.b16 %v2836, %v2828
    %v3533 = vpack.c.b16 %v2845, %v2837
    %v3534 = vpack.c.b16 %v2846, %v2838
    %v3535 = vpack.c.b16 %v2847, %v2839
    %v3536 = vpack.c.b16 %v2848, %v2840
    %v3537 = vpack.c.b16 %v2849, %v2841
    %v3538 = vpack.c.b16 %v2850, %v2842
    %v3539 = vpack.c.b16 %v2851, %v2843
    %v3540 = vpack.c.b16 %v2852, %v2844
    %v3541 = vpack.c.b16 %v2861, %v2853
    %v3542 = vpack.c.b16 %v2862, %v2854
    %v3543 = vpack.c.b16 %v2863, %v2855
    %v3544 = vpack.c.b16 %v2864, %v2856
    %v3545 = vpack.c.b16 %v2865, %v2857
    %v3546 = vpack.c.b16 %v2866, %v2858
    %v3547 = vpack.c.b16 %v2867, %v2859
    %v3548 = vpack.c.b16 %v2868, %v2860
    %v3549 = vpack.c.b16 %v2877, %v2869
    %v3550 = vpack.c.b16 %v2878, %v2870
    %v3551 = vpack.c.b16 %v2879, %v2871
    %v3552 = vpack.c.b16 %v2880, %v2872
    %v3553 = vpack.c.b16 %v2881, %v2873
    %v3554 = vpack.c.b16 %v2882, %v2874
    %v3555 = vpack.c.b16 %v2883, %v2875
    %v3556 = vpack.c.b16 %v2884, %v2876
    %v3557 = vpack.c.b16 %v2893, %v2885
    %v3558 = vpack.c.b16 %v2894, %v2886
    %v3559 = vpack.c.b16 %v2895, %v2887
    %v3560 = vpack.c.b16 %v2896, %v2888
    %v3561 = vpack.c.b16 %v2897, %v2889
    %v3562 = vpack.c.b16 %v2898, %v2890
    %v3563 = vpack.c.b16 %v2899, %v2891
    %v3564 = vpack.c.b16 %v2900, %v2892
    %v3565 = vpack.c.b16 %v2909, %v2901
    %v3566 = vpack.c.b16 %v2910, %v2902
    %v3567 = vpack.c.b16 %v2911, %v2903
    %v3568 = vpack.c.b16 %v2912, %v2904
    %v3569 = vpack.c.b16 %v2913, %v2905
    %v3570 = vpack.c.b16 %v2914, %v2906
    %v3571 = vpack.c.b16 %v2915, %v2907
    %v3572 = vpack.c.b16 %v2916, %v2908
    %v3573 = vpack.c.b16 %v2925, %v2917
    %v3574 = vpack.c.b16 %v2926, %v2918
    %v3575 = vpack.c.b16 %v2927, %v2919
    %v3576 = vpack.c.b16 %v2928, %v2920
    %v3577 = vpack.c.b16 %v2929, %v2921
    %v3578 = vpack.c.b16 %v2930, %v2922
    %v3579 = vpack.c.b16 %v2931, %v2923
    %v3580 = vpack.c.b16 %v2932, %v2924
    %v3581 = vpack.c.b16 %v2941, %v2933
    %v3582 = vpack.c.b16 %v2942, %v2934
    %v3583 = vpack.c.b16 %v2943, %v2935
    %v3584 = vpack.c.b16 %v2944, %v2936
    %v3585 = vpack.c.b16 %v2945, %v2937
    %v3586 = vpack.c.b16 %v2946, %v2938
    %v3587 = vpack.c.b16 %v2947, %v2939
    %v3588 = vpack.c.b16 %v2948, %v2940
    %v3589 = vpack.c.b16 %v2957, %v2949
    %v3590 = vpack.c.b16 %v2958, %v2950
    %v3591 = vpack.c.b16 %v2959, %v2951
    %v3592 = vpack.c.b16 %v2960, %v2952
    %v3593 = vpack.c.b16 %v2961, %v2953
    %v3594 = vpack.c.b16 %v2962, %v2954
    %v3595 = vpack.c.b16 %v2963, %v2955
    %v3596 = vpack.c.b16 %v2964, %v2956
    %v3597 = vpack.c.b16 %v2973, %v2965
    %v3598 = vpack.c.b16 %v2974, %v2966
    %v3599 = vpack.c.b16 %v2975, %v2967
    %v3600 = vpack.c.b16 %v2976, %v2968
    %v3601 = vpack.c.b16 %v2977, %v2969
    %v3602 = vpack.c.b16 %v2978, %v2970
    %v3603 = vpack.c.b16 %v2979, %v2971
    %v3604 = vpack.c.b16 %v2980, %v2972
    %v3605 = vpack.c.b16 %v2989, %v2981
    %v3606 = vpack.c.b16 %v2990, %v2982
    %v3607 = vpack.c.b16 %v2991, %v2983
    %v3608 = vpack.c.b16 %v2992, %v2984
    %v3609 = vpack.c.b16 %v2993, %v2985
    %v3610 = vpack.c.b16 %v2994, %v2986
    %v3611 = vpack.c.b16 %v2995, %v2987
    %v3612 = vpack.c.b16 %v2996, %v2988
    %v3613 = vpack.c.b16 %v3005, %v2997
    %v3614 = vpack.c.b16 %v3006, %v2998
    %v3615 = vpack.c.b16 %v3007, %v2999
    %v3616 = vpack.c.b16 %v3008, %v3000
    %v3617 = vpack.c.b16 %v3009, %v3001
    %v3618 = vpack.c.b16 %v3010, %v3002
    %v3619 = vpack.c.b16 %v3011, %v3003
    %v3620 = vpack.c.b16 %v3012, %v3004
    %v3621 = vpack.c.b16 %v3021, %v3013
    %v3622 = vpack.c.b16 %v3022, %v3014
    %v3623 = vpack.c.b16 %v3023, %v3015
    %v3624 = vpack.c.b16 %v3024, %v3016
    %v3625 = vpack.c.b16 %v3025, %v3017
    %v3626 = vpack.c.b16 %v3026, %v3018
    %v3627 = vpack.c.b16 %v3027, %v3019
    %v3628 = vpack.c.b16 %v3028, %v3020
    %v3629 = vpack.c.b16 %v3037, %v3029
    %v3630 = vpack.c.b16 %v3038, %v3030
    %v3631 = vpack.c.b16 %v3039, %v3031
    %v3632 = vpack.c.b16 %v3040, %v3032
    %v3633 = vpack.c.b16 %v3041, %v3033
    %v3634 = vpack.c.b16 %v3042, %v3034
    %v3635 = vpack.c.b16 %v3043, %v3035
    %v3636 = vpack.c.b16 %v3044, %v3036
    %v3637 = vpack.c.b16 %v3053, %v3045
    %v3638 = vpack.c.b16 %v3054, %v3046
    %v3639 = vpack.c.b16 %v3055, %v3047
    %v3640 = vpack.c.b16 %v3056, %v3048
    %v3641 = vpack.c.b16 %v3057, %v3049
    %v3642 = vpack.c.b16 %v3058, %v3050
    %v3643 = vpack.c.b16 %v3059, %v3051
    %v3644 = vpack.c.b16 %v3060, %v3052
    %v3645 = vpack.c.b16 %v3069, %v3061
    %v3646 = vpack.c.b16 %v3070, %v3062
    %v3647 = vpack.c.b16 %v3071, %v3063
    %v3648 = vpack.c.b16 %v3072, %v3064
    %v3649 = vpack.c.b16 %v3073, %v3065
    %v3650 = vpack.c.b16 %v3074, %v3066
    %v3651 = vpack.c.b16 %v3075, %v3067
    %v3652 = vpack.c.b16 %v3076, %v3068
    %v3653 = vpack.c.b16 %v3085, %v3077
    %v3654 = vpack.c.b16 %v3086, %v3078
    %v3655 = vpack.c.b16 %v3087, %v3079
    %v3656 = vpack.c.b16 %v3088, %v3080
    %v3657 = vpack.c.b16 %v3089, %v3081
    %v3658 = vpack.c.b16 %v3090, %v3082
    %v3659 = vpack.c.b16 %v3091, %v3083
    %v3660 = vpack.c.b16 %v3092, %v3084
    %v3661 = vpack.c.b16 %v3101, %v3093
    %v3662 = vpack.c.b16 %v3102, %v3094
    %v3663 = vpack.c.b16 %v3103, %v3095
    %v3664 = vpack.c.b16 %v3104, %v3096
    %v3665 = vpack.c.b16 %v3105, %v3097
    %v3666 = vpack.c.b16 %v3106, %v3098
    %v3667 = vpack.c.b16 %v3107, %v3099
    %v3668 = vpack.c.b16 %v3108, %v3100
    %v3669 = vpack.c.b16 %v3117, %v3109
    %v3670 = vpack.c.b16 %v3118, %v3110
    %v3671 = vpack.c.b16 %v3119, %v3111
    %v3672 = vpack.c.b16 %v3120, %v3112
    %v3673 = vpack.c.b16 %v3121, %v3113
    %v3674 = vpack.c.b16 %v3122, %v3114
    %v3675 = vpack.c.b16 %v3123, %v3115
    %v3676 = vpack.c.b16 %v3124, %v3116
    %v3677 = vpack.c.b16 %v3133, %v3125
    %v3678 = vpack.c.b16 %v3134, %v3126
    %v3679 = vpack.c.b16 %v3135, %v3127
    %v3680 = vpack.c.b16 %v3136, %v3128
    %v3681 = vpack.c.b16 %v3137, %v3129
    %v3682 = vpack.c.b16 %v3138, %v3130
    %v3683 = vpack.c.b16 %v3139, %v3131
    %v3684 = vpack.c.b16 %v3140, %v3132
    %v3685 = vpack.c.b16 %v3149, %v3141
    %v3686 = vpack.c.b16 %v3150, %v3142
    %v3687 = vpack.c.b16 %v3151, %v3143
    %v3688 = vpack.c.b16 %v3152, %v3144
    %v3689 = vpack.c.b16 %v3153, %v3145
    %v3690 = vpack.c.b16 %v3154, %v3146
    %v3691 = vpack.c.b16 %v3155, %v3147
    %v3692 = vpack.c.b16 %v3156, %v3148
    %v3693 = vpack.c.b16 %v3165, %v3157
    %v3694 = vpack.c.b16 %v3166, %v3158
    %v3695 = vpack.c.b16 %v3167, %v3159
    %v3696 = vpack.c.b16 %v3168, %v3160
    %v3697 = vpack.c.b16 %v3169, %v3161
    %v3698 = vpack.c.b16 %v3170, %v3162
    %v3699 = vpack.c.b16 %v3171, %v3163
    %v3700 = vpack.c.b16 %v3172, %v3164
    %v3701 = vpack.c.b16 %v3181, %v3173
    %v3702 = vpack.c.b16 %v3182, %v3174
    %v3703 = vpack.c.b16 %v3183, %v3175
    %v3704 = vpack.c.b16 %v3184, %v3176
    %v3705 = vpack.c.b16 %v3185, %v3177
    %v3706 = vpack.c.b16 %v3186, %v3178
    %v3707 = vpack.c.b16 %v3187, %v3179
    %v3708 = vpack.c.b16 %v3188, %v3180
    %v3709 = vpack.c.b16 %v3197, %v3189
    %v3710 = vpack.c.b16 %v3198, %v3190
    %v3711 = vpack.c.b16 %v3199, %v3191
    %v3712 = vpack.c.b16 %v3200, %v3192
    %v3713 = vpack.c.b16 %v3201, %v3193
    %v3714 = vpack.c.b16 %v3202, %v3194
    %v3715 = vpack.c.b16 %v3203, %v3195
    %v3716 = vpack.c.b16 %v3204, %v3196
    %4229 = vmatprep.subr.bf16.mxu0 %v3206
    %4230 = vmatpush1.bf16.msra.mxu0 %v3205
    %4231 = vmatprep.subr.bf16.mxu0 %v3214
    %4232 = vmatpush1.bf16.msra.mxu0 %v3213
    %4233 = vmatprep.subr.bf16.mxu0 %v3222
    %4234 = vmatpush1.bf16.msra.mxu0 %v3221
    %4235 = vmatprep.subr.bf16.mxu0 %v3230
    %4236 = vmatpush1.bf16.msra.mxu0 %v3229
    %4237 = vmatprep.subr.bf16.mxu0 %v3238
    %4238 = vmatpush1.bf16.msra.mxu0 %v3237
    %4239 = vmatprep.subr.bf16.mxu0 %v3246
    %4240 = vmatpush1.bf16.msra.mxu0 %v3245
    %4241 = vmatprep.subr.bf16.mxu0 %v3254
    %4242 = vmatpush1.bf16.msra.mxu0 %v3253
    %4243 = vmatprep.subr.bf16.mxu0 %v3262
    %4244 = vmatpush1.bf16.msra.mxu0 %v3261
    %4245 = vmatprep.subr.bf16.mxu0 %v3270
    %4246 = vmatpush1.bf16.msra.mxu0 %v3269
    %4247 = vmatprep.subr.bf16.mxu0 %v3278
    %4248 = vmatpush1.bf16.msra.mxu0 %v3277
    %4249 = vmatprep.subr.bf16.mxu0 %v3286
    %4250 = vmatpush1.bf16.msra.mxu0 %v3285
    %4251 = vmatprep.subr.bf16.mxu0 %v3294
    %4252 = vmatpush1.bf16.msra.mxu0 %v3293
    %4253 = vmatprep.subr.bf16.mxu0 %v3302
    %4254 = vmatpush1.bf16.msra.mxu0 %v3301
    %4255 = vmatprep.subr.bf16.mxu0 %v3310
    %4256 = vmatpush1.bf16.msra.mxu0 %v3309
    %4257 = vmatprep.subr.bf16.mxu0 %v3318
    %4258 = vmatpush1.bf16.msra.mxu0 %v3317
    %4259 = vmatprep.subr.bf16.mxu0 %v3326
    %4260 = vmatpush1.bf16.msra.mxu0 %v3325
    %4261 = vmatprep.mubr.bf16.mxu0 %v1108
    %4262 = vmatmul.mubr.bf16.gmra.mrb[0].mxu0 %v1107
    %v4263 = vpop.f32.mrb[0].mxu0
    %v4264 = vadd.f32 %v1632, %v4263
    %v4265 = vpop.f32.mrb[0].mxu0
    %v4266 = vadd.f32 %v1636, %v4265
    %v4267 = vpop.f32.mrb[0].mxu0
    %v4268 = vadd.f32 %v1632, %v4267
    %v4269 = vpop.f32.mrb[0].mxu0
    %v4270 = vadd.f32 %v1636, %v4269
    %4271 = vdwg.mxu0
    %4272 = vmatprep.subr.bf16.mxu0 %v3334
    %4273 = vmatpush1.bf16.msra.mxu0 %v3333
    %4274 = vmatprep.subr.bf16.mxu0 %v3342
    %4275 = vmatpush1.bf16.msra.mxu0 %v3341
    %4276 = vmatprep.subr.bf16.mxu0 %v3350
    %4277 = vmatpush1.bf16.msra.mxu0 %v3349
    %4278 = vmatprep.subr.bf16.mxu0 %v3358
    %4279 = vmatpush1.bf16.msra.mxu0 %v3357
    %4280 = vmatprep.subr.bf16.mxu0 %v3366
    %4281 = vmatpush1.bf16.msra.mxu0 %v3365
    %4282 = vmatprep.subr.bf16.mxu0 %v3374
    %4283 = vmatpush1.bf16.msra.mxu0 %v3373
    %4284 = vmatprep.subr.bf16.mxu0 %v3382
    %4285 = vmatpush1.bf16.msra.mxu0 %v3381
    %4286 = vmatprep.subr.bf16.mxu0 %v3390
    %4287 = vmatpush1.bf16.msra.mxu0 %v3389
    %4288 = vmatprep.subr.bf16.mxu0 %v3398
    %4289 = vmatpush1.bf16.msra.mxu0 %v3397
    %4290 = vmatprep.subr.bf16.mxu0 %v3406
    %4291 = vmatpush1.bf16.msra.mxu0 %v3405
    %4292 = vmatprep.subr.bf16.mxu0 %v3414
    %4293 = vmatpush1.bf16.msra.mxu0 %v3413
    %4294 = vmatprep.subr.bf16.mxu0 %v3422
    %4295 = vmatpush1.bf16.msra.mxu0 %v3421
    %4296 = vmatprep.subr.bf16.mxu0 %v3430
    %4297 = vmatpush1.bf16.msra.mxu0 %v3429
    %4298 = vmatprep.subr.bf16.mxu0 %v3438
    %4299 = vmatpush1.bf16.msra.mxu0 %v3437
    %4300 = vmatprep.subr.bf16.mxu0 %v3446
    %4301 = vmatpush1.bf16.msra.mxu0 %v3445
    %4302 = vmatprep.subr.bf16.mxu0 %v3454
    %4303 = vmatpush1.bf16.msra.mxu0 %v3453
    %4304 = vmatprep.mubr.bf16.mxu0 %v1110
    %4305 = vmatmul.mubr.bf16.gmra.mrb[0].mxu0 %v1109
    %v4306 = vpop.f32.mrb[0].mxu0
    %v4307 = vadd.f32 %v4264, %v4306
    %v4308 = vpop.f32.mrb[0].mxu0
    %v4309 = vadd.f32 %v4266, %v4308
    %v4310 = vpop.f32.mrb[0].mxu0
    %v4311 = vadd.f32 %v4268, %v4310
    %v4312 = vpop.f32.mrb[0].mxu0
    %v4313 = vadd.f32 %v4270, %v4312
    %4314 = vdwg.mxu0
    %4315 = vmatprep.subr.bf16.mxu0 %v3462
    %4316 = vmatpush1.bf16.msra.mxu0 %v3461
    %4317 = vmatprep.subr.bf16.mxu0 %v3470
    %4318 = vmatpush1.bf16.msra.mxu0 %v3469
    %4319 = vmatprep.subr.bf16.mxu0 %v3478
    %4320 = vmatpush1.bf16.msra.mxu0 %v3477
    %4321 = vmatprep.subr.bf16.mxu0 %v3486
    %4322 = vmatpush1.bf16.msra.mxu0 %v3485
    %4323 = vmatprep.subr.bf16.mxu0 %v3494
    %4324 = vmatpush1.bf16.msra.mxu0 %v3493
    %4325 = vmatprep.subr.bf16.mxu0 %v3502
    %4326 = vmatpush1.bf16.msra.mxu0 %v3501
    %4327 = vmatprep.subr.bf16.mxu0 %v3510
    %4328 = vmatpush1.bf16.msra.mxu0 %v3509
    %4329 = vmatprep.subr.bf16.mxu0 %v3518
    %4330 = vmatpush1.bf16.msra.mxu0 %v3517
    %4331 = vmatprep.subr.bf16.mxu0 %v3526
    %4332 = vmatpush1.bf16.msra.mxu0 %v3525
    %4333 = vmatprep.subr.bf16.mxu0 %v3534
    %4334 = vmatpush1.bf16.msra.mxu0 %v3533
    %4335 = vmatprep.subr.bf16.mxu0 %v3542
    %4336 = vmatpush1.bf16.msra.mxu0 %v3541
    %4337 = vmatprep.subr.bf16.mxu0 %v3550
    %4338 = vmatpush1.bf16.msra.mxu0 %v3549
    %4339 = vmatprep.subr.bf16.mxu0 %v3558
    %4340 = vmatpush1.bf16.msra.mxu0 %v3557
    %4341 = vmatprep.subr.bf16.mxu0 %v3566
    %4342 = vmatpush1.bf16.msra.mxu0 %v3565
    %4343 = vmatprep.subr.bf16.mxu0 %v3574
    %4344 = vmatpush1.bf16.msra.mxu0 %v3573
    %4345 = vmatprep.subr.bf16.mxu0 %v3582
    %4346 = vmatpush1.bf16.msra.mxu0 %v3581
    %4347 = vmatprep.mubr.bf16.mxu0 %v1112
    %4348 = vmatmul.mubr.bf16.gmra.mrb[0].mxu0 %v1111
    %v4349 = vpop.f32.mrb[0].mxu0
    %v4350 = vadd.f32 %v4307, %v4349
    %v4351 = vpop.f32.mrb[0].mxu0
    %v4352 = vadd.f32 %v4309, %v4351
    %v4353 = vpop.f32.mrb[0].mxu0
    %v4354 = vadd.f32 %v4311, %v4353
    %v4355 = vpop.f32.mrb[0].mxu0
    %v4356 = vadd.f32 %v4313, %v4355
    %4357 = vdwg.mxu0
    %4358 = vmatprep.subr.bf16.mxu0 %v3590
    %4359 = vmatpush1.bf16.msra.mxu0 %v3589
    %4360 = vmatprep.subr.bf16.mxu0 %v3598
    %4361 = vmatpush1.bf16.msra.mxu0 %v3597
    %4362 = vmatprep.subr.bf16.mxu0 %v3606
    %4363 = vmatpush1.bf16.msra.mxu0 %v3605
    %4364 = vmatprep.subr.bf16.mxu0 %v3614
    %4365 = vmatpush1.bf16.msra.mxu0 %v3613
    %4366 = vmatprep.subr.bf16.mxu0 %v3622
    %4367 = vmatpush1.bf16.msra.mxu0 %v3621
    %4368 = vmatprep.subr.bf16.mxu0 %v3630
    %4369 = vmatpush1.bf16.msra.mxu0 %v3629
    %4370 = vmatprep.subr.bf16.mxu0 %v3638
    %4371 = vmatpush1.bf16.msra.mxu0 %v3637
    %4372 = vmatprep.subr.bf16.mxu0 %v3646
    %4373 = vmatpush1.bf16.msra.mxu0 %v3645
    %4374 = vmatprep.subr.bf16.mxu0 %v3654
    %4375 = vmatpush1.bf16.msra.mxu0 %v3653
    %4376 = vmatprep.subr.bf16.mxu0 %v3662
    %4377 = vmatpush1.bf16.msra.mxu0 %v3661
    %4378 = vmatprep.subr.bf16.mxu0 %v3670
    %4379 = vmatpush1.bf16.msra.mxu0 %v3669
    %4380 = vmatprep.subr.bf16.mxu0 %v3678
    %4381 = vmatpush1.bf16.msra.mxu0 %v3677
    %4382 = vmatprep.subr.bf16.mxu0 %v3686
    %4383 = vmatpush1.bf16.msra.mxu0 %v3685
    %4384 = vmatprep.subr.bf16.mxu0 %v3694
    %4385 = vmatpush1.bf16.msra.mxu0 %v3693
    %4386 = vmatprep.subr.bf16.mxu0 %v3702
    %4387 = vmatpush1.bf16.msra.mxu0 %v3701
    %4388 = vmatprep.subr.bf16.mxu0 %v3710
    %4389 = vmatpush1.bf16.msra.mxu0 %v3709
    %4390 = vmatprep.mubr.bf16.mxu0 %v1114
    %4391 = vmatmul.mubr.bf16.gmra.mrb[0].mxu0 %v1113
    %v4392 = vpop.f32.mrb[0].mxu0
    %v4393 = vadd.f32 %v4350, %v4392
    %v4394 = vpop.f32.mrb[0].mxu0
    %v4395 = vadd.f32 %v4352, %v4394
    %v4396 = vpop.f32.mrb[0].mxu0
    %v4397 = vadd.f32 %v4354, %v4396
    %v4398 = vpop.f32.mrb[0].mxu0
    %v4399 = vadd.f32 %v4356, %v4398
    %4400 = vdwg.mxu0
    %4401 = vmatprep.subr.bf16.mxu0 %v3208
    %4402 = vmatpush1.bf16.msra.mxu0 %v3207
    %4403 = vmatprep.subr.bf16.mxu0 %v3216
    %4404 = vmatpush1.bf16.msra.mxu0 %v3215
    %4405 = vmatprep.subr.bf16.mxu0 %v3224
    %4406 = vmatpush1.bf16.msra.mxu0 %v3223
    %4407 = vmatprep.subr.bf16.mxu0 %v3232
    %4408 = vmatpush1.bf16.msra.mxu0 %v3231
    %4409 = vmatprep.subr.bf16.mxu0 %v3240
    %4410 = vmatpush1.bf16.msra.mxu0 %v3239
    %4411 = vmatprep.subr.bf16.mxu0 %v3248
    %4412 = vmatpush1.bf16.msra.mxu0 %v3247
    %4413 = vmatprep.subr.bf16.mxu0 %v3256
    %4414 = vmatpush1.bf16.msra.mxu0 %v3255
    %4415 = vmatprep.subr.bf16.mxu0 %v3264
    %4416 = vmatpush1.bf16.msra.mxu0 %v3263
    %4417 = vmatprep.subr.bf16.mxu0 %v3272
    %4418 = vmatpush1.bf16.msra.mxu0 %v3271
    %4419 = vmatprep.subr.bf16.mxu0 %v3280
    %4420 = vmatpush1.bf16.msra.mxu0 %v3279
    %4421 = vmatprep.subr.bf16.mxu0 %v3288
    %4422 = vmatpush1.bf16.msra.mxu0 %v3287
    %4423 = vmatprep.subr.bf16.mxu0 %v3296
    %4424 = vmatpush1.bf16.msra.mxu0 %v3295
    %4425 = vmatprep.subr.bf16.mxu0 %v3304
    %4426 = vmatpush1.bf16.msra.mxu0 %v3303
    %4427 = vmatprep.subr.bf16.mxu0 %v3312
    %4428 = vmatpush1.bf16.msra.mxu0 %v3311
    %4429 = vmatprep.subr.bf16.mxu0 %v3320
    %4430 = vmatpush1.bf16.msra.mxu0 %v3319
    %4431 = vmatprep.subr.bf16.mxu0 %v3328
    %4432 = vmatpush1.bf16.msra.mxu0 %v3327
    %4433 = vmatprep.mubr.bf16.mxu0 %v1108
    %4434 = vmatmul.mubr.bf16.gmra.mrb[0].mxu0 %v1107
    %v4435 = vpop.f32.mrb[0].mxu0
    %v4436 = vadd.f32 %v1640, %v4435
    %v4437 = vpop.f32.mrb[0].mxu0
    %v4438 = vadd.f32 %v1644, %v4437
    %v4439 = vpop.f32.mrb[0].mxu0
    %v4440 = vadd.f32 %v1640, %v4439
    %v4441 = vpop.f32.mrb[0].mxu0
    %v4442 = vadd.f32 %v1644, %v4441
    %4443 = vdwg.mxu0
    %4444 = vmatprep.subr.bf16.mxu0 %v3336
    %4445 = vmatpush1.bf16.msra.mxu0 %v3335
    %4446 = vmatprep.subr.bf16.mxu0 %v3344
    %4447 = vmatpush1.bf16.msra.mxu0 %v3343
    %4448 = vmatprep.subr.bf16.mxu0 %v3352
    %4449 = vmatpush1.bf16.msra.mxu0 %v3351
    %4450 = vmatprep.subr.bf16.mxu0 %v3360
    %4451 = vmatpush1.bf16.msra.mxu0 %v3359
    %4452 = vmatprep.subr.bf16.mxu0 %v3368
    %4453 = vmatpush1.bf16.msra.mxu0 %v3367
    %4454 = vmatprep.subr.bf16.mxu0 %v3376
    %4455 = vmatpush1.bf16.msra.mxu0 %v3375
    %4456 = vmatprep.subr.bf16.mxu0 %v3384
    %4457 = vmatpush1.bf16.msra.mxu0 %v3383
    %4458 = vmatprep.subr.bf16.mxu0 %v3392
    %4459 = vmatpush1.bf16.msra.mxu0 %v3391
    %4460 = vmatprep.subr.bf16.mxu0 %v3400
    %4461 = vmatpush1.bf16.msra.mxu0 %v3399
    %4462 = vmatprep.subr.bf16.mxu0 %v3408
    %4463 = vmatpush1.bf16.msra.mxu0 %v3407
    %4464 = vmatprep.subr.bf16.mxu0 %v3416
    %4465 = vmatpush1.bf16.msra.mxu0 %v3415
    %4466 = vmatprep.subr.bf16.mxu0 %v3424
    %4467 = vmatpush1.bf16.msra.mxu0 %v3423
    %4468 = vmatprep.subr.bf16.mxu0 %v3432
    %4469 = vmatpush1.bf16.msra.mxu0 %v3431
    %4470 = vmatprep.subr.bf16.mxu0 %v3440
    %4471 = vmatpush1.bf16.msra.mxu0 %v3439
    %4472 = vmatprep.subr.bf16.mxu0 %v3448
    %4473 = vmatpush1.bf16.msra.mxu0 %v3447
    %4474 = vmatprep.subr.bf16.mxu0 %v3456
    %4475 = vmatpush1.bf16.msra.mxu0 %v3455
    %4476 = vmatprep.mubr.bf16.mxu0 %v1110
    %4477 = vmatmul.mubr.bf16.gmra.mrb[0].mxu0 %v1109
    %v4478 = vpop.f32.mrb[0].mxu0
    %v4479 = vadd.f32 %v4436, %v4478
    %v4480 = vpop.f32.mrb[0].mxu0
    %v4481 = vadd.f32 %v4438, %v4480
    %v4482 = vpop.f32.mrb[0].mxu0
    %v4483 = vadd.f32 %v4440, %v4482
    %v4484 = vpop.f32.mrb[0].mxu0
    %v4485 = vadd.f32 %v4442, %v4484
    %4486 = vdwg.mxu0
    %4487 = vmatprep.subr.bf16.mxu0 %v3464
    %4488 = vmatpush1.bf16.msra.mxu0 %v3463
    %4489 = vmatprep.subr.bf16.mxu0 %v3472
    %4490 = vmatpush1.bf16.msra.mxu0 %v3471
    %4491 = vmatprep.subr.bf16.mxu0 %v3480
    %4492 = vmatpush1.bf16.msra.mxu0 %v3479
    %4493 = vmatprep.subr.bf16.mxu0 %v3488
    %4494 = vmatpush1.bf16.msra.mxu0 %v3487
    %4495 = vmatprep.subr.bf16.mxu0 %v3496
    %4496 = vmatpush1.bf16.msra.mxu0 %v3495
    %4497 = vmatprep.subr.bf16.mxu0 %v3504
    %4498 = vmatpush1.bf16.msra.mxu0 %v3503
    %4499 = vmatprep.subr.bf16.mxu0 %v3512
    %4500 = vmatpush1.bf16.msra.mxu0 %v3511
    %4501 = vmatprep.subr.bf16.mxu0 %v3520
    %4502 = vmatpush1.bf16.msra.mxu0 %v3519
    %4503 = vmatprep.subr.bf16.mxu0 %v3528
    %4504 = vmatpush1.bf16.msra.mxu0 %v3527
    %4505 = vmatprep.subr.bf16.mxu0 %v3536
    %4506 = vmatpush1.bf16.msra.mxu0 %v3535
    %4507 = vmatprep.subr.bf16.mxu0 %v3544
    %4508 = vmatpush1.bf16.msra.mxu0 %v3543
    %4509 = vmatprep.subr.bf16.mxu0 %v3552
    %4510 = vmatpush1.bf16.msra.mxu0 %v3551
    %4511 = vmatprep.subr.bf16.mxu0 %v3560
    %4512 = vmatpush1.bf16.msra.mxu0 %v3559
    %4513 = vmatprep.subr.bf16.mxu0 %v3568
    %4514 = vmatpush1.bf16.msra.mxu0 %v3567
    %4515 = vmatprep.subr.bf16.mxu0 %v3576
    %4516 = vmatpush1.bf16.msra.mxu0 %v3575
    %4517 = vmatprep.subr.bf16.mxu0 %v3584
    %4518 = vmatpush1.bf16.msra.mxu0 %v3583
    %4519 = vmatprep.mubr.bf16.mxu0 %v1112
    %4520 = vmatmul.mubr.bf16.gmra.mrb[0].mxu0 %v1111
    %v4521 = vpop.f32.mrb[0].mxu0
    %v4522 = vadd.f32 %v4479, %v4521
    %v4523 = vpop.f32.mrb[0].mxu0
    %v4524 = vadd.f32 %v4481, %v4523
    %v4525 = vpop.f32.mrb[0].mxu0
    %v4526 = vadd.f32 %v4483, %v4525
    %v4527 = vpop.f32.mrb[0].mxu0
    %v4528 = vadd.f32 %v4485, %v4527
    %4529 = vdwg.mxu0
    %4530 = vmatprep.subr.bf16.mxu0 %v3592
    %4531 = vmatpush1.bf16.msra.mxu0 %v3591
    %4532 = vmatprep.subr.bf16.mxu0 %v3600
    %4533 = vmatpush1.bf16.msra.mxu0 %v3599
    %4534 = vmatprep.subr.bf16.mxu0 %v3608
    %4535 = vmatpush1.bf16.msra.mxu0 %v3607
    %4536 = vmatprep.subr.bf16.mxu0 %v3616
    %4537 = vmatpush1.bf16.msra.mxu0 %v3615
    %4538 = vmatprep.subr.bf16.mxu0 %v3624
    %4539 = vmatpush1.bf16.msra.mxu0 %v3623
    %4540 = vmatprep.subr.bf16.mxu0 %v3632
    %4541 = vmatpush1.bf16.msra.mxu0 %v3631
    %4542 = vmatprep.subr.bf16.mxu0 %v3640
    %4543 = vmatpush1.bf16.msra.mxu0 %v3639
    %4544 = vmatprep.subr.bf16.mxu0 %v3648
    %4545 = vmatpush1.bf16.msra.mxu0 %v3647
    %4546 = vmatprep.subr.bf16.mxu0 %v3656
    %4547 = vmatpush1.bf16.msra.mxu0 %v3655
    %4548 = vmatprep.subr.bf16.mxu0 %v3664
    %4549 = vmatpush1.bf16.msra.mxu0 %v3663
    %4550 = vmatprep.subr.bf16.mxu0 %v3672
    %4551 = vmatpush1.bf16.msra.mxu0 %v3671
    %4552 = vmatprep.subr.bf16.mxu0 %v3680
    %4553 = vmatpush1.bf16.msra.mxu0 %v3679
    %4554 = vmatprep.subr.bf16.mxu0 %v3688
    %4555 = vmatpush1.bf16.msra.mxu0 %v3687
    %4556 = vmatprep.subr.bf16.mxu0 %v3696
    %4557 = vmatpush1.bf16.msra.mxu0 %v3695
    %4558 = vmatprep.subr.bf16.mxu0 %v3704
    %4559 = vmatpush1.bf16.msra.mxu0 %v3703
    %4560 = vmatprep.subr.bf16.mxu0 %v3712
    %4561 = vmatpush1.bf16.msra.mxu0 %v3711
    %4562 = vmatprep.mubr.bf16.mxu0 %v1114
    %4563 = vmatmul.mubr.bf16.gmra.mrb[0].mxu0 %v1113
    %v4564 = vpop.f32.mrb[0].mxu0
    %v4565 = vadd.f32 %v4522, %v4564
    %v4566 = vpop.f32.mrb[0].mxu0
    %v4567 = vadd.f32 %v4524, %v4566
    %v4568 = vpop.f32.mrb[0].mxu0
    %v4569 = vadd.f32 %v4526, %v4568
    %v4570 = vpop.f32.mrb[0].mxu0
    %v4571 = vadd.f32 %v4528, %v4570
    %4572 = vdwg.mxu0
    %4573 = vmatprep.subr.bf16.mxu0 %v3210
    %4574 = vmatpush1.bf16.msra.mxu0 %v3209
    %4575 = vmatprep.subr.bf16.mxu0 %v3218
    %4576 = vmatpush1.bf16.msra.mxu0 %v3217
    %4577 = vmatprep.subr.bf16.mxu0 %v3226
    %4578 = vmatpush1.bf16.msra.mxu0 %v3225
    %4579 = vmatprep.subr.bf16.mxu0 %v3234
    %4580 = vmatpush1.bf16.msra.mxu0 %v3233
    %4581 = vmatprep.subr.bf16.mxu0 %v3242
    %4582 = vmatpush1.bf16.msra.mxu0 %v3241
    %4583 = vmatprep.subr.bf16.mxu0 %v3250
    %4584 = vmatpush1.bf16.msra.mxu0 %v3249
    %4585 = vmatprep.subr.bf16.mxu0 %v3258
    %4586 = vmatpush1.bf16.msra.mxu0 %v3257
    %4587 = vmatprep.subr.bf16.mxu0 %v3266
    %4588 = vmatpush1.bf16.msra.mxu0 %v3265
    %4589 = vmatprep.subr.bf16.mxu0 %v3274
    %4590 = vmatpush1.bf16.msra.mxu0 %v3273
    %4591 = vmatprep.subr.bf16.mxu0 %v3282
    %4592 = vmatpush1.bf16.msra.mxu0 %v3281
    %4593 = vmatprep.subr.bf16.mxu0 %v3290
    %4594 = vmatpush1.bf16.msra.mxu0 %v3289
    %4595 = vmatprep.subr.bf16.mxu0 %v3298
    %4596 = vmatpush1.bf16.msra.mxu0 %v3297
    %4597 = vmatprep.subr.bf16.mxu0 %v3306
    %4598 = vmatpush1.bf16.msra.mxu0 %v3305
    %4599 = vmatprep.subr.bf16.mxu0 %v3314
    %4600 = vmatpush1.bf16.msra.mxu0 %v3313
    %4601 = vmatprep.subr.bf16.mxu0 %v3322
    %4602 = vmatpush1.bf16.msra.mxu0 %v3321
    %4603 = vmatprep.subr.bf16.mxu0 %v3330
    %4604 = vmatpush1.bf16.msra.mxu0 %v3329
    %4605 = vmatprep.mubr.bf16.mxu0 %v1108
    %4606 = vmatmul.mubr.bf16.gmra.mrb[0].mxu0 %v1107
    %v4607 = vpop.f32.mrb[0].mxu0
    %v4608 = vadd.f32 %v1648, %v4607
    %v4609 = vpop.f32.mrb[0].mxu0
    %v4610 = vadd.f32 %v1652, %v4609
    %v4611 = vpop.f32.mrb[0].mxu0
    %v4612 = vadd.f32 %v1648, %v4611
    %v4613 = vpop.f32.mrb[0].mxu0
    %v4614 = vadd.f32 %v1652, %v4613
    %4615 = vdwg.mxu0
    %4616 = vmatprep.subr.bf16.mxu0 %v3338
    %4617 = vmatpush1.bf16.msra.mxu0 %v3337
    %4618 = vmatprep.subr.bf16.mxu0 %v3346
    %4619 = vmatpush1.bf16.msra.mxu0 %v3345
    %4620 = vmatprep.subr.bf16.mxu0 %v3354
    %4621 = vmatpush1.bf16.msra.mxu0 %v3353
    %4622 = vmatprep.subr.bf16.mxu0 %v3362
    %4623 = vmatpush1.bf16.msra.mxu0 %v3361
    %4624 = vmatprep.subr.bf16.mxu0 %v3370
    %4625 = vmatpush1.bf16.msra.mxu0 %v3369
    %4626 = vmatprep.subr.bf16.mxu0 %v3378
    %4627 = vmatpush1.bf16.msra.mxu0 %v3377
    %4628 = vmatprep.subr.bf16.mxu0 %v3386
    %4629 = vmatpush1.bf16.msra.mxu0 %v3385
    %4630 = vmatprep.subr.bf16.mxu0 %v3394
    %4631 = vmatpush1.bf16.msra.mxu0 %v3393
    %4632 = vmatprep.subr.bf16.mxu0 %v3402
    %4633 = vmatpush1.bf16.msra.mxu0 %v3401
    %4634 = vmatprep.subr.bf16.mxu0 %v3410
    %4635 = vmatpush1.bf16.msra.mxu0 %v3409
    %4636 = vmatprep.subr.bf16.mxu0 %v3418
    %4637 = vmatpush1.bf16.msra.mxu0 %v3417
    %4638 = vmatprep.subr.bf16.mxu0 %v3426
    %4639 = vmatpush1.bf16.msra.mxu0 %v3425
    %4640 = vmatprep.subr.bf16.mxu0 %v3434
    %4641 = vmatpush1.bf16.msra.mxu0 %v3433
    %4642 = vmatprep.subr.bf16.mxu0 %v3442
    %4643 = vmatpush1.bf16.msra.mxu0 %v3441
    %4644 = vmatprep.subr.bf16.mxu0 %v3450
    %4645 = vmatpush1.bf16.msra.mxu0 %v3449
    %4646 = vmatprep.subr.bf16.mxu0 %v3458
    %4647 = vmatpush1.bf16.msra.mxu0 %v3457
    %4648 = vmatprep.mubr.bf16.mxu0 %v1110
    %4649 = vmatmul.mubr.bf16.gmra.mrb[0].mxu0 %v1109
    %v4650 = vpop.f32.mrb[0].mxu0
    %v4651 = vadd.f32 %v4608, %v4650
    %v4652 = vpop.f32.mrb[0].mxu0
    %v4653 = vadd.f32 %v4610, %v4652
    %v4654 = vpop.f32.mrb[0].mxu0
    %v4655 = vadd.f32 %v4612, %v4654
    %v4656 = vpop.f32.mrb[0].mxu0
    %v4657 = vadd.f32 %v4614, %v4656
    %4658 = vdwg.mxu0
    %4659 = vmatprep.subr.bf16.mxu0 %v3466
    %4660 = vmatpush1.bf16.msra.mxu0 %v3465
    %4661 = vmatprep.subr.bf16.mxu0 %v3474
    %4662 = vmatpush1.bf16.msra.mxu0 %v3473
    %4663 = vmatprep.subr.bf16.mxu0 %v3482
    %4664 = vmatpush1.bf16.msra.mxu0 %v3481
    %4665 = vmatprep.subr.bf16.mxu0 %v3490
    %4666 = vmatpush1.bf16.msra.mxu0 %v3489
    %4667 = vmatprep.subr.bf16.mxu0 %v3498
    %4668 = vmatpush1.bf16.msra.mxu0 %v3497
    %4669 = vmatprep.subr.bf16.mxu0 %v3506
    %4670 = vmatpush1.bf16.msra.mxu0 %v3505
    %4671 = vmatprep.subr.bf16.mxu0 %v3514
    %4672 = vmatpush1.bf16.msra.mxu0 %v3513
    %4673 = vmatprep.subr.bf16.mxu0 %v3522
    %4674 = vmatpush1.bf16.msra.mxu0 %v3521
    %4675 = vmatprep.subr.bf16.mxu0 %v3530
    %4676 = vmatpush1.bf16.msra.mxu0 %v3529
    %4677 = vmatprep.subr.bf16.mxu0 %v3538
    %4678 = vmatpush1.bf16.msra.mxu0 %v3537
    %4679 = vmatprep.subr.bf16.mxu0 %v3546
    %4680 = vmatpush1.bf16.msra.mxu0 %v3545
    %4681 = vmatprep.subr.bf16.mxu0 %v3554
    %4682 = vmatpush1.bf16.msra.mxu0 %v3553
    %4683 = vmatprep.subr.bf16.mxu0 %v3562
    %4684 = vmatpush1.bf16.msra.mxu0 %v3561
    %4685 = vmatprep.subr.bf16.mxu0 %v3570
    %4686 = vmatpush1.bf16.msra.mxu0 %v3569
    %4687 = vmatprep.subr.bf16.mxu0 %v3578
    %4688 = vmatpush1.bf16.msra.mxu0 %v3577
    %4689 = vmatprep.subr.bf16.mxu0 %v3586
    %4690 = vmatpush1.bf16.msra.mxu0 %v3585
    %4691 = vmatprep.mubr.bf16.mxu0 %v1112
    %4692 = vmatmul.mubr.bf16.gmra.mrb[0].mxu0 %v1111
    %v4693 = vpop.f32.mrb[0].mxu0
    %v4694 = vadd.f32 %v4651, %v4693
    %v4695 = vpop.f32.mrb[0].mxu0
    %v4696 = vadd.f32 %v4653, %v4695
    %v4697 = vpop.f32.mrb[0].mxu0
    %v4698 = vadd.f32 %v4655, %v4697
    %v4699 = vpop.f32.mrb[0].mxu0
    %v4700 = vadd.f32 %v4657, %v4699
    %4701 = vdwg.mxu0
    %4702 = vmatprep.subr.bf16.mxu0 %v3594
    %4703 = vmatpush1.bf16.msra.mxu0 %v3593
    %4704 = vmatprep.subr.bf16.mxu0 %v3602
    %4705 = vmatpush1.bf16.msra.mxu0 %v3601
    %4706 = vmatprep.subr.bf16.mxu0 %v3610
    %4707 = vmatpush1.bf16.msra.mxu0 %v3609
    %4708 = vmatprep.subr.bf16.mxu0 %v3618
    %4709 = vmatpush1.bf16.msra.mxu0 %v3617
    %4710 = vmatprep.subr.bf16.mxu0 %v3626
    %4711 = vmatpush1.bf16.msra.mxu0 %v3625
    %4712 = vmatprep.subr.bf16.mxu0 %v3634
    %4713 = vmatpush1.bf16.msra.mxu0 %v3633
    %4714 = vmatprep.subr.bf16.mxu0 %v3642
    %4715 = vmatpush1.bf16.msra.mxu0 %v3641
    %4716 = vmatprep.subr.bf16.mxu0 %v3650
    %4717 = vmatpush1.bf16.msra.mxu0 %v3649
    %4718 = vmatprep.subr.bf16.mxu0 %v3658
    %4719 = vmatpush1.bf16.msra.mxu0 %v3657
    %4720 = vmatprep.subr.bf16.mxu0 %v3666
    %4721 = vmatpush1.bf16.msra.mxu0 %v3665
    %4722 = vmatprep.subr.bf16.mxu0 %v3674
    %4723 = vmatpush1.bf16.msra.mxu0 %v3673
    %4724 = vmatprep.subr.bf16.mxu0 %v3682
    %4725 = vmatpush1.bf16.msra.mxu0 %v3681
    %4726 = vmatprep.subr.bf16.mxu0 %v3690
    %4727 = vmatpush1.bf16.msra.mxu0 %v3689
    %4728 = vmatprep.subr.bf16.mxu0 %v3698
    %4729 = vmatpush1.bf16.msra.mxu0 %v3697
    %4730 = vmatprep.subr.bf16.mxu0 %v3706
    %4731 = vmatpush1.bf16.msra.mxu0 %v3705
    %4732 = vmatprep.subr.bf16.mxu0 %v3714
    %4733 = vmatpush1.bf16.msra.mxu0 %v3713
    %4734 = vmatprep.mubr.bf16.mxu0 %v1114
    %4735 = vmatmul.mubr.bf16.gmra.mrb[0].mxu0 %v1113
    %v4736 = vpop.f32.mrb[0].mxu0
    %v4737 = vadd.f32 %v4694, %v4736
    %v4738 = vpop.f32.mrb[0].mxu0
    %v4739 = vadd.f32 %v4696, %v4738
    %v4740 = vpop.f32.mrb[0].mxu0
    %v4741 = vadd.f32 %v4698, %v4740
    %v4742 = vpop.f32.mrb[0].mxu0
    %v4743 = vadd.f32 %v4700, %v4742
    %4744 = vdwg.mxu0
    %4745 = vmatprep.subr.bf16.mxu0 %v3212
    %4746 = vmatpush1.bf16.msra.mxu0 %v3211
    %4747 = vmatprep.subr.bf16.mxu0 %v3220
    %4748 = vmatpush1.bf16.msra.mxu0 %v3219
    %4749 = vmatprep.subr.bf16.mxu0 %v3228
    %4750 = vmatpush1.bf16.msra.mxu0 %v3227
    %4751 = vmatprep.subr.bf16.mxu0 %v3236
    %4752 = vmatpush1.bf16.msra.mxu0 %v3235
    %4753 = vmatprep.subr.bf16.mxu0 %v3244
    %4754 = vmatpush1.bf16.msra.mxu0 %v3243
    %4755 = vmatprep.subr.bf16.mxu0 %v3252
    %4756 = vmatpush1.bf16.msra.mxu0 %v3251
    %4757 = vmatprep.subr.bf16.mxu0 %v3260
    %4758 = vmatpush1.bf16.msra.mxu0 %v3259
    %4759 = vmatprep.subr.bf16.mxu0 %v3268
    %4760 = vmatpush1.bf16.msra.mxu0 %v3267
    %4761 = vmatprep.subr.bf16.mxu0 %v3276
    %4762 = vmatpush1.bf16.msra.mxu0 %v3275
    %4763 = vmatprep.subr.bf16.mxu0 %v3284
    %4764 = vmatpush1.bf16.msra.mxu0 %v3283
    %4765 = vmatprep.subr.bf16.mxu0 %v3292
    %4766 = vmatpush1.bf16.msra.mxu0 %v3291
    %4767 = vmatprep.subr.bf16.mxu0 %v3300
    %4768 = vmatpush1.bf16.msra.mxu0 %v3299
    %4769 = vmatprep.subr.bf16.mxu0 %v3308
    %4770 = vmatpush1.bf16.msra.mxu0 %v3307
    %4771 = vmatprep.subr.bf16.mxu0 %v3316
    %4772 = vmatpush1.bf16.msra.mxu0 %v3315
    %4773 = vmatprep.subr.bf16.mxu0 %v3324
    %4774 = vmatpush1.bf16.msra.mxu0 %v3323
    %4775 = vmatprep.subr.bf16.mxu0 %v3332
    %4776 = vmatpush1.bf16.msra.mxu0 %v3331
    %4777 = vmatprep.mubr.bf16.mxu0 %v1108
    %4778 = vmatmul.mubr.bf16.gmra.mrb[0].mxu0 %v1107
    %v4779 = vpop.f32.mrb[0].mxu0
    %v4780 = vadd.f32 %v1656, %v4779
    %v4781 = vpop.f32.mrb[0].mxu0
    %v4782 = vadd.f32 %v1660, %v4781
    %v4783 = vpop.f32.mrb[0].mxu0
    %v4784 = vadd.f32 %v1656, %v4783
    %v4785 = vpop.f32.mrb[0].mxu0
    %v4786 = vadd.f32 %v1660, %v4785
    %4787 = vdwg.mxu0
    %4788 = vmatprep.subr.bf16.mxu0 %v3340
    %4789 = vmatpush1.bf16.msra.mxu0 %v3339
    %4790 = vmatprep.subr.bf16.mxu0 %v3348
    %4791 = vmatpush1.bf16.msra.mxu0 %v3347
    %4792 = vmatprep.subr.bf16.mxu0 %v3356
    %4793 = vmatpush1.bf16.msra.mxu0 %v3355
    %4794 = vmatprep.subr.bf16.mxu0 %v3364
    %4795 = vmatpush1.bf16.msra.mxu0 %v3363
    %4796 = vmatprep.subr.bf16.mxu0 %v3372
    %4797 = vmatpush1.bf16.msra.mxu0 %v3371
    %4798 = vmatprep.subr.bf16.mxu0 %v3380
    %4799 = vmatpush1.bf16.msra.mxu0 %v3379
    %4800 = vmatprep.subr.bf16.mxu0 %v3388
    %4801 = vmatpush1.bf16.msra.mxu0 %v3387
    %4802 = vmatprep.subr.bf16.mxu0 %v3396
    %4803 = vmatpush1.bf16.msra.mxu0 %v3395
    %4804 = vmatprep.subr.bf16.mxu0 %v3404
    %4805 = vmatpush1.bf16.msra.mxu0 %v3403
    %4806 = vmatprep.subr.bf16.mxu0 %v3412
    %4807 = vmatpush1.bf16.msra.mxu0 %v3411
    %4808 = vmatprep.subr.bf16.mxu0 %v3420
    %4809 = vmatpush1.bf16.msra.mxu0 %v3419
    %4810 = vmatprep.subr.bf16.mxu0 %v3428
    %4811 = vmatpush1.bf16.msra.mxu0 %v3427
    %4812 = vmatprep.subr.bf16.mxu0 %v3436
    %4813 = vmatpush1.bf16.msra.mxu0 %v3435
    %4814 = vmatprep.subr.bf16.mxu0 %v3444
    %4815 = vmatpush1.bf16.msra.mxu0 %v3443
    %4816 = vmatprep.subr.bf16.mxu0 %v3452
    %4817 = vmatpush1.bf16.msra.mxu0 %v3451
    %4818 = vmatprep.subr.bf16.mxu0 %v3460
    %4819 = vmatpush1.bf16.msra.mxu0 %v3459
    %4820 = vmatprep.mubr.bf16.mxu0 %v1110
    %4821 = vmatmul.mubr.bf16.gmra.mrb[0].mxu0 %v1109
    %v4822 = vpop.f32.mrb[0].mxu0
    %v4823 = vadd.f32 %v4780, %v4822
    %v4824 = vpop.f32.mrb[0].mxu0
    %v4825 = vadd.f32 %v4782, %v4824
    %v4826 = vpop.f32.mrb[0].mxu0
    %v4827 = vadd.f32 %v4784, %v4826
    %v4828 = vpop.f32.mrb[0].mxu0
    %v4829 = vadd.f32 %v4786, %v4828
    %4830 = vdwg.mxu0
    %4831 = vmatprep.subr.bf16.mxu0 %v3468
    %4832 = vmatpush1.bf16.msra.mxu0 %v3467
    %4833 = vmatprep.subr.bf16.mxu0 %v3476
    %4834 = vmatpush1.bf16.msra.mxu0 %v3475
    %4835 = vmatprep.subr.bf16.mxu0 %v3484
    %4836 = vmatpush1.bf16.msra.mxu0 %v3483
    %4837 = vmatprep.subr.bf16.mxu0 %v3492
    %4838 = vmatpush1.bf16.msra.mxu0 %v3491
    %4839 = vmatprep.subr.bf16.mxu0 %v3500
    %4840 = vmatpush1.bf16.msra.mxu0 %v3499
    %4841 = vmatprep.subr.bf16.mxu0 %v3508
    %4842 = vmatpush1.bf16.msra.mxu0 %v3507
    %4843 = vmatprep.subr.bf16.mxu0 %v3516
    %4844 = vmatpush1.bf16.msra.mxu0 %v3515
    %4845 = vmatprep.subr.bf16.mxu0 %v3524
    %4846 = vmatpush1.bf16.msra.mxu0 %v3523
    %4847 = vmatprep.subr.bf16.mxu0 %v3532
    %4848 = vmatpush1.bf16.msra.mxu0 %v3531
    %4849 = vmatprep.subr.bf16.mxu0 %v3540
    %4850 = vmatpush1.bf16.msra.mxu0 %v3539
    %4851 = vmatprep.subr.bf16.mxu0 %v3548
    %4852 = vmatpush1.bf16.msra.mxu0 %v3547
    %4853 = vmatprep.subr.bf16.mxu0 %v3556
    %4854 = vmatpush1.bf16.msra.mxu0 %v3555
    %4855 = vmatprep.subr.bf16.mxu0 %v3564
    %4856 = vmatpush1.bf16.msra.mxu0 %v3563
    %4857 = vmatprep.subr.bf16.mxu0 %v3572
    %4858 = vmatpush1.bf16.msra.mxu0 %v3571
    %4859 = vmatprep.subr.bf16.mxu0 %v3580
    %4860 = vmatpush1.bf16.msra.mxu0 %v3579
    %4861 = vmatprep.subr.bf16.mxu0 %v3588
    %4862 = vmatpush1.bf16.msra.mxu0 %v3587
    %4863 = vmatprep.mubr.bf16.mxu0 %v1112
    %4864 = vmatmul.mubr.bf16.gmra.mrb[0].mxu0 %v1111
    %v4865 = vpop.f32.mrb[0].mxu0
    %v4866 = vadd.f32 %v4823, %v4865
    %v4867 = vpop.f32.mrb[0].mxu0
    %v4868 = vadd.f32 %v4825, %v4867
    %v4869 = vpop.f32.mrb[0].mxu0
    %v4870 = vadd.f32 %v4827, %v4869
    %v4871 = vpop.f32.mrb[0].mxu0
    %v4872 = vadd.f32 %v4829, %v4871
    %4873 = vdwg.mxu0
    %4874 = vmatprep.subr.bf16.mxu0 %v3596
    %4875 = vmatpush1.bf16.msra.mxu0 %v3595
    %4876 = vmatprep.subr.bf16.mxu0 %v3604
    %4877 = vmatpush1.bf16.msra.mxu0 %v3603
    %4878 = vmatprep.subr.bf16.mxu0 %v3612
    %4879 = vmatpush1.bf16.msra.mxu0 %v3611
    %4880 = vmatprep.subr.bf16.mxu0 %v3620
    %4881 = vmatpush1.bf16.msra.mxu0 %v3619
    %4882 = vmatprep.subr.bf16.mxu0 %v3628
    %4883 = vmatpush1.bf16.msra.mxu0 %v3627
    %4884 = vmatprep.subr.bf16.mxu0 %v3636
    %4885 = vmatpush1.bf16.msra.mxu0 %v3635
    %4886 = vmatprep.subr.bf16.mxu0 %v3644
    %4887 = vmatpush1.bf16.msra.mxu0 %v3643
    %4888 = vmatprep.subr.bf16.mxu0 %v3652
    %4889 = vmatpush1.bf16.msra.mxu0 %v3651
    %4890 = vmatprep.subr.bf16.mxu0 %v3660
    %4891 = vmatpush1.bf16.msra.mxu0 %v3659
    %4892 = vmatprep.subr.bf16.mxu0 %v3668
    %4893 = vmatpush1.bf16.msra.mxu0 %v3667
    %4894 = vmatprep.subr.bf16.mxu0 %v3676
    %4895 = vmatpush1.bf16.msra.mxu0 %v3675
    %4896 = vmatprep.subr.bf16.mxu0 %v3684
    %4897 = vmatpush1.bf16.msra.mxu0 %v3683
    %4898 = vmatprep.subr.bf16.mxu0 %v3692
    %4899 = vmatpush1.bf16.msra.mxu0 %v3691
    %4900 = vmatprep.subr.bf16.mxu0 %v3700
    %4901 = vmatpush1.bf16.msra.mxu0 %v3699
    %4902 = vmatprep.subr.bf16.mxu0 %v3708
    %4903 = vmatpush1.bf16.msra.mxu0 %v3707
    %4904 = vmatprep.subr.bf16.mxu0 %v3716
    %4905 = vmatpush1.bf16.msra.mxu0 %v3715
    %4906 = vmatprep.mubr.bf16.mxu0 %v1114
    %4907 = vmatmul.mubr.bf16.gmra.mrb[0].mxu0 %v1113
    %v4908 = vpop.f32.mrb[0].mxu0
    %v4909 = vadd.f32 %v4866, %v4908
    %v4910 = vpop.f32.mrb[0].mxu0
    %v4911 = vadd.f32 %v4868, %v4910
    %v4912 = vpop.f32.mrb[0].mxu0
    %v4913 = vadd.f32 %v4870, %v4912
    %v4914 = vpop.f32.mrb[0].mxu0
    %v4915 = vadd.f32 %v4872, %v4914
    %4916 = vdwg.mxu0
    %v4917 = vmax.f32 %v4393, 0.0
    %v4918 = vmax.f32 %v4395, 0.0
    %v4919 = vmax.f32 %v4565, 0.0
    %v4920 = vmax.f32 %v4567, 0.0
    %v4921 = vmax.f32 %v4737, 0.0
    %v4922 = vmax.f32 %v4739, 0.0
    %v4923 = vmax.f32 %v4909, 0.0
    %v4924 = vmax.f32 %v4911, 0.0
    %v4925 = vmax.f32 %v4397, 0.0
    %v4926 = vmax.f32 %v4399, 0.0
    %v4927 = vmax.f32 %v4569, 0.0
    %v4928 = vmax.f32 %v4571, 0.0
    %v4929 = vmax.f32 %v4741, 0.0
    %v4930 = vmax.f32 %v4743, 0.0
    %v4931 = vmax.f32 %v4913, 0.0
    %v4932 = vmax.f32 %v4915, 0.0
    %v4933 = vld [vmem:[#allocation11] sm:$0xff]
    %v4935 = vlaneseq
    %v4936 = vshrl.u32 %v4935, 7
    %v4937 = vsub.s32 0, %v4936
    %v4938 = vrot.slane %v4933, %v4937
    %v4939 = vlaneseq
    %v4940 = vshrl.u32 %v4939, 7
    %v4941 = vsub.s32 1, %v4940
    %v4942 = vrot.slane %v4933, %v4941
    %v4943 = vlaneseq
    %v4944 = vshrl.u32 %v4943, 7
    %v4945 = vsub.s32 2, %v4944
    %v4946 = vrot.slane %v4933, %v4945
    %v4947 = vlaneseq
    %v4948 = vshrl.u32 %v4947, 7
    %v4949 = vsub.s32 3, %v4948
    %v4950 = vrot.slane %v4933, %v4949
    %v4951 = vlaneseq
    %v4952 = vshrl.u32 %v4951, 7
    %v4953 = vsub.s32 4, %v4952
    %v4954 = vrot.slane %v4933, %v4953
    %v4955 = vlaneseq
    %v4956 = vshrl.u32 %v4955, 7
    %v4957 = vsub.s32 5, %v4956
    %v4958 = vrot.slane %v4933, %v4957
    %v4959 = vlaneseq
    %v4960 = vshrl.u32 %v4959, 7
    %v4961 = vsub.s32 6, %v4960
    %v4962 = vrot.slane %v4933, %v4961
    %v4963 = vlaneseq
    %v4964 = vshrl.u32 %v4963, 7
    %v4965 = vsub.s32 7, %v4964
    %v4966 = vrot.slane %v4933, %v4965
    %v4975 = vmul.f32 %v4917, %v4938
    %v4976 = vmul.f32 %v4918, %v4942
    %v4977 = vmul.f32 %v4919, %v4946
    %v4978 = vmul.f32 %v4920, %v4950
    %v4979 = vmul.f32 %v4921, %v4954
    %v4980 = vmul.f32 %v4922, %v4958
    %v4981 = vmul.f32 %v4923, %v4962
    %v4982 = vmul.f32 %v4924, %v4966
    %v4983 = vmul.f32 %v4925, %v4938
    %v4984 = vmul.f32 %v4926, %v4942
    %v4985 = vmul.f32 %v4927, %v4946
    %v4986 = vmul.f32 %v4928, %v4950
    %v4987 = vmul.f32 %v4929, %v4954
    %v4988 = vmul.f32 %v4930, %v4958
    %v4989 = vmul.f32 %v4931, %v4962
    %v4990 = vmul.f32 %v4932, %v4966
    %v4991 = vadd.f32 %v4975, %v4976
    %v4992 = vadd.f32 %v4991, %v4977
    %v4993 = vadd.f32 %v4992, %v4978
    %v4994 = vadd.f32 %v4993, %v4979
    %v4995 = vadd.f32 %v4994, %v4980
    %v4996 = vadd.f32 %v4995, %v4981
    %v4997 = vadd.f32 %v4996, %v4982
    %4998 = vadd.xlane.f32.xlu0 %v4997
    %v4999 = vpop.xlane.xlu0 %4998
    %v5000 = vadd.f32 %v4983, %v4984
    %v5001 = vadd.f32 %v5000, %v4985
    %v5002 = vadd.f32 %v5001, %v4986
    %v5003 = vadd.f32 %v5002, %v4987
    %v5004 = vadd.f32 %v5003, %v4988
    %v5005 = vadd.f32 %v5004, %v4989
    %v5006 = vadd.f32 %v5005, %v4990
    %5007 = vadd.xlane.f32.xlu0 %v5006
    %v5008 = vpop.xlane.xlu0 %5007
    %s5009 = sld [smem:[#allocation2]]
    %v5010 = vstv %s5009
    %v5011 = vadd.f32 %v4999, %v5010
    %v5012 = vadd.f32 %v5008, %v5010
    %v5013 = vxor.u32 %v5011, 2147483648
    %v5014 = vxor.u32 %v5012, 2147483648
    %v5015 = vmul.f32 %v5013, 1.442695
    %v5016 = vpow.pop %v5015
    %v5017 = vmul.f32 %v5014, 1.442695
    %v5018 = vpow.pop %v5017
    %v5019 = vadd.f32 %v5016, 1.0
    %v5020 = vadd.f32 %v5018, 1.0
    %v5021 = vrcp.pop %v5019
    %v5022 = vmul.f32 1.0, %v5021
    %v5023 = vrcp.pop %v5020
    %v5024 = vmul.f32 1.0, %v5023
    %vm5025 = vcmask 7168
    %5026 = vst.msk [vmem:[%s7] sm:$0xff] %vm5025, %v5022
    %5027 = vst.msk [vmem:[%s7 + $0x8] sm:$0xff] %vm5025, %v5024
    // Predicated region
    $region54: #{tpu_custom_call.1} parent=1 // pred_check
      _
    $region55: #{tpu_custom_call.1} parent=1 // pred_check_branch
      %5029 = sbr.rel (0) target = $region57
    $region56: #{tpu_custom_call.1} parent=1 // pred_region
      _
    $region57: #{tpu_custom_call.1} parent=1 // pred_fallthru
      _
    // Predicated region
    $region58: #{tpu_custom_call.1} parent=1 // pred_check
      _
    $region59: #{tpu_custom_call.1} parent=1 // pred_check_branch
      %5031 = sbr.rel (0) target = $region61
    $region60: #{tpu_custom_call.1} parent=1 // pred_region
      _
    $region61: #{tpu_custom_call.1} parent=1 // pred_fallthru
      _
    %5032 = vsyncpa [#allocation4], 1
    %5033 = vsyncpa [#allocation6], 1
    %5034 = vsyncpa [#allocation9], 1
    %5035 = vsyncpa [#allocation12], 1

</llo_original>
